<compile_context>
chip_gen: v6e
topology: v6e:2x2x1
jax: 0.10.0
libtpu: 0.0.40
codegen_flags: <defaults>
</compile_context>

<pallas_src>
import functools

import jax
import jax.numpy as jnp
from jax.experimental import pallas as pl
from jax.experimental.pallas import tpu as pltpu

# ----- Config (mirrors the PyTorch Config object) ---------------------------
HIDDEN = 32          # Config.hidden_dim
K_NEIGHBORS = 5      # GLUedgeConv k
OUTPUT_DIM = 2
KEY_FEATURE_IDX = 0
# Config.dropout: nn.Dropout is identity in eval mode -> not applied.
# TODO(synk): create_spatiotemporal_edges / Config.temporal_window are not
# defined in the reference; approximated with per-graph kNN in the current
# feature space (dynamic-graph EdgeConv style); temporal window is ignored.

_VMEM = pl.BlockSpec(memory_space=pltpu.MemorySpace.VMEM)


def _round_up(a, m):
    return ((a + m - 1) // m) * m


def _node_tile(n):
    # Big node tiles (feedback: 256-512 rows); bf16 sublane-pack friendly (x16).
    if n <= 512:
        return _round_up(n, 16)
    return 256


# ----------------------------- Pallas kernels -------------------------------
def _initial_glu_kernel(feat_ref, kf_ref, wt_ref, bt_ref,
                        w_f_ref, w_e_ref, b_ref, o_ref):
    # time encoder: (TN,1) @ (1,E) + (1,E)  ==  broadcast multiply
    emb = kf_ref[...] * wt_ref[...] + bt_ref[...]                     # (TN, E)
    # fused GLU: one matmul per input block, lin/gate split on lanes
    pre = (jnp.dot(feat_ref[...], w_f_ref[...],
                   preferred_element_type=jnp.float32)
           + jnp.dot(emb, w_e_ref[...], preferred_element_type=jnp.float32)
           + b_ref[...])                                              # (TN, 2H)
    h = pre.shape[-1] // 2
    o_ref[...] = pre[:, :h] * jax.nn.sigmoid(pre[:, h:])


def _edge_conv_kernel(emit_combined,
                      x_ref, xj_ref, fd_ref,
                      w_self_ref, w_nbr_ref, w_fd_ref, b_ref,
                      w2_ref, b2_ref, o_ref):
    # x_ref:  (TN, C)        node features (conv input + residual), f32
    # xj_ref: (K, TN, C)     gathered neighbor features, bf16
    # fd_ref: (K, TN, 1)     feature_j - feature_i, f32
    tn, c = x_ref.shape
    k = xj_ref.shape[0]
    x = x_ref[...]

    # x_i contribution hoisted: identical for all K neighbors.
    self_pre = (jnp.dot(x.astype(jnp.bfloat16), w_self_ref[...],
                        preferred_element_type=jnp.float32)
                + b_ref[...])                                         # (TN, 2C)

    # All K neighbors batched into the M dimension of one MXU matmul.
    xj = xj_ref[...].reshape(k * tn, c)                               # bf16
    nbr_pre = jnp.dot(xj, w_nbr_ref[...],
                      preferred_element_type=jnp.float32)             # (K*TN, 2C)
    fd = fd_ref[...].reshape(k * tn, 1)                               # f32
    pre = (nbr_pre + fd * w_fd_ref[...]).reshape(k, tn, 2 * c)
    pre = pre + self_pre[None]                                        # (K, TN, 2C)

    lin = pre[..., :c]
    gate = pre[..., c:]
    h = (lin * jax.nn.sigmoid(gate)).astype(jnp.bfloat16)             # GLU, f32 VPU

    msg = (jnp.dot(h.reshape(k * tn, c), w2_ref[...],
                   preferred_element_type=jnp.float32)
           + b2_ref[...])                                             # (K*TN, C)
    agg = jnp.max(msg.reshape(k, tn, c), axis=0)                      # aggr='max'

    y = jnp.maximum(agg + x, 0.0)          # propagate(...) + x, then outer F.relu
    if emit_combined:
        # conv2 path: emit combined = [x1, relu(conv2(x1))] directly (64 lanes).
        o_ref[...] = jnp.concatenate([x, y], axis=-1)
    else:
        o_ref[...] = y


def _knn_scores_kernel(xi_ref, brow_ref, xall_ref, nall_ref, bcol_ref, o_ref):
    # Tiled masked negative-squared-distance matrix (same-graph, no self).
    tr = xi_ref.shape[0]
    n = xall_ref.shape[0]
    row0 = pl.program_id(0) * tr
    xi = xi_ref[...]                                                  # (TR, C)
    dots = jax.lax.dot_general(
        xi, xall_ref[...],
        dimension_numbers=(((1,), (1,)), ((), ())),
        preferred_element_type=jnp.float32)                           # (TR, N)
    ni = jnp.sum(xi * xi, axis=1, keepdims=True)                      # (TR, 1)
    d2 = ni + nall_ref[...] - 2.0 * dots
    rows = row0 + jax.lax.broadcasted_iota(jnp.int32, (tr, n), 0)
    cols = jax.lax.broadcasted_iota(jnp.int32, (tr, n), 1)
    same = brow_ref[...] == bcol_ref[...]
    valid = jnp.logical_and(same, rows != cols)
    o_ref[...] = jnp.where(valid, -d2, -jnp.inf)


def _pool_head_kernel(num_graphs, comb_ref, wlg_ref, blg_ref,
                      w2_ref, b2_ref, o_ref):
    # global_max_pool / global_mean_pool over contiguous equal-sized graphs,
    # fused with the final GLU head and log_softmax.
    n, c2 = comb_ref.shape
    npg = n // num_graphs
    c = comb_ref[...].reshape(num_graphs, npg, c2)
    mx = jnp.max(c, axis=1)                                           # (G, 2H)
    mn = jnp.mean(c, axis=1)                                          # (G, 2H)
    pooled = jnp.concatenate([mx, mn], axis=-1)                       # (G, 4H)
    pre = (jnp.dot(pooled, wlg_ref[...], preferred_element_type=jnp.float32)
           + blg_ref[...])                                            # (G, 2H)
    half = pre.shape[-1] // 2
    g = pre[:, :half] * jax.nn.sigmoid(pre[:, half:])
    logits = (jnp.dot(g, w2_ref[...], preferred_element_type=jnp.float32)
              + b2_ref[...])
    m = jnp.max(logits, axis=-1, keepdims=True)
    lse = m + jnp.log(jnp.sum(jnp.exp(logits - m), axis=-1, keepdims=True))
    o_ref[...] = logits - lse                                         # log_softmax


# ------------------------------ JAX glue -------------------------------------
def _fuse_glu(wl, wg, bl, bg):
    # Column-wise fusion of the linear and gate projections -> one matmul.
    return jnp.concatenate([wl, wg], axis=1), jnp.concatenate([bl, bg], axis=1)


def _pad_rows(a, n_pad, value=0):
    n = a.shape[0]
    if n == n_pad:
        return a
    pad = [(0, n_pad - n)] + [(0, 0)] * (a.ndim - 1)
    return jnp.pad(a, pad, constant_values=value)


def _knn_within_batch(x, batch, k):
    # k nearest neighbors (excluding self) restricted to the same graph.
    # Distance + masking in a tiled Pallas kernel; top_k selection in XLA.
    # TODO(synk): graphs with <= k nodes get arbitrary (−inf-score) neighbors.
    n_pad, c = x.shape
    tr = _node_tile(n_pad)
    nall = jnp.sum(x * x, axis=1)[None, :]                 # (1, N)
    brow = batch[:, None].astype(jnp.int32)                # (N, 1)
    bcol = batch[None, :].astype(jnp.int32)                # (1, N)
    scores = pl.pallas_call(
        _knn_scores_kernel,
        out_shape=jax.ShapeDtypeStruct((n_pad, n_pad), jnp.float32),
        grid=(n_pad // tr,),
        in_specs=[
            pl.BlockSpec((tr, c), lambda i: (i, 0)),
            pl.BlockSpec((tr, 1), lambda i: (i, 0)),
            pl.BlockSpec((n_pad, c), lambda i: (0, 0)),
            pl.BlockSpec((1, n_pad), lambda i: (0, 0)),
            pl.BlockSpec((1, n_pad), lambda i: (0, 0)),
        ],
        out_specs=pl.BlockSpec((tr, n_pad), lambda i: (i, 0)),
        compiler_params=pltpu.CompilerParams(dimension_semantics=("parallel",)),
    )(x, brow, x, nall, bcol)
    _, idx = jax.lax.top_k(scores, k)                      # (N, k)
    return idx


def _glu_edge_conv(x, batch, feature, p, emit_combined):
    # GLUedgeConv.forward: edges -> message (gated MLP) -> max aggr -> + x,
    # with the outer F.relu fused into the kernel.
    # TODO(synk): neighbor gather stays in XLA; an in-kernel SMEM-index gather
    # would remove the (K,N,C) HBM tensor entirely.
    n_pad, c = x.shape
    k = K_NEIGHBORS
    nbr = _knn_within_batch(x, batch, k)                               # (N, K)
    xj = jnp.transpose(x[nbr], (1, 0, 2)).astype(jnp.bfloat16)          # (K, N, C)
    fd = jnp.transpose(feature[nbr] - feature[:, None, :], (1, 0, 2))   # (K, N, 1)

    w, b = _fuse_glu(p["wl"], p["wg"], p["bl"], p["bg"])   # (2C+1, 2C), (1, 2C)
    w_self = w[:c].astype(jnp.bfloat16)                    # x_i rows
    w_nbr = w[c:2 * c].astype(jnp.bfloat16)                # x_j rows
    w_fd = w[2 * c:2 * c + 1]                              # feature-diff row (f32)
    w2 = p["w2"].astype(jnp.bfloat16)

    out_cols = 2 * c if emit_combined else c
    tn = _node_tile(n_pad)
    return pl.pallas_call(
        functools.partial(_edge_conv_kernel, emit_combined),
        out_shape=jax.ShapeDtypeStruct((n_pad, out_cols), jnp.float32),
        grid=(n_pad // tn,),
        in_specs=[
            pl.BlockSpec((tn, c), lambda i: (i, 0)),
            pl.BlockSpec((k, tn, c), lambda i: (0, i, 0)),
            pl.BlockSpec((k, tn, 1), lambda i: (0, i, 0)),
            pl.BlockSpec((c, 2 * c), lambda i: (0, 0)),
            pl.BlockSpec((c, 2 * c), lambda i: (0, 0)),
            pl.BlockSpec((1, 2 * c), lambda i: (0, 0)),
            pl.BlockSpec((1, 2 * c), lambda i: (0, 0)),
            pl.BlockSpec((c, c), lambda i: (0, 0)),
            pl.BlockSpec((1, c), lambda i: (0, 0)),
        ],
        out_specs=pl.BlockSpec((tn, out_cols), lambda i: (i, 0)),
        compiler_params=pltpu.CompilerParams(dimension_semantics=("parallel",)),
    )(x, xj, fd, w_self, w_nbr, w_fd, b, w2, p["b2"])


def _linear_params(key, fan_in, fan_out):
    kw, kb = jax.random.split(key)
    bound = 1.0 / (fan_in ** 0.5)
    w = jax.random.uniform(kw, (fan_in, fan_out), jnp.float32, -bound, bound)
    b = jax.random.uniform(kb, (1, fan_out), jnp.float32, -bound, bound)
    return w, b


def init_params(key, input_dim, hidden=HIDDEN, output_dim=OUTPUT_DIM):
    feature_dim = input_dim - 1
    emb_dim = hidden // 4
    ks = iter(jax.random.split(key, 12))
    p = {}
    p["wt"], p["bt"] = _linear_params(next(ks), 1, emb_dim)            # time_encoder
    p["init_wl"], p["init_bl"] = _linear_params(next(ks), feature_dim + emb_dim, hidden)
    p["init_wg"], p["init_bg"] = _linear_params(next(ks), feature_dim + emb_dim, hidden)
    for name in ("conv1", "conv2"):
        conv = {}
        conv["wl"], conv["bl"] = _linear_params(next(ks), 2 * hidden + 1, hidden)
        conv["wg"], conv["bg"] = _linear_params(next(ks), 2 * hidden + 1, hidden)
        conv["w2"], conv["b2"] = _linear_params(next(ks), hidden, hidden)
        p[name] = conv
    p["final_wl"], p["final_bl"] = _linear_params(next(ks), 4 * hidden, hidden)
    p["final_wg"], p["final_bg"] = _linear_params(next(ks), 4 * hidden, hidden)
    p["final_w2"], p["final_b2"] = _linear_params(next(ks), hidden, output_dim)
    return p


def glue_edge_dgcnn_forward(params, x, batch, num_graphs,
                            key_feature_idx=KEY_FEATURE_IDX):
    n, d = x.shape
    fdim = d - 1
    hid = params["init_bl"].shape[1]
    emb = params["wt"].shape[1]

    kf = x[:, key_feature_idx:key_feature_idx + 1]                     # (N, 1)
    feats = jnp.concatenate(
        [x[:, :key_feature_idx], x[:, key_feature_idx + 1:]], axis=1)  # (N, D-1)

    # Pad nodes to a tile multiple; padded rows get batch=-1 so they are never
    # chosen as neighbors of real nodes and are dropped before pooling.
    tn = _node_tile(n)
    n_pad = _round_up(n, tn)
    feats_p = _pad_rows(feats, n_pad)
    kf_p = _pad_rows(kf, n_pad)
    batch_p = _pad_rows(batch.astype(jnp.int32), n_pad, value=-1)

    # initial_gated: GLU(features ++ time_encoder(kf)); concat realized via
    # row-split fused (lin|gate) weights, time encoder fused in-kernel.
    w_init, b_init = _fuse_glu(params["init_wl"], params["init_wg"],
                               params["init_bl"], params["init_bg"])
    w_init_f, w_init_e = w_init[:fdim], w_init[fdim:]
    h = pl.pallas_call(
        _initial_glu_kernel,
        out_shape=jax.ShapeDtypeStruct((n_pad, hid), jnp.float32),
        grid=(n_pad // tn,),
        in_specs=[
            pl.BlockSpec((tn, fdim), lambda i: (i, 0)),
            pl.BlockSpec((tn, 1), lambda i: (i, 0)),
            pl.BlockSpec((1, emb), lambda i: (0, 0)),
            pl.BlockSpec((1, emb), lambda i: (0, 0)),
            pl.BlockSpec((fdim, 2 * hid), lambda i: (0, 0)),
            pl.BlockSpec((emb, 2 * hid), lambda i: (0, 0)),
            pl.BlockSpec((1, 2 * hid), lambda i: (0, 0)),
        ],
        out_specs=pl.BlockSpec((tn, hid), lambda i: (i, 0)),
        compiler_params=pltpu.CompilerParams(dimension_semantics=("parallel",)),
    )(feats_p, kf_p, params["wt"], params["bt"], w_init_f, w_init_e, b_init)
    # nn.Dropout(Config.dropout) -> identity (eval mode).

    x1 = _glu_edge_conv(h, batch_p, kf_p, params["conv1"], emit_combined=False)
    combined_p = _glu_edge_conv(x1, batch_p, kf_p, params["conv2"],
                                emit_combined=True)        # (N_pad, 2H) = [x1, x2]
    combined = combined_p[:n]

    # Pool (max + mean per graph) fused with the final GLU head + log_softmax.
    # TODO(synk): assumes contiguous, equal-sized graphs; whole-array VMEM
    # residency here caps N at the scoped-VMEM limit for this (cheap) stage.
    w_head, b_head = _fuse_glu(params["final_wl"], params["final_wg"],
                               params["final_bl"], params["final_bg"])
    out_dim = params["final_b2"].shape[1]
    out = pl.pallas_call(
        functools.partial(_pool_head_kernel, num_graphs),
        out_shape=jax.ShapeDtypeStruct((num_graphs, out_dim), jnp.float32),
        in_specs=[_VMEM] * 5,
        out_specs=_VMEM,
    )(combined, w_head, b_head, params["final_w2"], params["final_b2"])
    return out


if __name__ == "__main__":
    key = jax.random.PRNGKey(0)
    num_graphs, nodes_per_graph, input_dim = 2, 16, 4
    n_total = num_graphs * nodes_per_graph

    kx, kp = jax.random.split(key)
    x = jax.random.normal(kx, (n_total, input_dim), jnp.float32)
    batch = jnp.repeat(jnp.arange(num_graphs, dtype=jnp.int32), nodes_per_graph)

    params = init_params(kp, input_dim)
    fwd = jax.jit(glue_edge_dgcnn_forward,
                  static_argnames=("num_graphs", "key_feature_idx"))
    out = fwd(params, x, batch, num_graphs=num_graphs)
    out = jax.block_until_ready(out)

    assert out.shape == (num_graphs, OUTPUT_DIM)
    assert bool(jnp.all(jnp.isfinite(out)))
    # rows of log_softmax should (approximately) sum to 1 in prob space
    assert bool(jnp.allclose(jnp.sum(jnp.exp(out), axis=1), 1.0, atol=1e-4))
    print("KERNEL_OK")
</pallas_src>

<mosaic_0001>
module attributes {stable_mosaic.version = 11 : i64} {
  func.func @_initial_glu_kernel(%arg0: i32, %arg1: memref<32x3xf32, #tpu.memory_space<vmem>>, %arg2: memref<32x1xf32, #tpu.memory_space<vmem>>, %arg3: memref<1x8xf32, #tpu.memory_space<vmem>>, %arg4: memref<1x8xf32, #tpu.memory_space<vmem>>, %arg5: memref<3x64xf32, #tpu.memory_space<vmem>>, %arg6: memref<8x64xf32, #tpu.memory_space<vmem>>, %arg7: memref<1x64xf32, #tpu.memory_space<vmem>>, %arg8: memref<32x32xf32, #tpu.memory_space<vmem>>) attributes {dimension_semantics = [#tpu.dimension_semantics<parallel>], iteration_bounds = array<i64: 1>, scalar_prefetch = 0 : i64, scratch_operands = 0 : i64, tpu.core_type = #tpu.core_type<tc>, window_params = [{transform_indices = @transform_0, window_bounds = array<i64: 32, 3>}, {transform_indices = @transform_1, window_bounds = array<i64: 32, 1>}, {pipeline_mode = #tpu.pipeline_mode<synchronous>, transform_indices = @transform_2, window_bounds = array<i64: 1, 8>}, {pipeline_mode = #tpu.pipeline_mode<synchronous>, transform_indices = @transform_3, window_bounds = array<i64: 1, 8>}, {pipeline_mode = #tpu.pipeline_mode<synchronous>, transform_indices = @transform_4, window_bounds = array<i64: 3, 64>}, {pipeline_mode = #tpu.pipeline_mode<synchronous>, transform_indices = @transform_5, window_bounds = array<i64: 8, 64>}, {pipeline_mode = #tpu.pipeline_mode<synchronous>, transform_indices = @transform_6, window_bounds = array<i64: 1, 64>}, {transform_indices = @transform_7, window_bounds = array<i64: 32, 32>}]} {
    %c0 = arith.constant 0 : index
    %c0_0 = arith.constant 0 : index
    %0 = vector.load %arg2[%c0, %c0_0] : memref<32x1xf32, #tpu.memory_space<vmem>>, vector<32x1xf32>
    %c0_1 = arith.constant 0 : index
    %c0_2 = arith.constant 0 : index
    %1 = vector.load %arg3[%c0_1, %c0_2] : memref<1x8xf32, #tpu.memory_space<vmem>>, vector<1x8xf32>
    %2 = vector.broadcast %0 : vector<32x1xf32> to vector<32x8xf32>
    %3 = vector.broadcast %1 : vector<1x8xf32> to vector<32x8xf32>
    %4 = arith.mulf %2, %3 : vector<32x8xf32>
    %c0_3 = arith.constant 0 : index
    %c0_4 = arith.constant 0 : index
    %5 = vector.load %arg4[%c0_3, %c0_4] : memref<1x8xf32, #tpu.memory_space<vmem>>, vector<1x8xf32>
    %6 = vector.broadcast %5 : vector<1x8xf32> to vector<32x8xf32>
    %7 = arith.addf %4, %6 : vector<32x8xf32>
    %c0_5 = arith.constant 0 : index
    %c0_6 = arith.constant 0 : index
    %8 = vector.load %arg1[%c0_5, %c0_6] : memref<32x3xf32, #tpu.memory_space<vmem>>, vector<32x3xf32>
    %c0_7 = arith.constant 0 : index
    %c0_8 = arith.constant 0 : index
    %9 = vector.load %arg5[%c0_7, %c0_8] : memref<3x64xf32, #tpu.memory_space<vmem>>, vector<3x64xf32>
    %cst = arith.constant dense<0.000000e+00> : vector<32x64xf32>
    %10 = tpu.matmul %8, %9, %cst {dimension_numbers = #tpu.dot_dimension_numbers<[1], [0], [0], [1], [0, 0, 1, 1], [], []>} : vector<32x3xf32>, vector<3x64xf32>, vector<32x64xf32> -> vector<32x64xf32>
    %c0_9 = arith.constant 0 : index
    %c0_10 = arith.constant 0 : index
    %11 = vector.load %arg6[%c0_9, %c0_10] : memref<8x64xf32, #tpu.memory_space<vmem>>, vector<8x64xf32>
    %cst_11 = arith.constant dense<0.000000e+00> : vector<32x64xf32>
    %12 = tpu.matmul %7, %11, %cst_11 {dimension_numbers = #tpu.dot_dimension_numbers<[1], [0], [0], [1], [0, 0, 1, 1], [], []>} : vector<32x8xf32>, vector<8x64xf32>, vector<32x64xf32> -> vector<32x64xf32>
    %13 = arith.addf %10, %12 : vector<32x64xf32>
    %c0_12 = arith.constant 0 : index
    %c0_13 = arith.constant 0 : index
    %14 = vector.load %arg7[%c0_12, %c0_13] : memref<1x64xf32, #tpu.memory_space<vmem>>, vector<1x64xf32>
    %15 = vector.broadcast %14 : vector<1x64xf32> to vector<32x64xf32>
    %16 = arith.addf %13, %15 : vector<32x64xf32>
    %17 = vector.extract_strided_slice %16 {offsets = [0, 0], sizes = [32, 32], strides = [1, 1]} : vector<32x64xf32> to vector<32x32xf32>
    %18 = vector.extract_strided_slice %16 {offsets = [0, 32], sizes = [32, 32], strides = [1, 1]} : vector<32x64xf32> to vector<32x32xf32>
    %19 = arith.negf %18 : vector<32x32xf32>
    %20 = math.exp %19 : vector<32x32xf32>
    %cst_14 = arith.constant 1.000000e+00 : f32
    %21 = vector.broadcast %cst_14 : f32 to vector<32x32xf32>
    %22 = arith.addf %21, %20 : vector<32x32xf32>
    %23 = arith.divf %21, %22 : vector<32x32xf32>
    %24 = arith.mulf %17, %23 : vector<32x32xf32>
    %c0_15 = arith.constant 0 : index
    %c0_16 = arith.constant 0 : index
    %25 = vector.load %arg8[%c0_15, %c0_16] : memref<32x32xf32, #tpu.memory_space<vmem>>, vector<32x32xf32>
    tpu.vector_store %arg8[%c0_15, %c0_16], %24 {strides = array<i32>} : memref<32x32xf32, #tpu.memory_space<vmem>>, vector<32x32xf32>,
    return
  }
  func.func @transform_0(%arg0: i32) -> (i32, i32) {
    %c0_i32 = arith.constant 0 : i32
    %c0_i32_0 = arith.constant 0 : i32
    return %arg0, %c0_i32 : i32, i32
  }
  func.func @transform_1(%arg0: i32) -> (i32, i32) {
    %c0_i32 = arith.constant 0 : i32
    %c0_i32_0 = arith.constant 0 : i32
    return %arg0, %c0_i32 : i32, i32
  }
  func.func @transform_2(%arg0: i32) -> (i32, i32) {
    %c0_i32 = arith.constant 0 : i32
    %c0_i32_0 = arith.constant 0 : i32
    %c0_i32_1 = arith.constant 0 : i32
    return %c0_i32, %c0_i32_0 : i32, i32
  }
  func.func @transform_3(%arg0: i32) -> (i32, i32) {
    %c0_i32 = arith.constant 0 : i32
    %c0_i32_0 = arith.constant 0 : i32
    %c0_i32_1 = arith.constant 0 : i32
    return %c0_i32, %c0_i32_0 : i32, i32
  }
  func.func @transform_4(%arg0: i32) -> (i32, i32) {
    %c0_i32 = arith.constant 0 : i32
    %c0_i32_0 = arith.constant 0 : i32
    %c0_i32_1 = arith.constant 0 : i32
    return %c0_i32, %c0_i32_0 : i32, i32
  }
  func.func @transform_5(%arg0: i32) -> (i32, i32) {
    %c0_i32 = arith.constant 0 : i32
    %c0_i32_0 = arith.constant 0 : i32
    %c0_i32_1 = arith.constant 0 : i32
    return %c0_i32, %c0_i32_0 : i32, i32
  }
  func.func @transform_6(%arg0: i32) -> (i32, i32) {
    %c0_i32 = arith.constant 0 : i32
    %c0_i32_0 = arith.constant 0 : i32
    %c0_i32_1 = arith.constant 0 : i32
    return %c0_i32, %c0_i32_0 : i32, i32
  }
  func.func @transform_7(%arg0: i32) -> (i32, i32) {
    %c0_i32 = arith.constant 0 : i32
    %c0_i32_0 = arith.constant 0 : i32
    return %arg0, %c0_i32 : i32, i32
  }
}

module attributes {stable_mosaic.version = 11 : i64} {
  func.func @_knn_scores_kernel(%arg0: i32, %arg1: memref<32x32xf32, #tpu.memory_space<vmem>>, %arg2: memref<32x1xi32, #tpu.memory_space<vmem>>, %arg3: memref<32x32xf32, #tpu.memory_space<vmem>>, %arg4: memref<1x32xf32, #tpu.memory_space<vmem>>, %arg5: memref<1x32xi32, #tpu.memory_space<vmem>>, %arg6: memref<32x32xf32, #tpu.memory_space<vmem>>) attributes {dimension_semantics = [#tpu.dimension_semantics<parallel>], iteration_bounds = array<i64: 1>, scalar_prefetch = 0 : i64, scratch_operands = 0 : i64, tpu.core_type = #tpu.core_type<tc>, window_params = [{transform_indices = @transform_0, window_bounds = array<i64: 32, 32>}, {transform_indices = @transform_1, window_bounds = array<i64: 32, 1>}, {pipeline_mode = #tpu.pipeline_mode<synchronous>, transform_indices = @transform_2, window_bounds = array<i64: 32, 32>}, {pipeline_mode = #tpu.pipeline_mode<synchronous>, transform_indices = @transform_3, window_bounds = array<i64: 1, 32>}, {pipeline_mode = #tpu.pipeline_mode<synchronous>, transform_indices = @transform_4, window_bounds = array<i64: 1, 32>}, {transform_indices = @transform_5, window_bounds = array<i64: 32, 32>}]} {
    %c32_i32 = arith.constant 32 : i32
    %0 = arith.muli %arg0, %c32_i32 : i32
    %c0 = arith.constant 0 : index
    %c0_0 = arith.constant 0 : index
    %1 = vector.load %arg1[%c0, %c0_0] : memref<32x32xf32, #tpu.memory_space<vmem>>, vector<32x32xf32>
    %c0_1 = arith.constant 0 : index
    %c0_2 = arith.constant 0 : index
    %2 = vector.load %arg3[%c0_1, %c0_2] : memref<32x32xf32, #tpu.memory_space<vmem>>, vector<32x32xf32>
    %cst = arith.constant dense<0.000000e+00> : vector<32x32xf32>
    %3 = tpu.matmul %1, %2, %cst {dimension_numbers = #tpu.dot_dimension_numbers<[1], [1], [0], [0], [0, 0, 1, 0], [], []>} : vector<32x32xf32>, vector<32x32xf32>, vector<32x32xf32> -> vector<32x32xf32>
    %4 = arith.mulf %1, %1 : vector<32x32xf32>
    %cst_3 = arith.constant dense<0.000000e+00> : vector<32xf32>
    %5 = vector.multi_reduction <add>, %4, %cst_3 [1] : vector<32x32xf32> to vector<32xf32>
    %6 = vector.shape_cast %5 : vector<32xf32> to vector<32x1xf32>
    %c0_4 = arith.constant 0 : index
    %c0_5 = arith.constant 0 : index
    %7 = vector.load %arg4[%c0_4, %c0_5] : memref<1x32xf32, #tpu.memory_space<vmem>>, vector<1x32xf32>
    %8 = vector.broadcast %6 : vector<32x1xf32> to vector<32x32xf32>
    %9 = vector.broadcast %7 : vector<1x32xf32> to vector<32x32xf32>
    %10 = arith.addf %8, %9 : vector<32x32xf32>
    %cst_6 = arith.constant 2.000000e+00 : f32
    %11 = vector.broadcast %cst_6 : f32 to vector<32x32xf32>
    %12 = arith.mulf %11, %3 : vector<32x32xf32>
    %13 = arith.subf %10, %12 : vector<32x32xf32>
    %14 = tpu.iota {dimensions = array<i32: 0>} : vector<32x32xi32>
    %15 = vector.broadcast %0 : i32 to vector<32x32xi32>
    %16 = arith.addi %15, %14 : vector<32x32xi32>
    %17 = tpu.iota {dimensions = array<i32: 1>} : vector<32x32xi32>
    %c0_7 = arith.constant 0 : index
    %c0_8 = arith.constant 0 : index
    %18 = vector.load %arg2[%c0_7, %c0_8] : memref<32x1xi32, #tpu.memory_space<vmem>>, vector<32x1xi32>
    %c0_9 = arith.constant 0 : index
    %c0_10 = arith.constant 0 : index
    %19 = vector.load %arg5[%c0_9, %c0_10] : memref<1x32xi32, #tpu.memory_space<vmem>>, vector<1x32xi32>
    %20 = vector.broadcast %18 : vector<32x1xi32> to vector<32x32xi32>
    %21 = vector.broadcast %19 : vector<1x32xi32> to vector<32x32xi32>
    %22 = arith.cmpi eq, %20, %21 : vector<32x32xi32>
    %23 = arith.cmpi ne, %16, %17 : vector<32x32xi32>
    %24 = arith.andi %22, %23 : vector<32x32xi1>
    %cst_11 = arith.constant 0.000000e+00 : f32
    %25 = vector.broadcast %cst_11 : f32 to vector<32x32xf32>
    %26 = arith.subf %25, %13 : vector<32x32xf32>
    %cst_12 = arith.constant 0xFF800000 : f32
    %27 = vector.broadcast %cst_12 : f32 to vector<32x32xf32>
    %28 = arith.select %24, %26, %27 : vector<32x32xi1>, vector<32x32xf32>
    %c0_13 = arith.constant 0 : index
    %c0_14 = arith.constant 0 : index
    %29 = vector.load %arg6[%c0_13, %c0_14] : memref<32x32xf32, #tpu.memory_space<vmem>>, vector<32x32xf32>
    tpu.vector_store %arg6[%c0_13, %c0_14], %28 {strides = array<i32>} : memref<32x32xf32, #tpu.memory_space<vmem>>, vector<32x32xf32>,
    return
  }
  func.func @transform_0(%arg0: i32) -> (i32, i32) {
    %c0_i32 = arith.constant 0 : i32
    %c0_i32_0 = arith.constant 0 : i32
    return %arg0, %c0_i32 : i32, i32
  }
  func.func @transform_1(%arg0: i32) -> (i32, i32) {
    %c0_i32 = arith.constant 0 : i32
    %c0_i32_0 = arith.constant 0 : i32
    return %arg0, %c0_i32 : i32, i32
  }
  func.func @transform_2(%arg0: i32) -> (i32, i32) {
    %c0_i32 = arith.constant 0 : i32
    %c0_i32_0 = arith.constant 0 : i32
    %c0_i32_1 = arith.constant 0 : i32
    return %c0_i32, %c0_i32_0 : i32, i32
  }
  func.func @transform_3(%arg0: i32) -> (i32, i32) {
    %c0_i32 = arith.constant 0 : i32
    %c0_i32_0 = arith.constant 0 : i32
    %c0_i32_1 = arith.constant 0 : i32
    return %c0_i32, %c0_i32_0 : i32, i32
  }
  func.func @transform_4(%arg0: i32) -> (i32, i32) {
    %c0_i32 = arith.constant 0 : i32
    %c0_i32_0 = arith.constant 0 : i32
    %c0_i32_1 = arith.constant 0 : i32
    return %c0_i32, %c0_i32_0 : i32, i32
  }
  func.func @transform_5(%arg0: i32) -> (i32, i32) {
    %c0_i32 = arith.constant 0 : i32
    %c0_i32_0 = arith.constant 0 : i32
    return %arg0, %c0_i32 : i32, i32
  }
}

module attributes {stable_mosaic.version = 11 : i64} {
  func.func @_edge_conv_kernel(%arg0: i32, %arg1: memref<32x32xf32, #tpu.memory_space<vmem>>, %arg2: memref<5x32x32xbf16, #tpu.memory_space<vmem>>, %arg3: memref<5x32x1xf32, #tpu.memory_space<vmem>>, %arg4: memref<32x64xbf16, #tpu.memory_space<vmem>>, %arg5: memref<32x64xbf16, #tpu.memory_space<vmem>>, %arg6: memref<1x64xf32, #tpu.memory_space<vmem>>, %arg7: memref<1x64xf32, #tpu.memory_space<vmem>>, %arg8: memref<32x32xbf16, #tpu.memory_space<vmem>>, %arg9: memref<1x32xf32, #tpu.memory_space<vmem>>, %arg10: memref<32x32xf32, #tpu.memory_space<vmem>>) attributes {dimension_semantics = [#tpu.dimension_semantics<parallel>], iteration_bounds = array<i64: 1>, scalar_prefetch = 0 : i64, scratch_operands = 0 : i64, tpu.core_type = #tpu.core_type<tc>, window_params = [{transform_indices = @transform_0, window_bounds = array<i64: 32, 32>}, {transform_indices = @transform_1, window_bounds = array<i64: 5, 32, 32>}, {transform_indices = @transform_2, window_bounds = array<i64: 5, 32, 1>}, {pipeline_mode = #tpu.pipeline_mode<synchronous>, transform_indices = @transform_3, window_bounds = array<i64: 32, 64>}, {pipeline_mode = #tpu.pipeline_mode<synchronous>, transform_indices = @transform_4, window_bounds = array<i64: 32, 64>}, {pipeline_mode = #tpu.pipeline_mode<synchronous>, transform_indices = @transform_5, window_bounds = array<i64: 1, 64>}, {pipeline_mode = #tpu.pipeline_mode<synchronous>, transform_indices = @transform_6, window_bounds = array<i64: 1, 64>}, {pipeline_mode = #tpu.pipeline_mode<synchronous>, transform_indices = @transform_7, window_bounds = array<i64: 32, 32>}, {pipeline_mode = #tpu.pipeline_mode<synchronous>, transform_indices = @transform_8, window_bounds = array<i64: 1, 32>}, {transform_indices = @transform_9, window_bounds = array<i64: 32, 32>}]} {
    %c0 = arith.constant 0 : index
    %c0_0 = arith.constant 0 : index
    %0 = vector.load %arg1[%c0, %c0_0] : memref<32x32xf32, #tpu.memory_space<vmem>>, vector<32x32xf32>
    %1 = arith.truncf %0 : vector<32x32xf32> to vector<32x32xbf16>
    %c0_1 = arith.constant 0 : index
    %c0_2 = arith.constant 0 : index
    %2 = vector.load %arg4[%c0_1, %c0_2] : memref<32x64xbf16, #tpu.memory_space<vmem>>, vector<32x64xbf16>
    %cst = arith.constant dense<0.000000e+00> : vector<32x64xf32>
    %3 = tpu.matmul %1, %2, %cst {dimension_numbers = #tpu.dot_dimension_numbers<[1], [0], [0], [1], [0, 0, 1, 1], [], []>} : vector<32x32xbf16>, vector<32x64xbf16>, vector<32x64xf32> -> vector<32x64xf32>
    %c0_3 = arith.constant 0 : index
    %c0_4 = arith.constant 0 : index
    %4 = vector.load %arg7[%c0_3, %c0_4] : memref<1x64xf32, #tpu.memory_space<vmem>>, vector<1x64xf32>
    %5 = vector.broadcast %4 : vector<1x64xf32> to vector<32x64xf32>
    %6 = arith.addf %3, %5 : vector<32x64xf32>
    %c0_5 = arith.constant 0 : index
    %c0_6 = arith.constant 0 : index
    %c0_7 = arith.constant 0 : index
    %7 = vector.load %arg2[%c0_5, %c0_6, %c0_7] : memref<5x32x32xbf16, #tpu.memory_space<vmem>>, vector<5x32x32xbf16>
    %8 = vector.shape_cast %7 : vector<5x32x32xbf16> to vector<160x32xbf16>
    %c0_8 = arith.constant 0 : index
    %c0_9 = arith.constant 0 : index
    %9 = vector.load %arg5[%c0_8, %c0_9] : memref<32x64xbf16, #tpu.memory_space<vmem>>, vector<32x64xbf16>
    %cst_10 = arith.constant dense<0.000000e+00> : vector<160x64xf32>
    %10 = tpu.matmul %8, %9, %cst_10 {dimension_numbers = #tpu.dot_dimension_numbers<[1], [0], [0], [1], [0, 0, 1, 1], [], []>} : vector<160x32xbf16>, vector<32x64xbf16>, vector<160x64xf32> -> vector<160x64xf32>
    %c0_11 = arith.constant 0 : index
    %c0_12 = arith.constant 0 : index
    %c0_13 = arith.constant 0 : index
    %11 = vector.load %arg3[%c0_11, %c0_12, %c0_13] : memref<5x32x1xf32, #tpu.memory_space<vmem>>, vector<5x32x1xf32>
    %12 = vector.shape_cast %11 : vector<5x32x1xf32> to vector<160x1xf32>
    %c0_14 = arith.constant 0 : index
    %c0_15 = arith.constant 0 : index
    %13 = vector.load %arg6[%c0_14, %c0_15] : memref<1x64xf32, #tpu.memory_space<vmem>>, vector<1x64xf32>
    %14 = vector.broadcast %12 : vector<160x1xf32> to vector<160x64xf32>
    %15 = vector.broadcast %13 : vector<1x64xf32> to vector<160x64xf32>
    %16 = arith.mulf %14, %15 : vector<160x64xf32>
    %17 = arith.addf %10, %16 : vector<160x64xf32>
    %18 = vector.shape_cast %17 : vector<160x64xf32> to vector<5x32x64xf32>
    %19 = vector.shape_cast %6 : vector<32x64xf32> to vector<1x32x64xf32>
    %20 = vector.broadcast %19 : vector<1x32x64xf32> to vector<5x32x64xf32>
    %21 = arith.addf %18, %20 : vector<5x32x64xf32>
    %22 = vector.extract_strided_slice %21 {offsets = [0, 0, 0], sizes = [5, 32, 32], strides = [1, 1, 1]} : vector<5x32x64xf32> to vector<5x32x32xf32>
    %23 = vector.extract_strided_slice %21 {offsets = [0, 0, 32], sizes = [5, 32, 32], strides = [1, 1, 1]} : vector<5x32x64xf32> to vector<5x32x32xf32>
    %24 = arith.negf %23 : vector<5x32x32xf32>
    %25 = math.exp %24 : vector<5x32x32xf32>
    %cst_16 = arith.constant 1.000000e+00 : f32
    %26 = vector.broadcast %cst_16 : f32 to vector<5x32x32xf32>
    %27 = arith.addf %26, %25 : vector<5x32x32xf32>
    %28 = arith.divf %26, %27 : vector<5x32x32xf32>
    %29 = arith.mulf %22, %28 : vector<5x32x32xf32>
    %30 = arith.truncf %29 : vector<5x32x32xf32> to vector<5x32x32xbf16>
    %31 = vector.shape_cast %30 : vector<5x32x32xbf16> to vector<160x32xbf16>
    %c0_17 = arith.constant 0 : index
    %c0_18 = arith.constant 0 : index
    %32 = vector.load %arg8[%c0_17, %c0_18] : memref<32x32xbf16, #tpu.memory_space<vmem>>, vector<32x32xbf16>
    %cst_19 = arith.constant dense<0.000000e+00> : vector<160x32xf32>
    %33 = tpu.matmul %31, %32, %cst_19 {dimension_numbers = #tpu.dot_dimension_numbers<[1], [0], [0], [1], [0, 0, 1, 1], [], []>} : vector<160x32xbf16>, vector<32x32xbf16>, vector<160x32xf32> -> vector<160x32xf32>
    %c0_20 = arith.constant 0 : index
    %c0_21 = arith.constant 0 : index
    %34 = vector.load %arg9[%c0_20, %c0_21] : memref<1x32xf32, #tpu.memory_space<vmem>>, vector<1x32xf32>
    %35 = vector.broadcast %34 : vector<1x32xf32> to vector<160x32xf32>
    %36 = arith.addf %33, %35 : vector<160x32xf32>
    %37 = vector.shape_cast %36 : vector<160x32xf32> to vector<5x32x32xf32>
    %cst_22 = arith.constant dense<0xFF800000> : vector<32x32xf32>
    %38 = vector.multi_reduction <maximumf>, %37, %cst_22 [0] : vector<5x32x32xf32> to vector<32x32xf32>
    %39 = arith.addf %38, %0 : vector<32x32xf32>
    %cst_23 = arith.constant 0.000000e+00 : f32
    %40 = vector.broadcast %cst_23 : f32 to vector<32x32xf32>
    %41 = arith.maximumf %39, %40 : vector<32x32xf32>
    %c0_24 = arith.constant 0 : index
    %c0_25 = arith.constant 0 : index
    %42 = vector.load %arg10[%c0_24, %c0_25] : memref<32x32xf32, #tpu.memory_space<vmem>>, vector<32x32xf32>
    tpu.vector_store %arg10[%c0_24, %c0_25], %41 {strides = array<i32>} : memref<32x32xf32, #tpu.memory_space<vmem>>, vector<32x32xf32>,
    return
  }
  func.func @transform_0(%arg0: i32) -> (i32, i32) {
    %c0_i32 = arith.constant 0 : i32
    %c0_i32_0 = arith.constant 0 : i32
    return %arg0, %c0_i32 : i32, i32
  }
  func.func @transform_1(%arg0: i32) -> (i32, i32, i32) {
    %c0_i32 = arith.constant 0 : i32
    %c0_i32_0 = arith.constant 0 : i32
    %c0_i32_1 = arith.constant 0 : i32
    return %c0_i32, %arg0, %c0_i32_0 : i32, i32, i32
  }
  func.func @transform_2(%arg0: i32) -> (i32, i32, i32) {
    %c0_i32 = arith.constant 0 : i32
    %c0_i32_0 = arith.constant 0 : i32
    %c0_i32_1 = arith.constant 0 : i32
    return %c0_i32, %arg0, %c0_i32_0 : i32, i32, i32
  }
  func.func @transform_3(%arg0: i32) -> (i32, i32) {
    %c0_i32 = arith.constant 0 : i32
    %c0_i32_0 = arith.constant 0 : i32
    %c0_i32_1 = arith.constant 0 : i32
    return %c0_i32, %c0_i32_0 : i32, i32
  }
  func.func @transform_4(%arg0: i32) -> (i32, i32) {
    %c0_i32 = arith.constant 0 : i32
    %c0_i32_0 = arith.constant 0 : i32
    %c0_i32_1 = arith.constant 0 : i32
    return %c0_i32, %c0_i32_0 : i32, i32
  }
  func.func @transform_5(%arg0: i32) -> (i32, i32) {
    %c0_i32 = arith.constant 0 : i32
    %c0_i32_0 = arith.constant 0 : i32
    %c0_i32_1 = arith.constant 0 : i32
    return %c0_i32, %c0_i32_0 : i32, i32
  }
  func.func @transform_6(%arg0: i32) -> (i32, i32) {
    %c0_i32 = arith.constant 0 : i32
    %c0_i32_0 = arith.constant 0 : i32
    %c0_i32_1 = arith.constant 0 : i32
    return %c0_i32, %c0_i32_0 : i32, i32
  }
  func.func @transform_7(%arg0: i32) -> (i32, i32) {
    %c0_i32 = arith.constant 0 : i32
    %c0_i32_0 = arith.constant 0 : i32
    %c0_i32_1 = arith.constant 0 : i32
    return %c0_i32, %c0_i32_0 : i32, i32
  }
  func.func @transform_8(%arg0: i32) -> (i32, i32) {
    %c0_i32 = arith.constant 0 : i32
    %c0_i32_0 = arith.constant 0 : i32
    %c0_i32_1 = arith.constant 0 : i32
    return %c0_i32, %c0_i32_0 : i32, i32
  }
  func.func @transform_9(%arg0: i32) -> (i32, i32) {
    %c0_i32 = arith.constant 0 : i32
    %c0_i32_0 = arith.constant 0 : i32
    return %arg0, %c0_i32 : i32, i32
  }
}

module attributes {stable_mosaic.version = 11 : i64} {
  func.func @_edge_conv_kernel(%arg0: i32, %arg1: memref<32x32xf32, #tpu.memory_space<vmem>>, %arg2: memref<5x32x32xbf16, #tpu.memory_space<vmem>>, %arg3: memref<5x32x1xf32, #tpu.memory_space<vmem>>, %arg4: memref<32x64xbf16, #tpu.memory_space<vmem>>, %arg5: memref<32x64xbf16, #tpu.memory_space<vmem>>, %arg6: memref<1x64xf32, #tpu.memory_space<vmem>>, %arg7: memref<1x64xf32, #tpu.memory_space<vmem>>, %arg8: memref<32x32xbf16, #tpu.memory_space<vmem>>, %arg9: memref<1x32xf32, #tpu.memory_space<vmem>>, %arg10: memref<32x64xf32, #tpu.memory_space<vmem>>) attributes {dimension_semantics = [#tpu.dimension_semantics<parallel>], iteration_bounds = array<i64: 1>, scalar_prefetch = 0 : i64, scratch_operands = 0 : i64, tpu.core_type = #tpu.core_type<tc>, window_params = [{transform_indices = @transform_0, window_bounds = array<i64: 32, 32>}, {transform_indices = @transform_1, window_bounds = array<i64: 5, 32, 32>}, {transform_indices = @transform_2, window_bounds = array<i64: 5, 32, 1>}, {pipeline_mode = #tpu.pipeline_mode<synchronous>, transform_indices = @transform_3, window_bounds = array<i64: 32, 64>}, {pipeline_mode = #tpu.pipeline_mode<synchronous>, transform_indices = @transform_4, window_bounds = array<i64: 32, 64>}, {pipeline_mode = #tpu.pipeline_mode<synchronous>, transform_indices = @transform_5, window_bounds = array<i64: 1, 64>}, {pipeline_mode = #tpu.pipeline_mode<synchronous>, transform_indices = @transform_6, window_bounds = array<i64: 1, 64>}, {pipeline_mode = #tpu.pipeline_mode<synchronous>, transform_indices = @transform_7, window_bounds = array<i64: 32, 32>}, {pipeline_mode = #tpu.pipeline_mode<synchronous>, transform_indices = @transform_8, window_bounds = array<i64: 1, 32>}, {transform_indices = @transform_9, window_bounds = array<i64: 32, 64>}]} {
    %c0 = arith.constant 0 : index
    %c0_0 = arith.constant 0 : index
    %0 = vector.load %arg1[%c0, %c0_0] : memref<32x32xf32, #tpu.memory_space<vmem>>, vector<32x32xf32>
    %1 = arith.truncf %0 : vector<32x32xf32> to vector<32x32xbf16>
    %c0_1 = arith.constant 0 : index
    %c0_2 = arith.constant 0 : index
    %2 = vector.load %arg4[%c0_1, %c0_2] : memref<32x64xbf16, #tpu.memory_space<vmem>>, vector<32x64xbf16>
    %cst = arith.constant dense<0.000000e+00> : vector<32x64xf32>
    %3 = tpu.matmul %1, %2, %cst {dimension_numbers = #tpu.dot_dimension_numbers<[1], [0], [0], [1], [0, 0, 1, 1], [], []>} : vector<32x32xbf16>, vector<32x64xbf16>, vector<32x64xf32> -> vector<32x64xf32>
    %c0_3 = arith.constant 0 : index
    %c0_4 = arith.constant 0 : index
    %4 = vector.load %arg7[%c0_3, %c0_4] : memref<1x64xf32, #tpu.memory_space<vmem>>, vector<1x64xf32>
    %5 = vector.broadcast %4 : vector<1x64xf32> to vector<32x64xf32>
    %6 = arith.addf %3, %5 : vector<32x64xf32>
    %c0_5 = arith.constant 0 : index
    %c0_6 = arith.constant 0 : index
    %c0_7 = arith.constant 0 : index
    %7 = vector.load %arg2[%c0_5, %c0_6, %c0_7] : memref<5x32x32xbf16, #tpu.memory_space<vmem>>, vector<5x32x32xbf16>
    %8 = vector.shape_cast %7 : vector<5x32x32xbf16> to vector<160x32xbf16>
    %c0_8 = arith.constant 0 : index
    %c0_9 = arith.constant 0 : index
    %9 = vector.load %arg5[%c0_8, %c0_9] : memref<32x64xbf16, #tpu.memory_space<vmem>>, vector<32x64xbf16>
    %cst_10 = arith.constant dense<0.000000e+00> : vector<160x64xf32>
    %10 = tpu.matmul %8, %9, %cst_10 {dimension_numbers = #tpu.dot_dimension_numbers<[1], [0], [0], [1], [0, 0, 1, 1], [], []>} : vector<160x32xbf16>, vector<32x64xbf16>, vector<160x64xf32> -> vector<160x64xf32>
    %c0_11 = arith.constant 0 : index
    %c0_12 = arith.constant 0 : index
    %c0_13 = arith.constant 0 : index
    %11 = vector.load %arg3[%c0_11, %c0_12, %c0_13] : memref<5x32x1xf32, #tpu.memory_space<vmem>>, vector<5x32x1xf32>
    %12 = vector.shape_cast %11 : vector<5x32x1xf32> to vector<160x1xf32>
    %c0_14 = arith.constant 0 : index
    %c0_15 = arith.constant 0 : index
    %13 = vector.load %arg6[%c0_14, %c0_15] : memref<1x64xf32, #tpu.memory_space<vmem>>, vector<1x64xf32>
    %14 = vector.broadcast %12 : vector<160x1xf32> to vector<160x64xf32>
    %15 = vector.broadcast %13 : vector<1x64xf32> to vector<160x64xf32>
    %16 = arith.mulf %14, %15 : vector<160x64xf32>
    %17 = arith.addf %10, %16 : vector<160x64xf32>
    %18 = vector.shape_cast %17 : vector<160x64xf32> to vector<5x32x64xf32>
    %19 = vector.shape_cast %6 : vector<32x64xf32> to vector<1x32x64xf32>
    %20 = vector.broadcast %19 : vector<1x32x64xf32> to vector<5x32x64xf32>
    %21 = arith.addf %18, %20 : vector<5x32x64xf32>
    %22 = vector.extract_strided_slice %21 {offsets = [0, 0, 0], sizes = [5, 32, 32], strides = [1, 1, 1]} : vector<5x32x64xf32> to vector<5x32x32xf32>
    %23 = vector.extract_strided_slice %21 {offsets = [0, 0, 32], sizes = [5, 32, 32], strides = [1, 1, 1]} : vector<5x32x64xf32> to vector<5x32x32xf32>
    %24 = arith.negf %23 : vector<5x32x32xf32>
    %25 = math.exp %24 : vector<5x32x32xf32>
    %cst_16 = arith.constant 1.000000e+00 : f32
    %26 = vector.broadcast %cst_16 : f32 to vector<5x32x32xf32>
    %27 = arith.addf %26, %25 : vector<5x32x32xf32>
    %28 = arith.divf %26, %27 : vector<5x32x32xf32>
    %29 = arith.mulf %22, %28 : vector<5x32x32xf32>
    %30 = arith.truncf %29 : vector<5x32x32xf32> to vector<5x32x32xbf16>
    %31 = vector.shape_cast %30 : vector<5x32x32xbf16> to vector<160x32xbf16>
    %c0_17 = arith.constant 0 : index
    %c0_18 = arith.constant 0 : index
    %32 = vector.load %arg8[%c0_17, %c0_18] : memref<32x32xbf16, #tpu.memory_space<vmem>>, vector<32x32xbf16>
    %cst_19 = arith.constant dense<0.000000e+00> : vector<160x32xf32>
    %33 = tpu.matmul %31, %32, %cst_19 {dimension_numbers = #tpu.dot_dimension_numbers<[1], [0], [0], [1], [0, 0, 1, 1], [], []>} : vector<160x32xbf16>, vector<32x32xbf16>, vector<160x32xf32> -> vector<160x32xf32>
    %c0_20 = arith.constant 0 : index
    %c0_21 = arith.constant 0 : index
    %34 = vector.load %arg9[%c0_20, %c0_21] : memref<1x32xf32, #tpu.memory_space<vmem>>, vector<1x32xf32>
    %35 = vector.broadcast %34 : vector<1x32xf32> to vector<160x32xf32>
    %36 = arith.addf %33, %35 : vector<160x32xf32>
    %37 = vector.shape_cast %36 : vector<160x32xf32> to vector<5x32x32xf32>
    %cst_22 = arith.constant dense<0xFF800000> : vector<32x32xf32>
    %38 = vector.multi_reduction <maximumf>, %37, %cst_22 [0] : vector<5x32x32xf32> to vector<32x32xf32>
    %39 = arith.addf %38, %0 : vector<32x32xf32>
    %cst_23 = arith.constant 0.000000e+00 : f32
    %40 = vector.broadcast %cst_23 : f32 to vector<32x32xf32>
    %41 = arith.maximumf %39, %40 : vector<32x32xf32>
    %42 = tpu.concatenate %0, %41 in 1 : vector<32x32xf32>, vector<32x32xf32> -> vector<32x64xf32>
    %c0_24 = arith.constant 0 : index
    %c0_25 = arith.constant 0 : index
    %43 = vector.load %arg10[%c0_24, %c0_25] : memref<32x64xf32, #tpu.memory_space<vmem>>, vector<32x64xf32>
    tpu.vector_store %arg10[%c0_24, %c0_25], %42 {strides = array<i32>} : memref<32x64xf32, #tpu.memory_space<vmem>>, vector<32x64xf32>,
    return
  }
  func.func @transform_0(%arg0: i32) -> (i32, i32) {
    %c0_i32 = arith.constant 0 : i32
    %c0_i32_0 = arith.constant 0 : i32
    return %arg0, %c0_i32 : i32, i32
  }
  func.func @transform_1(%arg0: i32) -> (i32, i32, i32) {
    %c0_i32 = arith.constant 0 : i32
    %c0_i32_0 = arith.constant 0 : i32
    %c0_i32_1 = arith.constant 0 : i32
    return %c0_i32, %arg0, %c0_i32_0 : i32, i32, i32
  }
  func.func @transform_2(%arg0: i32) -> (i32, i32, i32) {
    %c0_i32 = arith.constant 0 : i32
    %c0_i32_0 = arith.constant 0 : i32
    %c0_i32_1 = arith.constant 0 : i32
    return %c0_i32, %arg0, %c0_i32_0 : i32, i32, i32
  }
  func.func @transform_3(%arg0: i32) -> (i32, i32) {
    %c0_i32 = arith.constant 0 : i32
    %c0_i32_0 = arith.constant 0 : i32
    %c0_i32_1 = arith.constant 0 : i32
    return %c0_i32, %c0_i32_0 : i32, i32
  }
  func.func @transform_4(%arg0: i32) -> (i32, i32) {
    %c0_i32 = arith.constant 0 : i32
    %c0_i32_0 = arith.constant 0 : i32
    %c0_i32_1 = arith.constant 0 : i32
    return %c0_i32, %c0_i32_0 : i32, i32
  }
  func.func @transform_5(%arg0: i32) -> (i32, i32) {
    %c0_i32 = arith.constant 0 : i32
    %c0_i32_0 = arith.constant 0 : i32
    %c0_i32_1 = arith.constant 0 : i32
    return %c0_i32, %c0_i32_0 : i32, i32
  }
  func.func @transform_6(%arg0: i32) -> (i32, i32) {
    %c0_i32 = arith.constant 0 : i32
    %c0_i32_0 = arith.constant 0 : i32
    %c0_i32_1 = arith.constant 0 : i32
    return %c0_i32, %c0_i32_0 : i32, i32
  }
  func.func @transform_7(%arg0: i32) -> (i32, i32) {
    %c0_i32 = arith.constant 0 : i32
    %c0_i32_0 = arith.constant 0 : i32
    %c0_i32_1 = arith.constant 0 : i32
    return %c0_i32, %c0_i32_0 : i32, i32
  }
  func.func @transform_8(%arg0: i32) -> (i32, i32) {
    %c0_i32 = arith.constant 0 : i32
    %c0_i32_0 = arith.constant 0 : i32
    %c0_i32_1 = arith.constant 0 : i32
    return %c0_i32, %c0_i32_0 : i32, i32
  }
  func.func @transform_9(%arg0: i32) -> (i32, i32) {
    %c0_i32 = arith.constant 0 : i32
    %c0_i32_0 = arith.constant 0 : i32
    return %arg0, %c0_i32 : i32, i32
  }
}

module attributes {stable_mosaic.version = 11 : i64} {
  func.func @_pool_head_kernel(%arg0: memref<32x64xf32, #tpu.memory_space<vmem>>, %arg1: memref<128x64xf32, #tpu.memory_space<vmem>>, %arg2: memref<1x64xf32, #tpu.memory_space<vmem>>, %arg3: memref<32x2xf32, #tpu.memory_space<vmem>>, %arg4: memref<1x2xf32, #tpu.memory_space<vmem>>, %arg5: memref<2x2xf32, #tpu.memory_space<vmem>>) attributes {dimension_semantics = [], scalar_prefetch = 0 : i64, scratch_operands = 0 : i64, tpu.core_type = #tpu.core_type<tc>} {
    %c0 = arith.constant 0 : index
    %c0_0 = arith.constant 0 : index
    %0 = vector.load %arg0[%c0, %c0_0] : memref<32x64xf32, #tpu.memory_space<vmem>>, vector<32x64xf32>
    %1 = vector.shape_cast %0 : vector<32x64xf32> to vector<2x16x64xf32>
    %cst = arith.constant dense<0xFF800000> : vector<2x64xf32>
    %2 = vector.multi_reduction <maximumf>, %1, %cst [1] : vector<2x16x64xf32> to vector<2x64xf32>
    %cst_1 = arith.constant dense<0.000000e+00> : vector<2x64xf32>
    %3 = vector.multi_reduction <add>, %1, %cst_1 [1] : vector<2x16x64xf32> to vector<2x64xf32>
    %cst_2 = arith.constant 1.600000e+01 : f32
    %4 = vector.broadcast %cst_2 : f32 to vector<2x64xf32>
    %5 = arith.divf %3, %4 : vector<2x64xf32>
    %6 = tpu.concatenate %2, %5 in 1 : vector<2x64xf32>, vector<2x64xf32> -> vector<2x128xf32>
    %c0_3 = arith.constant 0 : index
    %c0_4 = arith.constant 0 : index
    %7 = vector.load %arg1[%c0_3, %c0_4] : memref<128x64xf32, #tpu.memory_space<vmem>>, vector<128x64xf32>
    %cst_5 = arith.constant dense<0.000000e+00> : vector<2x64xf32>
    %8 = tpu.matmul %6, %7, %cst_5 {dimension_numbers = #tpu.dot_dimension_numbers<[1], [0], [0], [1], [0, 0, 1, 1], [], []>} : vector<2x128xf32>, vector<128x64xf32>, vector<2x64xf32> -> vector<2x64xf32>
    %c0_6 = arith.constant 0 : index
    %c0_7 = arith.constant 0 : index
    %9 = vector.load %arg2[%c0_6, %c0_7] : memref<1x64xf32, #tpu.memory_space<vmem>>, vector<1x64xf32>
    %10 = vector.broadcast %9 : vector<1x64xf32> to vector<2x64xf32>
    %11 = arith.addf %8, %10 : vector<2x64xf32>
    %12 = vector.extract_strided_slice %11 {offsets = [0, 0], sizes = [2, 32], strides = [1, 1]} : vector<2x64xf32> to vector<2x32xf32>
    %13 = vector.extract_strided_slice %11 {offsets = [0, 32], sizes = [2, 32], strides = [1, 1]} : vector<2x64xf32> to vector<2x32xf32>
    %14 = arith.negf %13 : vector<2x32xf32>
    %15 = math.exp %14 : vector<2x32xf32>
    %cst_8 = arith.constant 1.000000e+00 : f32
    %16 = vector.broadcast %cst_8 : f32 to vector<2x32xf32>
    %17 = arith.addf %16, %15 : vector<2x32xf32>
    %18 = arith.divf %16, %17 : vector<2x32xf32>
    %19 = arith.mulf %12, %18 : vector<2x32xf32>
    %c0_9 = arith.constant 0 : index
    %c0_10 = arith.constant 0 : index
    %20 = vector.load %arg3[%c0_9, %c0_10] : memref<32x2xf32, #tpu.memory_space<vmem>>, vector<32x2xf32>
    %cst_11 = arith.constant dense<0.000000e+00> : vector<2x2xf32>
    %21 = tpu.matmul %19, %20, %cst_11 {dimension_numbers = #tpu.dot_dimension_numbers<[1], [0], [0], [1], [0, 0, 1, 1], [], []>} : vector<2x32xf32>, vector<32x2xf32>, vector<2x2xf32> -> vector<2x2xf32>
    %c0_12 = arith.constant 0 : index
    %c0_13 = arith.constant 0 : index
    %22 = vector.load %arg4[%c0_12, %c0_13] : memref<1x2xf32, #tpu.memory_space<vmem>>, vector<1x2xf32>
    %23 = vector.broadcast %22 : vector<1x2xf32> to vector<2x2xf32>
    %24 = arith.addf %21, %23 : vector<2x2xf32>
    %cst_14 = arith.constant dense<0xFF800000> : vector<2xf32>
    %25 = vector.multi_reduction <maximumf>, %24, %cst_14 [1] : vector<2x2xf32> to vector<2xf32>
    %26 = vector.shape_cast %25 : vector<2xf32> to vector<2x1xf32>
    %27 = vector.broadcast %26 : vector<2x1xf32> to vector<2x2xf32>
    %28 = arith.subf %24, %27 : vector<2x2xf32>
    %29 = math.exp %28 : vector<2x2xf32>
    %cst_15 = arith.constant dense<0.000000e+00> : vector<2xf32>
    %30 = vector.multi_reduction <add>, %29, %cst_15 [1] : vector<2x2xf32> to vector<2xf32>
    %31 = vector.shape_cast %30 : vector<2xf32> to vector<2x1xf32>
    %32 = math.log %31 : vector<2x1xf32>
    %33 = arith.addf %26, %32 : vector<2x1xf32>
    %34 = vector.broadcast %33 : vector<2x1xf32> to vector<2x2xf32>
    %35 = arith.subf %24, %34 : vector<2x2xf32>
    %c0_16 = arith.constant 0 : index
    %c0_17 = arith.constant 0 : index
    %36 = vector.load %arg5[%c0_16, %c0_17] : memref<2x2xf32, #tpu.memory_space<vmem>>, vector<2x2xf32>
    tpu.vector_store %arg5[%c0_16, %c0_17], %35 {strides = array<i32>} : memref<2x2xf32, #tpu.memory_space<vmem>>, vector<2x2xf32>,
    return
  }
}

</mosaic_0001>

<llo_original>
// kernel: glue_edge_dgcnn_forward.7
$region0: #{glue_edge_dgcnn_forward.7}
  #allocation0 [shape = 'u32[]', space=smem, size = 0x4, offset = 0x4, fixed_abs, tag = 'smem constant byte address 0x4 - core index']
  #allocation1 [shape = 'u32[144,128]{1,0:T(1,128)}', space=vmem, size = 0x12000, scoped, tag = 'internal scratch']
  %s0 = inlined_call_operand.vmem [shape: f32[32,32], index: 0, kind: input, shape index: {}, may-alias: {0,2}]
  %s1 = inlined_call_operand.vmem [shape: s32[32,1], index: 1, kind: input, shape index: {}]
  %s2 = inlined_call_operand.vmem [shape: f32[32,32], index: 2, kind: input, shape index: {}, may-alias: {0,2}]
  %s3 = inlined_call_operand.vmem [shape: f32[1,32], index: 3, kind: input, shape index: {}]
  %s4 = inlined_call_operand.vmem [shape: s32[1,32], index: 4, kind: input, shape index: {}]
  %s5 = inlined_call_operand.vmem [shape: f32[32,32], index: 5, kind: output, shape index: {}]
  %s6 = sld [smem:[#allocation0]]
  $region30: #{glue_edge_dgcnn_forward.7} parent=0
    _
  %s8 = ssub.s32 1, %s6
  %s9 = scalar_select 0, %s8, %s6
  // Predicated region
  $region2: #{glue_edge_dgcnn_forward.7} parent=0 // pred_check
    _
  $region3: #{glue_edge_dgcnn_forward.7} parent=0 // pred_check_branch
    %11 = sbr.rel (0) target = $region5
  $region4: #{glue_edge_dgcnn_forward.7} parent=0 // pred_region
    _
  $region5: #{glue_edge_dgcnn_forward.7} parent=0 // pred_fallthru
    _
  // Predicated region
  $region6: #{glue_edge_dgcnn_forward.7} parent=0 // pred_check
    _
  $region7: #{glue_edge_dgcnn_forward.7} parent=0 // pred_check_branch
    %13 = sbr.rel (0) target = $region9
  $region8: #{glue_edge_dgcnn_forward.7} parent=0 // pred_region
    _
  $region9: #{glue_edge_dgcnn_forward.7} parent=0 // pred_fallthru
    _
  // Predicated region
  $region10: #{glue_edge_dgcnn_forward.7} parent=0 // pred_check
    _
  $region11: #{glue_edge_dgcnn_forward.7} parent=0 // pred_check_branch
    %15 = sbr.rel (0) target = $region13
  $region12: #{glue_edge_dgcnn_forward.7} parent=0 // pred_region
    _
  $region13: #{glue_edge_dgcnn_forward.7} parent=0 // pred_fallthru
    _
  // Predicated region
  $region14: #{glue_edge_dgcnn_forward.7} parent=0 // pred_check
    _
  $region15: #{glue_edge_dgcnn_forward.7} parent=0 // pred_check_branch
    %17 = sbr.rel (0) target = $region17
  $region16: #{glue_edge_dgcnn_forward.7} parent=0 // pred_region
    _
  $region17: #{glue_edge_dgcnn_forward.7} parent=0 // pred_fallthru
    _
  // Predicated region
  $region18: #{glue_edge_dgcnn_forward.7} parent=0 // pred_check
    _
  $region19: #{glue_edge_dgcnn_forward.7} parent=0 // pred_check_branch
    %19 = sbr.rel (0) target = $region21
  $region20: #{glue_edge_dgcnn_forward.7} parent=0 // pred_region
    _
  $region21: #{glue_edge_dgcnn_forward.7} parent=0 // pred_fallthru
    _
  %s20 = smul.u32 0, 32
  %v21 = vld [vmem:[%s0] sm:$0xff]
  %v22 = vld [vmem:[%s0 + $0x8] sm:$0xff]
  %v23 = vld [vmem:[%s0 + $0x10] sm:$0xff]
  %v24 = vld [vmem:[%s0 + $0x18] sm:$0xff]
  %v25 = vld [vmem:[%s2] sm:$0xff]
  %v26 = vld [vmem:[%s2 + $0x8] sm:$0xff]
  %v27 = vld [vmem:[%s2 + $0x10] sm:$0xff]
  %v28 = vld [vmem:[%s2 + $0x18] sm:$0xff]
  %vm29 = vcmask 261120
  %v31 = vsel %vm29, %v21, 0
  %v34 = vsel %vm29, %v22, 0
  %v37 = vsel %vm29, %v23, 0
  %v40 = vsel %vm29, %v24, 0
  %v43 = vsel %vm29, %v25, 0
  %v46 = vsel %vm29, %v26, 0
  %v49 = vsel %vm29, %v27, 0
  %v52 = vsel %vm29, %v28, 0
  %54 = vmatprep.subr.mxu0 0.0
  %55 = vmatpush1.xpose.msra.mxu0 0.0
  %56 = vmatprep.subr.mxu0 0.0
  %57 = vmatpush1.xpose.msra.mxu0 0.0
  %58 = vmatprep.subr.mxu0 0.0
  %59 = vmatpush1.xpose.msra.mxu0 0.0
  %60 = vmatprep.subr.mxu0 0.0
  %61 = vmatpush1.xpose.msra.mxu0 0.0
  %62 = vmatprep.subr.mxu0 0.0
  %63 = vmatpush1.xpose.msra.mxu0 0.0
  %64 = vmatprep.subr.mxu0 0.0
  %65 = vmatpush1.xpose.msra.mxu0 0.0
  %66 = vmatprep.subr.mxu0 0.0
  %67 = vmatpush1.xpose.msra.mxu0 0.0
  %68 = vmatprep.subr.mxu0 0.0
  %69 = vmatpush1.xpose.msra.mxu0 0.0
  %70 = vmatprep.subr.mxu0 0.0
  %71 = vmatpush1.xpose.msra.mxu0 0.0
  %72 = vmatprep.subr.mxu0 0.0
  %73 = vmatpush1.xpose.msra.mxu0 0.0
  %74 = vmatprep.subr.mxu0 0.0
  %75 = vmatpush1.xpose.msra.mxu0 0.0
  %76 = vmatprep.subr.mxu0 0.0
  %77 = vmatpush1.xpose.msra.mxu0 0.0
  %78 = vmatprep.subr.mxu0 0.0
  %79 = vmatpush1.xpose.msra.mxu0 %v52
  %80 = vmatprep.subr.mxu0 0.0
  %81 = vmatpush1.xpose.msra.mxu0 %v49
  %82 = vmatprep.subr.mxu0 0.0
  %83 = vmatpush1.xpose.msra.mxu0 %v46
  %84 = vmatprep.subr.mxu0 0.0
  %85 = vmatpush1.xpose.msra.mxu0 %v43
  %86 = vmatprep.subr.mxu0 0.0
  %87 = vmatpush2.xpose.msra.mxu0 0.0
  %88 = vmatprep.subr.mxu0 0.0
  %89 = vmatpush2.xpose.msra.mxu0 0.0
  %90 = vmatprep.subr.mxu0 0.0
  %91 = vmatpush2.xpose.msra.mxu0 0.0
  %92 = vmatprep.subr.mxu0 0.0
  %93 = vmatpush2.xpose.msra.mxu0 0.0
  %94 = vmatprep.subr.mxu0 0.0
  %95 = vmatpush2.xpose.msra.mxu0 0.0
  %96 = vmatprep.subr.mxu0 0.0
  %97 = vmatpush2.xpose.msra.mxu0 0.0
  %98 = vmatprep.subr.mxu0 0.0
  %99 = vmatpush2.xpose.msra.mxu0 0.0
  %100 = vmatprep.subr.mxu0 0.0
  %101 = vmatpush2.xpose.msra.mxu0 0.0
  %102 = vmatprep.subr.mxu0 0.0
  %103 = vmatpush2.xpose.msra.mxu0 0.0
  %104 = vmatprep.subr.mxu0 0.0
  %105 = vmatpush2.xpose.msra.mxu0 0.0
  %106 = vmatprep.subr.mxu0 0.0
  %107 = vmatpush2.xpose.msra.mxu0 0.0
  %108 = vmatprep.subr.mxu0 0.0
  %109 = vmatpush2.xpose.msra.mxu0 0.0
  %110 = vmatprep.subr.mxu0 0.0
  %111 = vmatpush2.xpose.msra.mxu0 0.0
  %112 = vmatprep.subr.mxu0 0.0
  %113 = vmatpush2.xpose.msra.mxu0 0.0
  %114 = vmatprep.subr.mxu0 0.0
  %115 = vmatpush2.xpose.msra.mxu0 0.0
  %116 = vmatprep.subr.mxu0 0.0
  %117 = vmatpush2.xpose.msra.mxu0 0.0
  %118 = vmatprep.mubr.f32.mxu0 0.0
  %119 = vmatmul.mubr.f32.gmra.mxu0 %v31
  %v120 = vpop.f32.mrf.mxu0
  %v121 = vadd.f32 0.0, %v120
  %v122 = vpop.f32.mrf.mxu0
  %123 = vmatprep.mubr.f32.mxu0 0.0
  %124 = vmatmul.mubr.f32.gmra.mxu0 %v34
  %v125 = vpop.f32.mrf.mxu0
  %v126 = vadd.f32 0.0, %v125
  %v127 = vpop.f32.mrf.mxu0
  %128 = vmatprep.mubr.f32.mxu0 0.0
  %129 = vmatmul.mubr.f32.gmra.mxu0 %v37
  %v130 = vpop.f32.mrf.mxu0
  %v131 = vadd.f32 0.0, %v130
  %v132 = vpop.f32.mrf.mxu0
  %133 = vmatprep.mubr.f32.mxu0 0.0
  %134 = vmatmul.mubr.f32.gmra.mxu0 %v40
  %v135 = vpop.f32.mrf.mxu0
  %v136 = vadd.f32 0.0, %v135
  %v137 = vpop.f32.mrf.mxu0
  %138 = vdwg.mxu0
  %v139 = vmul.f32 %v21, %v21
  %v140 = vmul.f32 %v22, %v22
  %v141 = vmul.f32 %v23, %v23
  %v142 = vmul.f32 %v24, %v24
  %v143 = vsel %vm29, %v139, 0.0
  %144 = vadd.xlane.f32.xlu0 %v143
  %v145 = vpop.xlane.xlu0 %144
  %v146 = vsel %vm29, %v140, 0.0
  %147 = vadd.xlane.f32.xlu0 %v146
  %v148 = vpop.xlane.xlu0 %147
  %v149 = vsel %vm29, %v141, 0.0
  %150 = vadd.xlane.f32.xlu0 %v149
  %v151 = vpop.xlane.xlu0 %150
  %v152 = vsel %vm29, %v142, 0.0
  %153 = vadd.xlane.f32.xlu0 %v152
  %v154 = vpop.xlane.xlu0 %153
  %v155 = vld [vmem:[%s3] sm:$0x1]
  %v157 = vlaneseq
  %v158 = vshrl.u32 %v157, 7
  %v159 = vsub.s32 0, %v158
  %v160 = vrot.slane %v155, %v159
  %v162 = vadd.f32 %v145, %v160
  %v163 = vadd.f32 %v148, %v160
  %v164 = vadd.f32 %v151, %v160
  %v165 = vadd.f32 %v154, %v160
  %v166 = vmul.f32 %v121, 2.0
  %v167 = vmul.f32 %v126, 2.0
  %v168 = vmul.f32 %v131, 2.0
  %v169 = vmul.f32 %v136, 2.0
  %v170 = vsub.f32 %v162, %v166
  %v171 = vsub.f32 %v163, %v167
  %v172 = vsub.f32 %v164, %v168
  %v173 = vsub.f32 %v165, %v169
  %v174 = vlaneseq
  %v175 = vshrl.u32 %v174, 7
  %v176 = vadd.s32 %v175, 8
  %v177 = vadd.s32 %v175, 16
  %v178 = vadd.s32 %v175, 24
  %v179 = vstv %s20
  %v180 = vadd.s32 %v179, %v175
  %v181 = vadd.s32 %v179, %v176
  %v182 = vadd.s32 %v179, %v177
  %v183 = vadd.s32 %v179, %v178
  %v184 = vlaneseq
  %v185 = vand.u32 %v184, 127
  %v186 = vld [vmem:[%s1] sm:$0xff]
  %v187 = vld [vmem:[%s1 + $0x8] sm:$0xff]
  %v188 = vld [vmem:[%s1 + $0x10] sm:$0xff]
  %v189 = vld [vmem:[%s1 + $0x18] sm:$0xff]
  %v190 = vld [vmem:[%s4] sm:$0x1]
  %191 = vset.pattern.permute.xlu0 0
  %192 = vperm.xlu0 %191, %v186
  %v193 = vpop.permute.xlu0 %192
  %194 = vset.pattern.permute.xlu0 0
  %195 = vperm.xlu0 %194, %v187
  %v196 = vpop.permute.xlu0 %195
  %197 = vset.pattern.permute.xlu0 0
  %198 = vperm.xlu0 %197, %v188
  %v199 = vpop.permute.xlu0 %198
  %200 = vset.pattern.permute.xlu0 0
  %201 = vperm.xlu0 %200, %v189
  %v202 = vpop.permute.xlu0 %201
  %v203 = vlaneseq
  %v204 = vshrl.u32 %v203, 7
  %v205 = vsub.s32 0, %v204
  %v206 = vrot.slane %v190, %v205
  %vm207 = vcmp.eq.s32.totalorder %v193, %v206
  %vm208 = vcmp.eq.s32.totalorder %v196, %v206
  %vm209 = vcmp.eq.s32.totalorder %v199, %v206
  %vm210 = vcmp.eq.s32.totalorder %v202, %v206
  %vm211 = vcmp.ne.s32.totalorder %v180, %v185
  %vm212 = vcmp.ne.s32.totalorder %v181, %v185
  %vm213 = vcmp.ne.s32.totalorder %v182, %v185
  %vm214 = vcmp.ne.s32.totalorder %v183, %v185
  %vm215 = vmand %vm207, %vm211
  %vm216 = vmand %vm208, %vm212
  %vm217 = vmand %vm209, %vm213
  %vm218 = vmand %vm210, %vm214
  %v219 = vsub.f32 0.0, %v170
  %v220 = vsub.f32 0.0, %v171
  %v221 = vsub.f32 0.0, %v172
  %v222 = vsub.f32 0.0, %v173
  %v223 = vsel %vm215, %v219, -inf
  %v224 = vsel %vm216, %v220, -inf
  %v225 = vsel %vm217, %v221, -inf
  %v226 = vsel %vm218, %v222, -inf
  %227 = vst.msk [vmem:[%s5] sm:$0xff] %vm29, %v223
  %228 = vst.msk [vmem:[%s5 + $0x8] sm:$0xff] %vm29, %v224
  %229 = vst.msk [vmem:[%s5 + $0x10] sm:$0xff] %vm29, %v225
  %230 = vst.msk [vmem:[%s5 + $0x18] sm:$0xff] %vm29, %v226
  // Predicated region
  $region22: #{glue_edge_dgcnn_forward.7} parent=0 // pred_check
    _
  $region23: #{glue_edge_dgcnn_forward.7} parent=0 // pred_check_branch
    %232 = sbr.rel (0) target = $region25
  $region24: #{glue_edge_dgcnn_forward.7} parent=0 // pred_region
    _
  $region25: #{glue_edge_dgcnn_forward.7} parent=0 // pred_fallthru
    _
  // Predicated region
  $region26: #{glue_edge_dgcnn_forward.7} parent=0 // pred_check
    _
  $region27: #{glue_edge_dgcnn_forward.7} parent=0 // pred_check_branch
    %234 = sbr.rel (0) target = $region29
  $region28: #{glue_edge_dgcnn_forward.7} parent=0 // pred_region
    _
  $region29: #{glue_edge_dgcnn_forward.7} parent=0 // pred_fallthru
    _

// kernel: glue_edge_dgcnn_forward.6
$region0: #{glue_edge_dgcnn_forward.6}
  #allocation0 [shape = 'u32[]', space=smem, size = 0x4, offset = 0x4, fixed_abs, tag = 'smem constant byte address 0x4 - core index']
  #allocation1 [shape = 'u32[144,128]{1,0:T(1,128)}', space=vmem, size = 0x12000, scoped, tag = 'internal scratch']
  %s0 = inlined_call_operand.vmem [shape: f32[32,3], index: 0, kind: input, shape index: {}]
  %s1 = inlined_call_operand.vmem [shape: f32[32,1], index: 1, kind: input, shape index: {}]
  %s2 = inlined_call_operand.vmem [shape: f32[1,8], index: 2, kind: input, shape index: {}]
  %s3 = inlined_call_operand.vmem [shape: f32[1,8], index: 3, kind: input, shape index: {}]
  %s4 = inlined_call_operand.vmem [shape: f32[3,64], index: 4, kind: input, shape index: {}]
  %s5 = inlined_call_operand.vmem [shape: f32[8,64], index: 5, kind: input, shape index: {}]
  %s6 = inlined_call_operand.vmem [shape: f32[1,64], index: 6, kind: input, shape index: {}]
  %s7 = inlined_call_operand.vmem [shape: f32[32,32], index: 7, kind: output, shape index: {}]
  %s8 = sld [smem:[#allocation0]]
  $region38: #{glue_edge_dgcnn_forward.6} parent=0
    _
  %s10 = ssub.s32 1, %s8
  %s11 = scalar_select 0, %s10, %s8
  // Predicated region
  $region2: #{glue_edge_dgcnn_forward.6} parent=0 // pred_check
    _
  $region3: #{glue_edge_dgcnn_forward.6} parent=0 // pred_check_branch
    %13 = sbr.rel (0) target = $region5
  $region4: #{glue_edge_dgcnn_forward.6} parent=0 // pred_region
    _
  $region5: #{glue_edge_dgcnn_forward.6} parent=0 // pred_fallthru
    _
  // Predicated region
  $region6: #{glue_edge_dgcnn_forward.6} parent=0 // pred_check
    _
  $region7: #{glue_edge_dgcnn_forward.6} parent=0 // pred_check_branch
    %15 = sbr.rel (0) target = $region9
  $region8: #{glue_edge_dgcnn_forward.6} parent=0 // pred_region
    _
  $region9: #{glue_edge_dgcnn_forward.6} parent=0 // pred_fallthru
    _
  // Predicated region
  $region10: #{glue_edge_dgcnn_forward.6} parent=0 // pred_check
    _
  $region11: #{glue_edge_dgcnn_forward.6} parent=0 // pred_check_branch
    %17 = sbr.rel (0) target = $region13
  $region12: #{glue_edge_dgcnn_forward.6} parent=0 // pred_region
    _
  $region13: #{glue_edge_dgcnn_forward.6} parent=0 // pred_fallthru
    _
  // Predicated region
  $region14: #{glue_edge_dgcnn_forward.6} parent=0 // pred_check
    _
  $region15: #{glue_edge_dgcnn_forward.6} parent=0 // pred_check_branch
    %19 = sbr.rel (0) target = $region17
  $region16: #{glue_edge_dgcnn_forward.6} parent=0 // pred_region
    _
  $region17: #{glue_edge_dgcnn_forward.6} parent=0 // pred_fallthru
    _
  // Predicated region
  $region18: #{glue_edge_dgcnn_forward.6} parent=0 // pred_check
    _
  $region19: #{glue_edge_dgcnn_forward.6} parent=0 // pred_check_branch
    %21 = sbr.rel (0) target = $region21
  $region20: #{glue_edge_dgcnn_forward.6} parent=0 // pred_region
    _
  $region21: #{glue_edge_dgcnn_forward.6} parent=0 // pred_fallthru
    _
  // Predicated region
  $region22: #{glue_edge_dgcnn_forward.6} parent=0 // pred_check
    _
  $region23: #{glue_edge_dgcnn_forward.6} parent=0 // pred_check_branch
    %23 = sbr.rel (0) target = $region25
  $region24: #{glue_edge_dgcnn_forward.6} parent=0 // pred_region
    _
  $region25: #{glue_edge_dgcnn_forward.6} parent=0 // pred_fallthru
    _
  // Predicated region
  $region26: #{glue_edge_dgcnn_forward.6} parent=0 // pred_check
    _
  $region27: #{glue_edge_dgcnn_forward.6} parent=0 // pred_check_branch
    %25 = sbr.rel (0) target = $region29
  $region28: #{glue_edge_dgcnn_forward.6} parent=0 // pred_region
    _
  $region29: #{glue_edge_dgcnn_forward.6} parent=0 // pred_fallthru
    _
  %v26 = vld [vmem:[%s1] sm:$0xff]
  %v27 = vld [vmem:[%s1 + $0x8] sm:$0xff]
  %v28 = vld [vmem:[%s1 + $0x10] sm:$0xff]
  %v29 = vld [vmem:[%s1 + $0x18] sm:$0xff]
  %v30 = vld [vmem:[%s2] sm:$0x1]
  %32 = vset.pattern.permute.xlu0 0
  %33 = vperm.xlu0 %32, %v26
  %v34 = vpop.permute.xlu0 %33
  %37 = vset.pattern.permute.xlu0 0
  %38 = vperm.xlu0 %37, %v27
  %v39 = vpop.permute.xlu0 %38
  %42 = vset.pattern.permute.xlu0 0
  %43 = vperm.xlu0 %42, %v28
  %v44 = vpop.permute.xlu0 %43
  %47 = vset.pattern.permute.xlu0 0
  %48 = vperm.xlu0 %47, %v29
  %v49 = vpop.permute.xlu0 %48
  %v52 = vlaneseq
  %v53 = vshrl.u32 %v52, 7
  %v54 = vsub.s32 0, %v53
  %v55 = vrot.slane %v30, %v54
  %v57 = vmul.f32 %v34, %v55
  %v58 = vmul.f32 %v39, %v55
  %v59 = vmul.f32 %v44, %v55
  %v60 = vmul.f32 %v49, %v55
  %v61 = vld [vmem:[%s3] sm:$0x1]
  %v63 = vlaneseq
  %v64 = vshrl.u32 %v63, 7
  %v65 = vsub.s32 0, %v64
  %v66 = vrot.slane %v61, %v65
  %v68 = vadd.f32 %v57, %v66
  %v69 = vadd.f32 %v58, %v66
  %v70 = vadd.f32 %v59, %v66
  %v71 = vadd.f32 %v60, %v66
  %v72 = vld [vmem:[%s0] sm:$0xff]
  %v73 = vld [vmem:[%s0 + $0x8] sm:$0xff]
  %v74 = vld [vmem:[%s0 + $0x10] sm:$0xff]
  %v75 = vld [vmem:[%s0 + $0x18] sm:$0xff]
  %v76 = vld [vmem:[%s4] sm:$0x7]
  %v77 = vld [vmem:[%s5] sm:$0xff]
  %vm78 = vcmask 64512
  %v80 = vsel %vm78, %v68, 0
  %v83 = vsel %vm78, %v69, 0
  %v86 = vsel %vm78, %v70, 0
  %v89 = vsel %vm78, %v71, 0
  %91 = vmatprep.subr.mxu0 0.0
  %92 = vmatpush1.msra.mxu0 0.0
  %93 = vmatprep.subr.mxu0 0.0
  %94 = vmatpush1.msra.mxu0 0.0
  %95 = vmatprep.subr.mxu0 0.0
  %96 = vmatpush1.msra.mxu0 0.0
  %97 = vmatprep.subr.mxu0 0.0
  %98 = vmatpush1.msra.mxu0 0.0
  %99 = vmatprep.subr.mxu0 0.0
  %100 = vmatpush1.msra.mxu0 0.0
  %101 = vmatprep.subr.mxu0 0.0
  %102 = vmatpush1.msra.mxu0 0.0
  %103 = vmatprep.subr.mxu0 0.0
  %104 = vmatpush1.msra.mxu0 0.0
  %105 = vmatprep.subr.mxu0 0.0
  %106 = vmatpush1.msra.mxu0 0.0
  %107 = vmatprep.subr.mxu0 0.0
  %108 = vmatpush1.msra.mxu0 0.0
  %109 = vmatprep.subr.mxu0 0.0
  %110 = vmatpush1.msra.mxu0 0.0
  %111 = vmatprep.subr.mxu0 0.0
  %112 = vmatpush1.msra.mxu0 0.0
  %113 = vmatprep.subr.mxu0 0.0
  %114 = vmatpush1.msra.mxu0 0.0
  %115 = vmatprep.subr.mxu0 0.0
  %116 = vmatpush1.msra.mxu0 0.0
  %117 = vmatprep.subr.mxu0 0.0
  %118 = vmatpush1.msra.mxu0 0.0
  %119 = vmatprep.subr.mxu0 0.0
  %120 = vmatpush1.msra.mxu0 0.0
  %121 = vmatprep.subr.mxu0 0.0
  %122 = vmatpush1.msra.mxu0 %v77
  %123 = vmatprep.subr.mxu0 0.0
  %124 = vmatpush2.msra.mxu0 0.0
  %125 = vmatprep.subr.mxu0 0.0
  %126 = vmatpush2.msra.mxu0 0.0
  %127 = vmatprep.subr.mxu0 0.0
  %128 = vmatpush2.msra.mxu0 0.0
  %129 = vmatprep.subr.mxu0 0.0
  %130 = vmatpush2.msra.mxu0 0.0
  %131 = vmatprep.subr.mxu0 0.0
  %132 = vmatpush2.msra.mxu0 0.0
  %133 = vmatprep.subr.mxu0 0.0
  %134 = vmatpush2.msra.mxu0 0.0
  %135 = vmatprep.subr.mxu0 0.0
  %136 = vmatpush2.msra.mxu0 0.0
  %137 = vmatprep.subr.mxu0 0.0
  %138 = vmatpush2.msra.mxu0 0.0
  %139 = vmatprep.subr.mxu0 0.0
  %140 = vmatpush2.msra.mxu0 0.0
  %141 = vmatprep.subr.mxu0 0.0
  %142 = vmatpush2.msra.mxu0 0.0
  %143 = vmatprep.subr.mxu0 0.0
  %144 = vmatpush2.msra.mxu0 0.0
  %145 = vmatprep.subr.mxu0 0.0
  %146 = vmatpush2.msra.mxu0 0.0
  %147 = vmatprep.subr.mxu0 0.0
  %148 = vmatpush2.msra.mxu0 0.0
  %149 = vmatprep.subr.mxu0 0.0
  %150 = vmatpush2.msra.mxu0 0.0
  %151 = vmatprep.subr.mxu0 0.0
  %152 = vmatpush2.msra.mxu0 0.0
  %153 = vmatprep.subr.mxu0 0.0
  %154 = vmatpush2.msra.mxu0 0.0
  %155 = vmatprep.mubr.f32.mxu0 0.0
  %156 = vmatmul.mubr.f32.gmra.mxu0 %v80
  %v157 = vpop.f32.mrf.mxu0
  %v158 = vadd.f32 0.0, %v157
  %v159 = vpop.f32.mrf.mxu0
  %160 = vmatprep.mubr.f32.mxu0 0.0
  %161 = vmatmul.mubr.f32.gmra.mxu0 %v83
  %v162 = vpop.f32.mrf.mxu0
  %v163 = vadd.f32 0.0, %v162
  %v164 = vpop.f32.mrf.mxu0
  %165 = vmatprep.mubr.f32.mxu0 0.0
  %166 = vmatmul.mubr.f32.gmra.mxu0 %v86
  %v167 = vpop.f32.mrf.mxu0
  %v168 = vadd.f32 0.0, %v167
  %v169 = vpop.f32.mrf.mxu0
  %170 = vmatprep.mubr.f32.mxu0 0.0
  %171 = vmatmul.mubr.f32.gmra.mxu0 %v89
  %v172 = vpop.f32.mrf.mxu0
  %v173 = vadd.f32 0.0, %v172
  %v174 = vpop.f32.mrf.mxu0
  %175 = vdwg.mxu0
  %vm176 = vcmask 23552
  %v178 = vsel %vm176, %v72, 0
  %v181 = vsel %vm176, %v73, 0
  %v184 = vsel %vm176, %v74, 0
  %v187 = vsel %vm176, %v75, 0
  %vm189 = vcmask 1042432
  %v191 = vsel %vm189, %v76, 0
  %193 = vmatprep.subr.mxu0 0.0
  %194 = vmatpush1.msra.mxu0 0.0
  %195 = vmatprep.subr.mxu0 0.0
  %196 = vmatpush1.msra.mxu0 0.0
  %197 = vmatprep.subr.mxu0 0.0
  %198 = vmatpush1.msra.mxu0 0.0
  %199 = vmatprep.subr.mxu0 0.0
  %200 = vmatpush1.msra.mxu0 0.0
  %201 = vmatprep.subr.mxu0 0.0
  %202 = vmatpush1.msra.mxu0 0.0
  %203 = vmatprep.subr.mxu0 0.0
  %204 = vmatpush1.msra.mxu0 0.0
  %205 = vmatprep.subr.mxu0 0.0
  %206 = vmatpush1.msra.mxu0 0.0
  %207 = vmatprep.subr.mxu0 0.0
  %208 = vmatpush1.msra.mxu0 0.0
  %209 = vmatprep.subr.mxu0 0.0
  %210 = vmatpush1.msra.mxu0 0.0
  %211 = vmatprep.subr.mxu0 0.0
  %212 = vmatpush1.msra.mxu0 0.0
  %213 = vmatprep.subr.mxu0 0.0
  %214 = vmatpush1.msra.mxu0 0.0
  %215 = vmatprep.subr.mxu0 0.0
  %216 = vmatpush1.msra.mxu0 0.0
  %217 = vmatprep.subr.mxu0 0.0
  %218 = vmatpush1.msra.mxu0 0.0
  %219 = vmatprep.subr.mxu0 0.0
  %220 = vmatpush1.msra.mxu0 0.0
  %221 = vmatprep.subr.mxu0 0.0
  %222 = vmatpush1.msra.mxu0 0.0
  %223 = vmatprep.subr.mxu0 0.0
  %224 = vmatpush1.msra.mxu0 %v191
  %225 = vmatprep.subr.mxu0 0.0
  %226 = vmatpush2.msra.mxu0 0.0
  %227 = vmatprep.subr.mxu0 0.0
  %228 = vmatpush2.msra.mxu0 0.0
  %229 = vmatprep.subr.mxu0 0.0
  %230 = vmatpush2.msra.mxu0 0.0
  %231 = vmatprep.subr.mxu0 0.0
  %232 = vmatpush2.msra.mxu0 0.0
  %233 = vmatprep.subr.mxu0 0.0
  %234 = vmatpush2.msra.mxu0 0.0
  %235 = vmatprep.subr.mxu0 0.0
  %236 = vmatpush2.msra.mxu0 0.0
  %237 = vmatprep.subr.mxu0 0.0
  %238 = vmatpush2.msra.mxu0 0.0
  %239 = vmatprep.subr.mxu0 0.0
  %240 = vmatpush2.msra.mxu0 0.0
  %241 = vmatprep.subr.mxu0 0.0
  %242 = vmatpush2.msra.mxu0 0.0
  %243 = vmatprep.subr.mxu0 0.0
  %244 = vmatpush2.msra.mxu0 0.0
  %245 = vmatprep.subr.mxu0 0.0
  %246 = vmatpush2.msra.mxu0 0.0
  %247 = vmatprep.subr.mxu0 0.0
  %248 = vmatpush2.msra.mxu0 0.0
  %249 = vmatprep.subr.mxu0 0.0
  %250 = vmatpush2.msra.mxu0 0.0
  %251 = vmatprep.subr.mxu0 0.0
  %252 = vmatpush2.msra.mxu0 0.0
  %253 = vmatprep.subr.mxu0 0.0
  %254 = vmatpush2.msra.mxu0 0.0
  %255 = vmatprep.subr.mxu0 0.0
  %256 = vmatpush2.msra.mxu0 0.0
  %257 = vmatprep.mubr.f32.mxu0 0.0
  %258 = vmatmul.mubr.f32.gmra.mxu0 %v178
  %v259 = vpop.f32.mrf.mxu0
  %v260 = vadd.f32 %v158, %v259
  %v261 = vpop.f32.mrf.mxu0
  %262 = vmatprep.mubr.f32.mxu0 0.0
  %263 = vmatmul.mubr.f32.gmra.mxu0 %v181
  %v264 = vpop.f32.mrf.mxu0
  %v265 = vadd.f32 %v163, %v264
  %v266 = vpop.f32.mrf.mxu0
  %267 = vmatprep.mubr.f32.mxu0 0.0
  %268 = vmatmul.mubr.f32.gmra.mxu0 %v184
  %v269 = vpop.f32.mrf.mxu0
  %v270 = vadd.f32 %v168, %v269
  %v271 = vpop.f32.mrf.mxu0
  %272 = vmatprep.mubr.f32.mxu0 0.0
  %273 = vmatmul.mubr.f32.gmra.mxu0 %v187
  %v274 = vpop.f32.mrf.mxu0
  %v275 = vadd.f32 %v173, %v274
  %v276 = vpop.f32.mrf.mxu0
  %277 = vdwg.mxu0
  %v278 = vld [vmem:[%s6] sm:$0x1]
  %v280 = vlaneseq
  %v281 = vshrl.u32 %v280, 7
  %v282 = vsub.s32 0, %v281
  %v283 = vrot.slane %v278, %v282
  %v285 = vadd.f32 %v260, %v283
  %v286 = vadd.f32 %v265, %v283
  %v287 = vadd.f32 %v270, %v283
  %v288 = vadd.f32 %v275, %v283
  %v289 = vxor.u32 %v285, 2147483648
  %v290 = vxor.u32 %v286, 2147483648
  %v291 = vxor.u32 %v287, 2147483648
  %v292 = vxor.u32 %v288, 2147483648
  %v293 = vmul.f32 %v289, 1.442695
  %v294 = vpow.pop %v293
  %v295 = vmul.f32 %v290, 1.442695
  %v296 = vpow.pop %v295
  %v297 = vmul.f32 %v291, 1.442695
  %v298 = vpow.pop %v297
  %v299 = vmul.f32 %v292, 1.442695
  %v300 = vpow.pop %v299
  %v301 = vadd.f32 %v294, 1.0
  %v302 = vadd.f32 %v296, 1.0
  %v303 = vadd.f32 %v298, 1.0
  %v304 = vadd.f32 %v300, 1.0
  %v305 = vrcp.pop %v301
  %v306 = vmul.f32 1.0, %v305
  %v307 = vrcp.pop %v302
  %v308 = vmul.f32 1.0, %v307
  %v309 = vrcp.pop %v303
  %v310 = vmul.f32 1.0, %v309
  %v311 = vrcp.pop %v304
  %v312 = vmul.f32 1.0, %v311
  %317 = vrot.lane.b32.xlu0 %v306, 96
  %v318 = vpop.permute.xlu0 %317
  %319 = vrot.lane.b32.xlu0 %v308, 96
  %v320 = vpop.permute.xlu0 %319
  %321 = vrot.lane.b32.xlu0 %v310, 96
  %v322 = vpop.permute.xlu0 %321
  %323 = vrot.lane.b32.xlu0 %v312, 96
  %v324 = vpop.permute.xlu0 %323
  %v329 = vmul.f32 %v285, %v318
  %v330 = vmul.f32 %v286, %v320
  %v331 = vmul.f32 %v287, %v322
  %v332 = vmul.f32 %v288, %v324
  %vm333 = vcmask 261120
  %334 = vst.msk [vmem:[%s7] sm:$0xff] %vm333, %v329
  %335 = vst.msk [vmem:[%s7 + $0x8] sm:$0xff] %vm333, %v330
  %336 = vst.msk [vmem:[%s7 + $0x10] sm:$0xff] %vm333, %v331
  %337 = vst.msk [vmem:[%s7 + $0x18] sm:$0xff] %vm333, %v332
  // Predicated region
  $region30: #{glue_edge_dgcnn_forward.6} parent=0 // pred_check
    _
  $region31: #{glue_edge_dgcnn_forward.6} parent=0 // pred_check_branch
    %339 = sbr.rel (0) target = $region33
  $region32: #{glue_edge_dgcnn_forward.6} parent=0 // pred_region
    _
  $region33: #{glue_edge_dgcnn_forward.6} parent=0 // pred_fallthru
    _
  // Predicated region
  $region34: #{glue_edge_dgcnn_forward.6} parent=0 // pred_check
    _
  $region35: #{glue_edge_dgcnn_forward.6} parent=0 // pred_check_branch
    %341 = sbr.rel (0) target = $region37
  $region36: #{glue_edge_dgcnn_forward.6} parent=0 // pred_region
    _
  $region37: #{glue_edge_dgcnn_forward.6} parent=0 // pred_fallthru
    _

// kernel: glue_edge_dgcnn_forward.8
$region0: #{glue_edge_dgcnn_forward.8}
  #allocation0 [shape = 'u32[]', space=smem, size = 0x4, offset = 0x4, fixed_abs, tag = 'smem constant byte address 0x4 - core index']
  #allocation1 [shape = 'u32[144,128]{1,0:T(1,128)}', space=vmem, size = 0x12000, scoped, tag = 'internal scratch']
  %s0 = inlined_call_operand.vmem [shape: f32[32,32], index: 0, kind: input, shape index: {}]
  %s1 = inlined_call_operand.vmem [shape: bf16[5,32,32], index: 1, kind: input, shape index: {}]
  %s2 = inlined_call_operand.vmem [shape: f32[5,32,1], index: 2, kind: input, shape index: {}]
  %s3 = inlined_call_operand.vmem [shape: bf16[32,64], index: 3, kind: input, shape index: {}]
  %s4 = inlined_call_operand.vmem [shape: bf16[32,64], index: 4, kind: input, shape index: {}]
  %s5 = inlined_call_operand.vmem [shape: f32[1,64], index: 5, kind: input, shape index: {}]
  %s6 = inlined_call_operand.vmem [shape: f32[1,64], index: 6, kind: input, shape index: {}]
  %s7 = inlined_call_operand.vmem [shape: bf16[32,32], index: 7, kind: input, shape index: {}]
  %s8 = inlined_call_operand.vmem [shape: f32[1,32], index: 8, kind: input, shape index: {}]
  %s9 = inlined_call_operand.vmem [shape: f32[32,32], index: 9, kind: output, shape index: {}]
  %s10 = sld [smem:[#allocation0]]
  $region46: #{glue_edge_dgcnn_forward.8} parent=0
    _
  %s12 = ssub.s32 1, %s10
  %s13 = scalar_select 0, %s12, %s10
  // Predicated region
  $region2: #{glue_edge_dgcnn_forward.8} parent=0 // pred_check
    _
  $region3: #{glue_edge_dgcnn_forward.8} parent=0 // pred_check_branch
    %15 = sbr.rel (0) target = $region5
  $region4: #{glue_edge_dgcnn_forward.8} parent=0 // pred_region
    _
  $region5: #{glue_edge_dgcnn_forward.8} parent=0 // pred_fallthru
    _
  // Predicated region
  $region6: #{glue_edge_dgcnn_forward.8} parent=0 // pred_check
    _
  $region7: #{glue_edge_dgcnn_forward.8} parent=0 // pred_check_branch
    %17 = sbr.rel (0) target = $region9
  $region8: #{glue_edge_dgcnn_forward.8} parent=0 // pred_region
    _
  $region9: #{glue_edge_dgcnn_forward.8} parent=0 // pred_fallthru
    _
  // Predicated region
  $region10: #{glue_edge_dgcnn_forward.8} parent=0 // pred_check
    _
  $region11: #{glue_edge_dgcnn_forward.8} parent=0 // pred_check_branch
    %19 = sbr.rel (0) target = $region13
  $region12: #{glue_edge_dgcnn_forward.8} parent=0 // pred_region
    _
  $region13: #{glue_edge_dgcnn_forward.8} parent=0 // pred_fallthru
    _
  // Predicated region
  $region14: #{glue_edge_dgcnn_forward.8} parent=0 // pred_check
    _
  $region15: #{glue_edge_dgcnn_forward.8} parent=0 // pred_check_branch
    %21 = sbr.rel (0) target = $region17
  $region16: #{glue_edge_dgcnn_forward.8} parent=0 // pred_region
    _
  $region17: #{glue_edge_dgcnn_forward.8} parent=0 // pred_fallthru
    _
  // Predicated region
  $region18: #{glue_edge_dgcnn_forward.8} parent=0 // pred_check
    _
  $region19: #{glue_edge_dgcnn_forward.8} parent=0 // pred_check_branch
    %23 = sbr.rel (0) target = $region21
  $region20: #{glue_edge_dgcnn_forward.8} parent=0 // pred_region
    _
  $region21: #{glue_edge_dgcnn_forward.8} parent=0 // pred_fallthru
    _
  // Predicated region
  $region22: #{glue_edge_dgcnn_forward.8} parent=0 // pred_check
    _
  $region23: #{glue_edge_dgcnn_forward.8} parent=0 // pred_check_branch
    %25 = sbr.rel (0) target = $region25
  $region24: #{glue_edge_dgcnn_forward.8} parent=0 // pred_region
    _
  $region25: #{glue_edge_dgcnn_forward.8} parent=0 // pred_fallthru
    _
  // Predicated region
  $region26: #{glue_edge_dgcnn_forward.8} parent=0 // pred_check
    _
  $region27: #{glue_edge_dgcnn_forward.8} parent=0 // pred_check_branch
    %27 = sbr.rel (0) target = $region29
  $region28: #{glue_edge_dgcnn_forward.8} parent=0 // pred_region
    _
  $region29: #{glue_edge_dgcnn_forward.8} parent=0 // pred_fallthru
    _
  // Predicated region
  $region30: #{glue_edge_dgcnn_forward.8} parent=0 // pred_check
    _
  $region31: #{glue_edge_dgcnn_forward.8} parent=0 // pred_check_branch
    %29 = sbr.rel (0) target = $region33
  $region32: #{glue_edge_dgcnn_forward.8} parent=0 // pred_region
    _
  $region33: #{glue_edge_dgcnn_forward.8} parent=0 // pred_fallthru
    _
  // Predicated region
  $region34: #{glue_edge_dgcnn_forward.8} parent=0 // pred_check
    _
  $region35: #{glue_edge_dgcnn_forward.8} parent=0 // pred_check_branch
    %31 = sbr.rel (0) target = $region37
  $region36: #{glue_edge_dgcnn_forward.8} parent=0 // pred_region
    _
  $region37: #{glue_edge_dgcnn_forward.8} parent=0 // pred_fallthru
    _
  %v33 = vld [vmem:[%s0] sm:$0xff]
  %v34 = vld [vmem:[%s0 + $0x8] sm:$0xff]
  %v35 = vld [vmem:[%s0 + $0x10] sm:$0xff]
  %v36 = vld [vmem:[%s0 + $0x18] sm:$0xff]
  %v37 = vpack.c.bf16 %v34, %v33
  %v38 = vpack.c.bf16 %v36, %v35
  %v39 = vld [vmem:[%s3] sm:$0xf]
  %v40 = vld [vmem:[%s3 + $0x4] sm:$0xf]
  %v41 = vld [vmem:[%s3 + $0x8] sm:$0xf]
  %v42 = vld [vmem:[%s3 + $0xc] sm:$0xf]
  %v43 = vld [vmem:[%s6] sm:$0x1]
  %v45 = vlaneseq
  %v46 = vshrl.u32 %v45, 7
  %v47 = vsub.s32 0, %v46
  %v48 = vrot.slane %v43, %v47
  %v54 = vunpack.c.l.b16 %v39
  %v55 = vunpack.c.l.b16 %v40
  %v56 = vunpack.c.l.b16 %v41
  %v57 = vunpack.c.l.b16 %v42
  %v58 = vpack.c.b16 %v55, %v54
  %v59 = vpack.c.b16 %v57, %v56
  %vm62 = vcmask 261120
  %v64 = vsel %vm62, %v37, 0
  %v67 = vsel %vm62, %v38, 0
  %69 = vmatprep.subr.bf16.mxu0 0
  %70 = vmatpush1.bf16.msra.mxu0 0
  %71 = vmatprep.subr.bf16.mxu0 0
  %72 = vmatpush1.bf16.msra.mxu0 0
  %73 = vmatprep.subr.bf16.mxu0 0
  %74 = vmatpush1.bf16.msra.mxu0 0
  %75 = vmatprep.subr.bf16.mxu0 0
  %76 = vmatpush1.bf16.msra.mxu0 0
  %77 = vmatprep.subr.bf16.mxu0 0
  %78 = vmatpush1.bf16.msra.mxu0 0
  %79 = vmatprep.subr.bf16.mxu0 0
  %80 = vmatpush1.bf16.msra.mxu0 0
  %81 = vmatprep.subr.bf16.mxu0 0
  %82 = vmatpush1.bf16.msra.mxu0 %v59
  %83 = vmatprep.subr.bf16.mxu0 0
  %84 = vmatpush1.bf16.msra.mxu0 %v58
  %85 = vmatprep.subr.bf16.mxu0 0
  %86 = vmatpush2.bf16.msra.mxu0 0
  %87 = vmatprep.subr.bf16.mxu0 0
  %88 = vmatpush2.bf16.msra.mxu0 0
  %89 = vmatprep.subr.bf16.mxu0 0
  %90 = vmatpush2.bf16.msra.mxu0 0
  %91 = vmatprep.subr.bf16.mxu0 0
  %92 = vmatpush2.bf16.msra.mxu0 0
  %93 = vmatprep.subr.bf16.mxu0 0
  %94 = vmatpush2.bf16.msra.mxu0 0
  %95 = vmatprep.subr.bf16.mxu0 0
  %96 = vmatpush2.bf16.msra.mxu0 0
  %97 = vmatprep.subr.bf16.mxu0 0
  %98 = vmatpush2.bf16.msra.mxu0 0
  %99 = vmatprep.subr.bf16.mxu0 0
  %100 = vmatpush2.bf16.msra.mxu0 0
  %101 = vmatprep.mubr.bf16.mxu0 0
  %102 = vmatmul.mubr.bf16.gmra.mxu0 %v64
  %v103 = vpop.f32.mrf.mxu0
  %v104 = vadd.f32 %v48, %v103
  %v105 = vpop.f32.mrf.mxu0
  %v106 = vpop.f32.mrf.mxu0
  %v107 = vadd.f32 %v48, %v106
  %v108 = vpop.f32.mrf.mxu0
  %109 = vmatprep.mubr.bf16.mxu0 0
  %110 = vmatmul.mubr.bf16.gmra.mxu0 %v67
  %v111 = vpop.f32.mrf.mxu0
  %v112 = vadd.f32 %v48, %v111
  %v113 = vpop.f32.mrf.mxu0
  %v114 = vpop.f32.mrf.mxu0
  %v115 = vadd.f32 %v48, %v114
  %v116 = vpop.f32.mrf.mxu0
  %117 = vdwg.mxu0
  %v118 = vld [vmem:[%s1] sm:$0xf]
  %v119 = vld [vmem:[%s1 + $0x4] sm:$0xf]
  %v120 = vld [vmem:[%s1 + $0x8] sm:$0xf]
  %v121 = vld [vmem:[%s1 + $0xc] sm:$0xf]
  %v122 = vld [vmem:[%s1 + $0x10] sm:$0xf]
  %v123 = vld [vmem:[%s1 + $0x14] sm:$0xf]
  %v124 = vld [vmem:[%s1 + $0x18] sm:$0xf]
  %v125 = vld [vmem:[%s1 + $0x1c] sm:$0xf]
  %v126 = vld [vmem:[%s1 + $0x20] sm:$0xf]
  %v127 = vld [vmem:[%s1 + $0x24] sm:$0xf]
  %v128 = vld [vmem:[%s1 + $0x28] sm:$0xf]
  %v129 = vld [vmem:[%s1 + $0x2c] sm:$0xf]
  %v130 = vld [vmem:[%s1 + $0x30] sm:$0xf]
  %v131 = vld [vmem:[%s1 + $0x34] sm:$0xf]
  %v132 = vld [vmem:[%s1 + $0x38] sm:$0xf]
  %v133 = vld [vmem:[%s1 + $0x3c] sm:$0xf]
  %v134 = vld [vmem:[%s1 + $0x40] sm:$0xf]
  %v135 = vld [vmem:[%s1 + $0x44] sm:$0xf]
  %v136 = vld [vmem:[%s1 + $0x48] sm:$0xf]
  %v137 = vld [vmem:[%s1 + $0x4c] sm:$0xf]
  %v138 = vld [vmem:[%s4] sm:$0xf]
  %v139 = vld [vmem:[%s4 + $0x4] sm:$0xf]
  %v140 = vld [vmem:[%s4 + $0x8] sm:$0xf]
  %v141 = vld [vmem:[%s4 + $0xc] sm:$0xf]
  %v142 = vld [vmem:[%s2] sm:$0xff]
  %v143 = vld [vmem:[%s2 + $0x8] sm:$0xff]
  %v144 = vld [vmem:[%s2 + $0x10] sm:$0xff]
  %v145 = vld [vmem:[%s2 + $0x18] sm:$0xff]
  %v146 = vld [vmem:[%s2 + $0x20] sm:$0xff]
  %v147 = vld [vmem:[%s2 + $0x28] sm:$0xff]
  %v148 = vld [vmem:[%s2 + $0x30] sm:$0xff]
  %v149 = vld [vmem:[%s2 + $0x38] sm:$0xff]
  %v150 = vld [vmem:[%s2 + $0x40] sm:$0xff]
  %v151 = vld [vmem:[%s2 + $0x48] sm:$0xff]
  %v152 = vld [vmem:[%s2 + $0x50] sm:$0xff]
  %v153 = vld [vmem:[%s2 + $0x58] sm:$0xff]
  %v154 = vld [vmem:[%s2 + $0x60] sm:$0xff]
  %v155 = vld [vmem:[%s2 + $0x68] sm:$0xff]
  %v156 = vld [vmem:[%s2 + $0x70] sm:$0xff]
  %v157 = vld [vmem:[%s2 + $0x78] sm:$0xff]
  %v158 = vld [vmem:[%s2 + $0x80] sm:$0xff]
  %v159 = vld [vmem:[%s2 + $0x88] sm:$0xff]
  %v160 = vld [vmem:[%s2 + $0x90] sm:$0xff]
  %v161 = vld [vmem:[%s2 + $0x98] sm:$0xff]
  %v162 = vld [vmem:[%s5] sm:$0x1]
  %164 = vset.pattern.permute.xlu0 0
  %165 = vperm.xlu0 %164, %v142
  %v166 = vpop.permute.xlu0 %165
  %169 = vset.pattern.permute.xlu0 0
  %170 = vperm.xlu0 %169, %v143
  %v171 = vpop.permute.xlu0 %170
  %174 = vset.pattern.permute.xlu0 0
  %175 = vperm.xlu0 %174, %v144
  %v176 = vpop.permute.xlu0 %175
  %179 = vset.pattern.permute.xlu0 0
  %180 = vperm.xlu0 %179, %v145
  %v181 = vpop.permute.xlu0 %180
  %184 = vset.pattern.permute.xlu0 0
  %185 = vperm.xlu0 %184, %v146
  %v186 = vpop.permute.xlu0 %185
  %189 = vset.pattern.permute.xlu0 0
  %190 = vperm.xlu0 %189, %v147
  %v191 = vpop.permute.xlu0 %190
  %194 = vset.pattern.permute.xlu0 0
  %195 = vperm.xlu0 %194, %v148
  %v196 = vpop.permute.xlu0 %195
  %199 = vset.pattern.permute.xlu0 0
  %200 = vperm.xlu0 %199, %v149
  %v201 = vpop.permute.xlu0 %200
  %204 = vset.pattern.permute.xlu0 0
  %205 = vperm.xlu0 %204, %v150
  %v206 = vpop.permute.xlu0 %205
  %209 = vset.pattern.permute.xlu0 0
  %210 = vperm.xlu0 %209, %v151
  %v211 = vpop.permute.xlu0 %210
  %214 = vset.pattern.permute.xlu0 0
  %215 = vperm.xlu0 %214, %v152
  %v216 = vpop.permute.xlu0 %215
  %219 = vset.pattern.permute.xlu0 0
  %220 = vperm.xlu0 %219, %v153
  %v221 = vpop.permute.xlu0 %220
  %224 = vset.pattern.permute.xlu0 0
  %225 = vperm.xlu0 %224, %v154
  %v226 = vpop.permute.xlu0 %225
  %229 = vset.pattern.permute.xlu0 0
  %230 = vperm.xlu0 %229, %v155
  %v231 = vpop.permute.xlu0 %230
  %234 = vset.pattern.permute.xlu0 0
  %235 = vperm.xlu0 %234, %v156
  %v236 = vpop.permute.xlu0 %235
  %239 = vset.pattern.permute.xlu0 0
  %240 = vperm.xlu0 %239, %v157
  %v241 = vpop.permute.xlu0 %240
  %244 = vset.pattern.permute.xlu0 0
  %245 = vperm.xlu0 %244, %v158
  %v246 = vpop.permute.xlu0 %245
  %249 = vset.pattern.permute.xlu0 0
  %250 = vperm.xlu0 %249, %v159
  %v251 = vpop.permute.xlu0 %250
  %254 = vset.pattern.permute.xlu0 0
  %255 = vperm.xlu0 %254, %v160
  %v256 = vpop.permute.xlu0 %255
  %259 = vset.pattern.permute.xlu0 0
  %260 = vperm.xlu0 %259, %v161
  %v261 = vpop.permute.xlu0 %260
  %v264 = vlaneseq
  %v265 = vshrl.u32 %v264, 7
  %v266 = vsub.s32 0, %v265
  %v267 = vrot.slane %v162, %v266
  %v269 = vmul.f32 %v166, %v267
  %v270 = vmul.f32 %v171, %v267
  %v271 = vmul.f32 %v176, %v267
  %v272 = vmul.f32 %v181, %v267
  %v273 = vmul.f32 %v186, %v267
  %v274 = vmul.f32 %v191, %v267
  %v275 = vmul.f32 %v196, %v267
  %v276 = vmul.f32 %v201, %v267
  %v277 = vmul.f32 %v206, %v267
  %v278 = vmul.f32 %v211, %v267
  %v279 = vmul.f32 %v216, %v267
  %v280 = vmul.f32 %v221, %v267
  %v281 = vmul.f32 %v226, %v267
  %v282 = vmul.f32 %v231, %v267
  %v283 = vmul.f32 %v236, %v267
  %v284 = vmul.f32 %v241, %v267
  %v285 = vmul.f32 %v246, %v267
  %v286 = vmul.f32 %v251, %v267
  %v287 = vmul.f32 %v256, %v267
  %v288 = vmul.f32 %v261, %v267
  %v309 = vunpack.c.l.b16 %v118
  %v310 = vunpack.c.l.b16 %v119
  %v311 = vunpack.c.l.b16 %v120
  %v312 = vunpack.c.l.b16 %v121
  %v313 = vunpack.c.l.b16 %v122
  %v314 = vunpack.c.l.b16 %v123
  %v315 = vunpack.c.l.b16 %v124
  %v316 = vunpack.c.l.b16 %v125
  %v317 = vunpack.c.l.b16 %v126
  %v318 = vunpack.c.l.b16 %v127
  %v319 = vunpack.c.l.b16 %v128
  %v320 = vunpack.c.l.b16 %v129
  %v321 = vunpack.c.l.b16 %v130
  %v322 = vunpack.c.l.b16 %v131
  %v323 = vunpack.c.l.b16 %v132
  %v324 = vunpack.c.l.b16 %v133
  %v325 = vunpack.c.l.b16 %v134
  %v326 = vunpack.c.l.b16 %v135
  %v327 = vunpack.c.l.b16 %v136
  %v328 = vunpack.c.l.b16 %v137
  %v329 = vpack.c.b16 %v310, %v309
  %v330 = vpack.c.b16 %v312, %v311
  %v331 = vpack.c.b16 %v314, %v313
  %v332 = vpack.c.b16 %v316, %v315
  %v333 = vpack.c.b16 %v318, %v317
  %v334 = vpack.c.b16 %v320, %v319
  %v335 = vpack.c.b16 %v322, %v321
  %v336 = vpack.c.b16 %v324, %v323
  %v337 = vpack.c.b16 %v326, %v325
  %v338 = vpack.c.b16 %v328, %v327
  %v343 = vunpack.c.l.b16 %v138
  %v344 = vunpack.c.l.b16 %v139
  %v345 = vunpack.c.l.b16 %v140
  %v346 = vunpack.c.l.b16 %v141
  %v347 = vpack.c.b16 %v344, %v343
  %v348 = vpack.c.b16 %v346, %v345
  %v352 = vsel %vm62, %v329, 0
  %v355 = vsel %vm62, %v330, 0
  %v358 = vsel %vm62, %v331, 0
  %v361 = vsel %vm62, %v332, 0
  %v364 = vsel %vm62, %v333, 0
  %v367 = vsel %vm62, %v334, 0
  %v370 = vsel %vm62, %v335, 0
  %v373 = vsel %vm62, %v336, 0
  %v376 = vsel %vm62, %v337, 0
  %v379 = vsel %vm62, %v338, 0
  %381 = vmatprep.subr.bf16.mxu0 0
  %382 = vmatpush1.bf16.msra.mxu0 0
  %383 = vmatprep.subr.bf16.mxu0 0
  %384 = vmatpush1.bf16.msra.mxu0 0
  %385 = vmatprep.subr.bf16.mxu0 0
  %386 = vmatpush1.bf16.msra.mxu0 0
  %387 = vmatprep.subr.bf16.mxu0 0
  %388 = vmatpush1.bf16.msra.mxu0 0
  %389 = vmatprep.subr.bf16.mxu0 0
  %390 = vmatpush1.bf16.msra.mxu0 0
  %391 = vmatprep.subr.bf16.mxu0 0
  %392 = vmatpush1.bf16.msra.mxu0 0
  %393 = vmatprep.subr.bf16.mxu0 0
  %394 = vmatpush1.bf16.msra.mxu0 %v348
  %395 = vmatprep.subr.bf16.mxu0 0
  %396 = vmatpush1.bf16.msra.mxu0 %v347
  %397 = vmatprep.subr.bf16.mxu0 0
  %398 = vmatpush2.bf16.msra.mxu0 0
  %399 = vmatprep.subr.bf16.mxu0 0
  %400 = vmatpush2.bf16.msra.mxu0 0
  %401 = vmatprep.subr.bf16.mxu0 0
  %402 = vmatpush2.bf16.msra.mxu0 0
  %403 = vmatprep.subr.bf16.mxu0 0
  %404 = vmatpush2.bf16.msra.mxu0 0
  %405 = vmatprep.subr.bf16.mxu0 0
  %406 = vmatpush2.bf16.msra.mxu0 0
  %407 = vmatprep.subr.bf16.mxu0 0
  %408 = vmatpush2.bf16.msra.mxu0 0
  %409 = vmatprep.subr.bf16.mxu0 0
  %410 = vmatpush2.bf16.msra.mxu0 0
  %411 = vmatprep.subr.bf16.mxu0 0
  %412 = vmatpush2.bf16.msra.mxu0 0
  %413 = vmatprep.mubr.bf16.mxu0 0
  %414 = vmatmul.mubr.bf16.gmra.mxu0 %v352
  %v415 = vpop.f32.mrf.mxu0
  %v416 = vadd.f32 %v269, %v415
  %v417 = vpop.f32.mrf.mxu0
  %v418 = vpop.f32.mrf.mxu0
  %v419 = vadd.f32 %v270, %v418
  %v420 = vpop.f32.mrf.mxu0
  %421 = vmatprep.mubr.bf16.mxu0 0
  %422 = vmatmul.mubr.bf16.gmra.mxu0 %v355
  %v423 = vpop.f32.mrf.mxu0
  %v424 = vadd.f32 %v271, %v423
  %v425 = vpop.f32.mrf.mxu0
  %v426 = vpop.f32.mrf.mxu0
  %v427 = vadd.f32 %v272, %v426
  %v428 = vpop.f32.mrf.mxu0
  %429 = vmatprep.mubr.bf16.mxu0 0
  %430 = vmatmul.mubr.bf16.gmra.mxu0 %v358
  %v431 = vpop.f32.mrf.mxu0
  %v432 = vadd.f32 %v273, %v431
  %v433 = vpop.f32.mrf.mxu0
  %v434 = vpop.f32.mrf.mxu0
  %v435 = vadd.f32 %v274, %v434
  %v436 = vpop.f32.mrf.mxu0
  %437 = vmatprep.mubr.bf16.mxu0 0
  %438 = vmatmul.mubr.bf16.gmra.mxu0 %v361
  %v439 = vpop.f32.mrf.mxu0
  %v440 = vadd.f32 %v275, %v439
  %v441 = vpop.f32.mrf.mxu0
  %v442 = vpop.f32.mrf.mxu0
  %v443 = vadd.f32 %v276, %v442
  %v444 = vpop.f32.mrf.mxu0
  %445 = vmatprep.mubr.bf16.mxu0 0
  %446 = vmatmul.mubr.bf16.gmra.mxu0 %v364
  %v447 = vpop.f32.mrf.mxu0
  %v448 = vadd.f32 %v277, %v447
  %v449 = vpop.f32.mrf.mxu0
  %v450 = vpop.f32.mrf.mxu0
  %v451 = vadd.f32 %v278, %v450
  %v452 = vpop.f32.mrf.mxu0
  %453 = vmatprep.mubr.bf16.mxu0 0
  %454 = vmatmul.mubr.bf16.gmra.mxu0 %v367
  %v455 = vpop.f32.mrf.mxu0
  %v456 = vadd.f32 %v279, %v455
  %v457 = vpop.f32.mrf.mxu0
  %v458 = vpop.f32.mrf.mxu0
  %v459 = vadd.f32 %v280, %v458
  %v460 = vpop.f32.mrf.mxu0
  %461 = vmatprep.mubr.bf16.mxu0 0
  %462 = vmatmul.mubr.bf16.gmra.mxu0 %v370
  %v463 = vpop.f32.mrf.mxu0
  %v464 = vadd.f32 %v281, %v463
  %v465 = vpop.f32.mrf.mxu0
  %v466 = vpop.f32.mrf.mxu0
  %v467 = vadd.f32 %v282, %v466
  %v468 = vpop.f32.mrf.mxu0
  %469 = vmatprep.mubr.bf16.mxu0 0
  %470 = vmatmul.mubr.bf16.gmra.mxu0 %v373
  %v471 = vpop.f32.mrf.mxu0
  %v472 = vadd.f32 %v283, %v471
  %v473 = vpop.f32.mrf.mxu0
  %v474 = vpop.f32.mrf.mxu0
  %v475 = vadd.f32 %v284, %v474
  %v476 = vpop.f32.mrf.mxu0
  %477 = vmatprep.mubr.bf16.mxu0 0
  %478 = vmatmul.mubr.bf16.gmra.mxu0 %v376
  %v479 = vpop.f32.mrf.mxu0
  %v480 = vadd.f32 %v285, %v479
  %v481 = vpop.f32.mrf.mxu0
  %v482 = vpop.f32.mrf.mxu0
  %v483 = vadd.f32 %v286, %v482
  %v484 = vpop.f32.mrf.mxu0
  %485 = vmatprep.mubr.bf16.mxu0 0
  %486 = vmatmul.mubr.bf16.gmra.mxu0 %v379
  %v487 = vpop.f32.mrf.mxu0
  %v488 = vadd.f32 %v287, %v487
  %v489 = vpop.f32.mrf.mxu0
  %v490 = vpop.f32.mrf.mxu0
  %v491 = vadd.f32 %v288, %v490
  %v492 = vpop.f32.mrf.mxu0
  %493 = vdwg.mxu0
  %v494 = vadd.f32 %v416, %v104
  %v495 = vadd.f32 %v419, %v107
  %v496 = vadd.f32 %v424, %v112
  %v497 = vadd.f32 %v427, %v115
  %v498 = vadd.f32 %v432, %v104
  %v499 = vadd.f32 %v435, %v107
  %v500 = vadd.f32 %v440, %v112
  %v501 = vadd.f32 %v443, %v115
  %v502 = vadd.f32 %v448, %v104
  %v503 = vadd.f32 %v451, %v107
  %v504 = vadd.f32 %v456, %v112
  %v505 = vadd.f32 %v459, %v115
  %v506 = vadd.f32 %v464, %v104
  %v507 = vadd.f32 %v467, %v107
  %v508 = vadd.f32 %v472, %v112
  %v509 = vadd.f32 %v475, %v115
  %v510 = vadd.f32 %v480, %v104
  %v511 = vadd.f32 %v483, %v107
  %v512 = vadd.f32 %v488, %v112
  %v513 = vadd.f32 %v491, %v115
  %v514 = vxor.u32 %v494, 2147483648
  %v515 = vxor.u32 %v495, 2147483648
  %v516 = vxor.u32 %v496, 2147483648
  %v517 = vxor.u32 %v497, 2147483648
  %v518 = vxor.u32 %v498, 2147483648
  %v519 = vxor.u32 %v499, 2147483648
  %v520 = vxor.u32 %v500, 2147483648
  %v521 = vxor.u32 %v501, 2147483648
  %v522 = vxor.u32 %v502, 2147483648
  %v523 = vxor.u32 %v503, 2147483648
  %v524 = vxor.u32 %v504, 2147483648
  %v525 = vxor.u32 %v505, 2147483648
  %v526 = vxor.u32 %v506, 2147483648
  %v527 = vxor.u32 %v507, 2147483648
  %v528 = vxor.u32 %v508, 2147483648
  %v529 = vxor.u32 %v509, 2147483648
  %v530 = vxor.u32 %v510, 2147483648
  %v531 = vxor.u32 %v511, 2147483648
  %v532 = vxor.u32 %v512, 2147483648
  %v533 = vxor.u32 %v513, 2147483648
  %v534 = vmul.f32 %v514, 1.442695
  %v535 = vpow.pop %v534
  %v536 = vmul.f32 %v515, 1.442695
  %v537 = vpow.pop %v536
  %v538 = vmul.f32 %v516, 1.442695
  %v539 = vpow.pop %v538
  %v540 = vmul.f32 %v517, 1.442695
  %v541 = vpow.pop %v540
  %v542 = vmul.f32 %v518, 1.442695
  %v543 = vpow.pop %v542
  %v544 = vmul.f32 %v519, 1.442695
  %v545 = vpow.pop %v544
  %v546 = vmul.f32 %v520, 1.442695
  %v547 = vpow.pop %v546
  %v548 = vmul.f32 %v521, 1.442695
  %v549 = vpow.pop %v548
  %v550 = vmul.f32 %v522, 1.442695
  %v551 = vpow.pop %v550
  %v552 = vmul.f32 %v523, 1.442695
  %v553 = vpow.pop %v552
  %v554 = vmul.f32 %v524, 1.442695
  %v555 = vpow.pop %v554
  %v556 = vmul.f32 %v525, 1.442695
  %v557 = vpow.pop %v556
  %v558 = vmul.f32 %v526, 1.442695
  %v559 = vpow.pop %v558
  %v560 = vmul.f32 %v527, 1.442695
  %v561 = vpow.pop %v560
  %v562 = vmul.f32 %v528, 1.442695
  %v563 = vpow.pop %v562
  %v564 = vmul.f32 %v529, 1.442695
  %v565 = vpow.pop %v564
  %v566 = vmul.f32 %v530, 1.442695
  %v567 = vpow.pop %v566
  %v568 = vmul.f32 %v531, 1.442695
  %v569 = vpow.pop %v568
  %v570 = vmul.f32 %v532, 1.442695
  %v571 = vpow.pop %v570
  %v572 = vmul.f32 %v533, 1.442695
  %v573 = vpow.pop %v572
  %v574 = vadd.f32 %v535, 1.0
  %v575 = vadd.f32 %v537, 1.0
  %v576 = vadd.f32 %v539, 1.0
  %v577 = vadd.f32 %v541, 1.0
  %v578 = vadd.f32 %v543, 1.0
  %v579 = vadd.f32 %v545, 1.0
  %v580 = vadd.f32 %v547, 1.0
  %v581 = vadd.f32 %v549, 1.0
  %v582 = vadd.f32 %v551, 1.0
  %v583 = vadd.f32 %v553, 1.0
  %v584 = vadd.f32 %v555, 1.0
  %v585 = vadd.f32 %v557, 1.0
  %v586 = vadd.f32 %v559, 1.0
  %v587 = vadd.f32 %v561, 1.0
  %v588 = vadd.f32 %v563, 1.0
  %v589 = vadd.f32 %v565, 1.0
  %v590 = vadd.f32 %v567, 1.0
  %v591 = vadd.f32 %v569, 1.0
  %v592 = vadd.f32 %v571, 1.0
  %v593 = vadd.f32 %v573, 1.0
  %v594 = vrcp.pop %v574
  %v595 = vmul.f32 1.0, %v594
  %v596 = vrcp.pop %v575
  %v597 = vmul.f32 1.0, %v596
  %v598 = vrcp.pop %v576
  %v599 = vmul.f32 1.0, %v598
  %v600 = vrcp.pop %v577
  %v601 = vmul.f32 1.0, %v600
  %v602 = vrcp.pop %v578
  %v603 = vmul.f32 1.0, %v602
  %v604 = vrcp.pop %v579
  %v605 = vmul.f32 1.0, %v604
  %v606 = vrcp.pop %v580
  %v607 = vmul.f32 1.0, %v606
  %v608 = vrcp.pop %v581
  %v609 = vmul.f32 1.0, %v608
  %v610 = vrcp.pop %v582
  %v611 = vmul.f32 1.0, %v610
  %v612 = vrcp.pop %v583
  %v613 = vmul.f32 1.0, %v612
  %v614 = vrcp.pop %v584
  %v615 = vmul.f32 1.0, %v614
  %v616 = vrcp.pop %v585
  %v617 = vmul.f32 1.0, %v616
  %v618 = vrcp.pop %v586
  %v619 = vmul.f32 1.0, %v618
  %v620 = vrcp.pop %v587
  %v621 = vmul.f32 1.0, %v620
  %v622 = vrcp.pop %v588
  %v623 = vmul.f32 1.0, %v622
  %v624 = vrcp.pop %v589
  %v625 = vmul.f32 1.0, %v624
  %v626 = vrcp.pop %v590
  %v627 = vmul.f32 1.0, %v626
  %v628 = vrcp.pop %v591
  %v629 = vmul.f32 1.0, %v628
  %v630 = vrcp.pop %v592
  %v631 = vmul.f32 1.0, %v630
  %v632 = vrcp.pop %v593
  %v633 = vmul.f32 1.0, %v632
  %654 = vrot.lane.b32.xlu0 %v595, 96
  %v655 = vpop.permute.xlu0 %654
  %656 = vrot.lane.b32.xlu0 %v597, 96
  %v657 = vpop.permute.xlu0 %656
  %658 = vrot.lane.b32.xlu0 %v599, 96
  %v659 = vpop.permute.xlu0 %658
  %660 = vrot.lane.b32.xlu0 %v601, 96
  %v661 = vpop.permute.xlu0 %660
  %662 = vrot.lane.b32.xlu0 %v603, 96
  %v663 = vpop.permute.xlu0 %662
  %664 = vrot.lane.b32.xlu0 %v605, 96
  %v665 = vpop.permute.xlu0 %664
  %666 = vrot.lane.b32.xlu0 %v607, 96
  %v667 = vpop.permute.xlu0 %666
  %668 = vrot.lane.b32.xlu0 %v609, 96
  %v669 = vpop.permute.xlu0 %668
  %670 = vrot.lane.b32.xlu0 %v611, 96
  %v671 = vpop.permute.xlu0 %670
  %672 = vrot.lane.b32.xlu0 %v613, 96
  %v673 = vpop.permute.xlu0 %672
  %674 = vrot.lane.b32.xlu0 %v615, 96
  %v675 = vpop.permute.xlu0 %674
  %676 = vrot.lane.b32.xlu0 %v617, 96
  %v677 = vpop.permute.xlu0 %676
  %678 = vrot.lane.b32.xlu0 %v619, 96
  %v679 = vpop.permute.xlu0 %678
  %680 = vrot.lane.b32.xlu0 %v621, 96
  %v681 = vpop.permute.xlu0 %680
  %682 = vrot.lane.b32.xlu0 %v623, 96
  %v683 = vpop.permute.xlu0 %682
  %684 = vrot.lane.b32.xlu0 %v625, 96
  %v685 = vpop.permute.xlu0 %684
  %686 = vrot.lane.b32.xlu0 %v627, 96
  %v687 = vpop.permute.xlu0 %686
  %688 = vrot.lane.b32.xlu0 %v629, 96
  %v689 = vpop.permute.xlu0 %688
  %690 = vrot.lane.b32.xlu0 %v631, 96
  %v691 = vpop.permute.xlu0 %690
  %692 = vrot.lane.b32.xlu0 %v633, 96
  %v693 = vpop.permute.xlu0 %692
  %v714 = vmul.f32 %v494, %v655
  %v715 = vmul.f32 %v495, %v657
  %v716 = vmul.f32 %v496, %v659
  %v717 = vmul.f32 %v497, %v661
  %v718 = vmul.f32 %v498, %v663
  %v719 = vmul.f32 %v499, %v665
  %v720 = vmul.f32 %v500, %v667
  %v721 = vmul.f32 %v501, %v669
  %v722 = vmul.f32 %v502, %v671
  %v723 = vmul.f32 %v503, %v673
  %v724 = vmul.f32 %v504, %v675
  %v725 = vmul.f32 %v505, %v677
  %v726 = vmul.f32 %v506, %v679
  %v727 = vmul.f32 %v507, %v681
  %v728 = vmul.f32 %v508, %v683
  %v729 = vmul.f32 %v509, %v685
  %v730 = vmul.f32 %v510, %v687
  %v731 = vmul.f32 %v511, %v689
  %v732 = vmul.f32 %v512, %v691
  %v733 = vmul.f32 %v513, %v693
  %v734 = vpack.c.bf16 %v715, %v714
  %v735 = vpack.c.bf16 %v717, %v716
  %v736 = vpack.c.bf16 %v719, %v718
  %v737 = vpack.c.bf16 %v721, %v720
  %v738 = vpack.c.bf16 %v723, %v722
  %v739 = vpack.c.bf16 %v725, %v724
  %v740 = vpack.c.bf16 %v727, %v726
  %v741 = vpack.c.bf16 %v729, %v728
  %v742 = vpack.c.bf16 %v731, %v730
  %v743 = vpack.c.bf16 %v733, %v732
  %v744 = vld [vmem:[%s7] sm:$0xf]
  %v745 = vld [vmem:[%s7 + $0x4] sm:$0xf]
  %v746 = vld [vmem:[%s7 + $0x8] sm:$0xf]
  %v747 = vld [vmem:[%s7 + $0xc] sm:$0xf]
  %v748 = vld [vmem:[%s8] sm:$0x1]
  %v750 = vlaneseq
  %v751 = vshrl.u32 %v750, 7
  %v752 = vsub.s32 0, %v751
  %v753 = vrot.slane %v748, %v752
  %v759 = vunpack.c.l.b16 %v744
  %v760 = vunpack.c.l.b16 %v745
  %v761 = vunpack.c.l.b16 %v746
  %v762 = vunpack.c.l.b16 %v747
  %v763 = vpack.c.b16 %v760, %v759
  %v764 = vpack.c.b16 %v762, %v761
  %v768 = vsel %vm62, %v734, 0
  %v771 = vsel %vm62, %v735, 0
  %v774 = vsel %vm62, %v736, 0
  %v777 = vsel %vm62, %v737, 0
  %v780 = vsel %vm62, %v738, 0
  %v783 = vsel %vm62, %v739, 0
  %v786 = vsel %vm62, %v740, 0
  %v789 = vsel %vm62, %v741, 0
  %v792 = vsel %vm62, %v742, 0
  %v795 = vsel %vm62, %v743, 0
  %797 = vmatprep.subr.bf16.mxu0 0
  %798 = vmatpush1.bf16.msra.mxu0 0
  %799 = vmatprep.subr.bf16.mxu0 0
  %800 = vmatpush1.bf16.msra.mxu0 0
  %801 = vmatprep.subr.bf16.mxu0 0
  %802 = vmatpush1.bf16.msra.mxu0 0
  %803 = vmatprep.subr.bf16.mxu0 0
  %804 = vmatpush1.bf16.msra.mxu0 0
  %805 = vmatprep.subr.bf16.mxu0 0
  %806 = vmatpush1.bf16.msra.mxu0 0
  %807 = vmatprep.subr.bf16.mxu0 0
  %808 = vmatpush1.bf16.msra.mxu0 0
  %809 = vmatprep.subr.bf16.mxu0 0
  %810 = vmatpush1.bf16.msra.mxu0 %v764
  %811 = vmatprep.subr.bf16.mxu0 0
  %812 = vmatpush1.bf16.msra.mxu0 %v763
  %813 = vmatprep.subr.bf16.mxu0 0
  %814 = vmatpush2.bf16.msra.mxu0 0
  %815 = vmatprep.subr.bf16.mxu0 0
  %816 = vmatpush2.bf16.msra.mxu0 0
  %817 = vmatprep.subr.bf16.mxu0 0
  %818 = vmatpush2.bf16.msra.mxu0 0
  %819 = vmatprep.subr.bf16.mxu0 0
  %820 = vmatpush2.bf16.msra.mxu0 0
  %821 = vmatprep.subr.bf16.mxu0 0
  %822 = vmatpush2.bf16.msra.mxu0 0
  %823 = vmatprep.subr.bf16.mxu0 0
  %824 = vmatpush2.bf16.msra.mxu0 0
  %825 = vmatprep.subr.bf16.mxu0 0
  %826 = vmatpush2.bf16.msra.mxu0 0
  %827 = vmatprep.subr.bf16.mxu0 0
  %828 = vmatpush2.bf16.msra.mxu0 0
  %829 = vmatprep.mubr.bf16.mxu0 0
  %830 = vmatmul.mubr.bf16.gmra.mxu0 %v768
  %v831 = vpop.f32.mrf.mxu0
  %v832 = vadd.f32 %v753, %v831
  %v833 = vpop.f32.mrf.mxu0
  %v834 = vpop.f32.mrf.mxu0
  %v835 = vadd.f32 %v753, %v834
  %v836 = vpop.f32.mrf.mxu0
  %837 = vmatprep.mubr.bf16.mxu0 0
  %838 = vmatmul.mubr.bf16.gmra.mxu0 %v771
  %v839 = vpop.f32.mrf.mxu0
  %v840 = vadd.f32 %v753, %v839
  %v841 = vpop.f32.mrf.mxu0
  %v842 = vpop.f32.mrf.mxu0
  %v843 = vadd.f32 %v753, %v842
  %v844 = vpop.f32.mrf.mxu0
  %845 = vmatprep.mubr.bf16.mxu0 0
  %846 = vmatmul.mubr.bf16.gmra.mxu0 %v774
  %v847 = vpop.f32.mrf.mxu0
  %v848 = vadd.f32 %v753, %v847
  %v849 = vpop.f32.mrf.mxu0
  %v850 = vpop.f32.mrf.mxu0
  %v851 = vadd.f32 %v753, %v850
  %v852 = vpop.f32.mrf.mxu0
  %853 = vmatprep.mubr.bf16.mxu0 0
  %854 = vmatmul.mubr.bf16.gmra.mxu0 %v777
  %v855 = vpop.f32.mrf.mxu0
  %v856 = vadd.f32 %v753, %v855
  %v857 = vpop.f32.mrf.mxu0
  %v858 = vpop.f32.mrf.mxu0
  %v859 = vadd.f32 %v753, %v858
  %v860 = vpop.f32.mrf.mxu0
  %861 = vmatprep.mubr.bf16.mxu0 0
  %862 = vmatmul.mubr.bf16.gmra.mxu0 %v780
  %v863 = vpop.f32.mrf.mxu0
  %v864 = vadd.f32 %v753, %v863
  %v865 = vpop.f32.mrf.mxu0
  %v866 = vpop.f32.mrf.mxu0
  %v867 = vadd.f32 %v753, %v866
  %v868 = vpop.f32.mrf.mxu0
  %869 = vmatprep.mubr.bf16.mxu0 0
  %870 = vmatmul.mubr.bf16.gmra.mxu0 %v783
  %v871 = vpop.f32.mrf.mxu0
  %v872 = vadd.f32 %v753, %v871
  %v873 = vpop.f32.mrf.mxu0
  %v874 = vpop.f32.mrf.mxu0
  %v875 = vadd.f32 %v753, %v874
  %v876 = vpop.f32.mrf.mxu0
  %877 = vmatprep.mubr.bf16.mxu0 0
  %878 = vmatmul.mubr.bf16.gmra.mxu0 %v786
  %v879 = vpop.f32.mrf.mxu0
  %v880 = vadd.f32 %v753, %v879
  %v881 = vpop.f32.mrf.mxu0
  %v882 = vpop.f32.mrf.mxu0
  %v883 = vadd.f32 %v753, %v882
  %v884 = vpop.f32.mrf.mxu0
  %885 = vmatprep.mubr.bf16.mxu0 0
  %886 = vmatmul.mubr.bf16.gmra.mxu0 %v789
  %v887 = vpop.f32.mrf.mxu0
  %v888 = vadd.f32 %v753, %v887
  %v889 = vpop.f32.mrf.mxu0
  %v890 = vpop.f32.mrf.mxu0
  %v891 = vadd.f32 %v753, %v890
  %v892 = vpop.f32.mrf.mxu0
  %893 = vmatprep.mubr.bf16.mxu0 0
  %894 = vmatmul.mubr.bf16.gmra.mxu0 %v792
  %v895 = vpop.f32.mrf.mxu0
  %v896 = vadd.f32 %v753, %v895
  %v897 = vpop.f32.mrf.mxu0
  %v898 = vpop.f32.mrf.mxu0
  %v899 = vadd.f32 %v753, %v898
  %v900 = vpop.f32.mrf.mxu0
  %901 = vmatprep.mubr.bf16.mxu0 0
  %902 = vmatmul.mubr.bf16.gmra.mxu0 %v795
  %v903 = vpop.f32.mrf.mxu0
  %v904 = vadd.f32 %v753, %v903
  %v905 = vpop.f32.mrf.mxu0
  %v906 = vpop.f32.mrf.mxu0
  %v907 = vadd.f32 %v753, %v906
  %v908 = vpop.f32.mrf.mxu0
  %909 = vdwg.mxu0
  %v910 = vsel %vm62, %v832, -inf
  %v911 = vsel %vm62, %v848, -inf
  %v912 = vmax.f32 %v910, %v911
  %v913 = vsel %vm62, %v864, -inf
  %v914 = vmax.f32 %v912, %v913
  %v915 = vsel %vm62, %v880, -inf
  %v916 = vmax.f32 %v914, %v915
  %v917 = vsel %vm62, %v896, -inf
  %v918 = vmax.f32 %v916, %v917
  %v919 = vsel %vm62, %v835, -inf
  %v920 = vsel %vm62, %v851, -inf
  %v921 = vmax.f32 %v919, %v920
  %v922 = vsel %vm62, %v867, -inf
  %v923 = vmax.f32 %v921, %v922
  %v924 = vsel %vm62, %v883, -inf
  %v925 = vmax.f32 %v923, %v924
  %v926 = vsel %vm62, %v899, -inf
  %v927 = vmax.f32 %v925, %v926
  %v928 = vsel %vm62, %v840, -inf
  %v929 = vsel %vm62, %v856, -inf
  %v930 = vmax.f32 %v928, %v929
  %v931 = vsel %vm62, %v872, -inf
  %v932 = vmax.f32 %v930, %v931
  %v933 = vsel %vm62, %v888, -inf
  %v934 = vmax.f32 %v932, %v933
  %v935 = vsel %vm62, %v904, -inf
  %v936 = vmax.f32 %v934, %v935
  %v937 = vsel %vm62, %v843, -inf
  %v938 = vsel %vm62, %v859, -inf
  %v939 = vmax.f32 %v937, %v938
  %v940 = vsel %vm62, %v875, -inf
  %v941 = vmax.f32 %v939, %v940
  %v942 = vsel %vm62, %v891, -inf
  %v943 = vmax.f32 %v941, %v942
  %v944 = vsel %vm62, %v907, -inf
  %v945 = vmax.f32 %v943, %v944
  %v946 = vadd.f32 %v918, %v33
  %v947 = vadd.f32 %v927, %v34
  %v948 = vadd.f32 %v936, %v35
  %v949 = vadd.f32 %v945, %v36
  %v950 = vmax.f32 %v946, 0.0
  %v951 = vmax.f32 %v947, 0.0
  %v952 = vmax.f32 %v948, 0.0
  %v953 = vmax.f32 %v949, 0.0
  %954 = vst.msk [vmem:[%s9] sm:$0xff] %vm62, %v950
  %955 = vst.msk [vmem:[%s9 + $0x8] sm:$0xff] %vm62, %v951
  %956 = vst.msk [vmem:[%s9 + $0x10] sm:$0xff] %vm62, %v952
  %957 = vst.msk [vmem:[%s9 + $0x18] sm:$0xff] %vm62, %v953
  // Predicated region
  $region38: #{glue_edge_dgcnn_forward.8} parent=0 // pred_check
    _
  $region39: #{glue_edge_dgcnn_forward.8} parent=0 // pred_check_branch
    %959 = sbr.rel (0) target = $region41
  $region40: #{glue_edge_dgcnn_forward.8} parent=0 // pred_region
    _
  $region41: #{glue_edge_dgcnn_forward.8} parent=0 // pred_fallthru
    _
  // Predicated region
  $region42: #{glue_edge_dgcnn_forward.8} parent=0 // pred_check
    _
  $region43: #{glue_edge_dgcnn_forward.8} parent=0 // pred_check_branch
    %961 = sbr.rel (0) target = $region45
  $region44: #{glue_edge_dgcnn_forward.8} parent=0 // pred_region
    _
  $region45: #{glue_edge_dgcnn_forward.8} parent=0 // pred_fallthru
    _

// kernel: glue_edge_dgcnn_forward.11
$region0: #{glue_edge_dgcnn_forward.11}
  #allocation0 [shape = 'u32[]', space=smem, size = 0x4, offset = 0x4, fixed_abs, tag = 'smem constant byte address 0x4 - core index']
  #allocation1 [shape = 'u32[144,128]{1,0:T(1,128)}', space=vmem, size = 0x12000, scoped, tag = 'internal scratch']
  %s0 = inlined_call_operand.vmem [shape: f32[32,64], index: 0, kind: input, shape index: {}]
  %s1 = inlined_call_operand.vmem [shape: f32[128,64], index: 1, kind: input, shape index: {}]
  %s2 = inlined_call_operand.vmem [shape: f32[1,64], index: 2, kind: input, shape index: {}]
  %s3 = inlined_call_operand.vmem [shape: f32[32,2], index: 3, kind: input, shape index: {}]
  %s4 = inlined_call_operand.vmem [shape: f32[1,2], index: 4, kind: input, shape index: {}]
  %s5 = inlined_call_operand.hbm [shape: f32[2,2], index: 5, kind: output, shape index: {}]
  %s6 = sld [smem:[#allocation0]]
  $region30: #{glue_edge_dgcnn_forward.11} parent=0
    _
  %s8 = ssub.s32 1, %s6
  %s9 = scalar_select 0, %s8, %s6
  $region1: #{glue_edge_dgcnn_forward.11} parent=0
    #allocation2 [shape = 'u8[1024]{0}', space=vmem, size = 0x400, scoped, tag = 'output window, operand 0, single buffered']
    #allocation3 [shape = 's32[1]{0}', space=sflag, size = 0x4, scoped, tag = 'scoped memory for glue_edge_dgcnn_forward.11']
    %10 = vsyncpa [#allocation3], 0
    // Predicated region
    $region2: #{glue_edge_dgcnn_forward.11} parent=1 // pred_check
      _
    $region3: #{glue_edge_dgcnn_forward.11} parent=1 // pred_check_branch
      %12 = sbr.rel (0) target = $region5
    $region4: #{glue_edge_dgcnn_forward.11} parent=1 // pred_region
      _
    $region5: #{glue_edge_dgcnn_forward.11} parent=1 // pred_fallthru
      _
    // Predicated region
    $region6: #{glue_edge_dgcnn_forward.11} parent=1 // pred_check
      _
    $region7: #{glue_edge_dgcnn_forward.11} parent=1 // pred_check_branch
      %14 = sbr.rel (0) target = $region9
    $region8: #{glue_edge_dgcnn_forward.11} parent=1 // pred_region
      _
    $region9: #{glue_edge_dgcnn_forward.11} parent=1 // pred_fallthru
      _
    // Predicated region
    $region10: #{glue_edge_dgcnn_forward.11} parent=1 // pred_check
      _
    $region11: #{glue_edge_dgcnn_forward.11} parent=1 // pred_check_branch
      %16 = sbr.rel (0) target = $region13
    $region12: #{glue_edge_dgcnn_forward.11} parent=1 // pred_region
      _
    $region13: #{glue_edge_dgcnn_forward.11} parent=1 // pred_fallthru
      _
    // Predicated region
    $region14: #{glue_edge_dgcnn_forward.11} parent=1 // pred_check
      _
    $region15: #{glue_edge_dgcnn_forward.11} parent=1 // pred_check_branch
      %18 = sbr.rel (0) target = $region17
    $region16: #{glue_edge_dgcnn_forward.11} parent=1 // pred_region
      _
    $region17: #{glue_edge_dgcnn_forward.11} parent=1 // pred_fallthru
      _
    // Predicated region
    $region18: #{glue_edge_dgcnn_forward.11} parent=1 // pred_check
      _
    $region19: #{glue_edge_dgcnn_forward.11} parent=1 // pred_check_branch
      %20 = sbr.rel (0) target = $region21
    $region20: #{glue_edge_dgcnn_forward.11} parent=1 // pred_region
      _
    $region21: #{glue_edge_dgcnn_forward.11} parent=1 // pred_fallthru
      _
    %v21 = vld [vmem:[%s0] sm:$0xff]
    %v22 = vld [vmem:[%s0 + $0x8] sm:$0xff]
    %v23 = vld [vmem:[%s0 + $0x10] sm:$0xff]
    %v24 = vld [vmem:[%s0 + $0x18] sm:$0xff]
    %vm25 = vcmask 523264
    %v26 = vsel %vm25, %v21, -inf
    %v27 = vsel %vm25, %v22, -inf
    %v28 = vmax.f32 %v26, %v27
    %v29 = vrot.slane %v28, 4
    %v30 = vmax.f32 %v28, %v29
    %v31 = vrot.slane %v30, 2
    %v32 = vmax.f32 %v30, %v31
    %v33 = vrot.slane %v32, 1
    %v34 = vmax.f32 %v32, %v33
    %v35 = vsel %vm25, %v23, -inf
    %v36 = vsel %vm25, %v24, -inf
    %v37 = vmax.f32 %v35, %v36
    %v38 = vrot.slane %v37, 4
    %v39 = vmax.f32 %v37, %v38
    %v40 = vrot.slane %v39, 2
    %v41 = vmax.f32 %v39, %v40
    %v42 = vrot.slane %v41, 1
    %v43 = vmax.f32 %v41, %v42
    %v44 = vsel %vm25, %v21, 0.0
    %v45 = vsel %vm25, %v22, 0.0
    %v46 = vadd.f32 %v44, %v45
    %v47 = vrot.slane %v46, 4
    %v48 = vadd.f32 %v46, %v47
    %v49 = vrot.slane %v48, 2
    %v50 = vadd.f32 %v48, %v49
    %v51 = vrot.slane %v50, 1
    %v52 = vadd.f32 %v50, %v51
    %v53 = vsel %vm25, %v23, 0.0
    %v54 = vsel %vm25, %v24, 0.0
    %v55 = vadd.f32 %v53, %v54
    %v56 = vrot.slane %v55, 4
    %v57 = vadd.f32 %v55, %v56
    %v58 = vrot.slane %v57, 2
    %v59 = vadd.f32 %v57, %v58
    %v60 = vrot.slane %v59, 1
    %v61 = vadd.f32 %v59, %v60
    %v62 = vrcp.pop 16.0
    %v63 = vmul.f32 %v52, %v62
    %v64 = vmul.f32 %v61, %v62
    %vm67 = vcmask 1041409
    %v68 = vsel %vm67, %v43, %v34
    %v72 = vsel %vm67, %v64, %v63
    %73 = vrot.lane.b32.xlu0 %v72, 64
    %v74 = vpop.permute.xlu0 %73
    %v76 = vsel %vm25, %v68, %v74
    %v77 = vld [vmem:[%s1] sm:$0xff]
    %v78 = vld [vmem:[%s1 + $0x8] sm:$0xff]
    %v79 = vld [vmem:[%s1 + $0x10] sm:$0xff]
    %v80 = vld [vmem:[%s1 + $0x18] sm:$0xff]
    %v81 = vld [vmem:[%s1 + $0x20] sm:$0xff]
    %v82 = vld [vmem:[%s1 + $0x28] sm:$0xff]
    %v83 = vld [vmem:[%s1 + $0x30] sm:$0xff]
    %v84 = vld [vmem:[%s1 + $0x38] sm:$0xff]
    %v85 = vld [vmem:[%s1 + $0x40] sm:$0xff]
    %v86 = vld [vmem:[%s1 + $0x48] sm:$0xff]
    %v87 = vld [vmem:[%s1 + $0x50] sm:$0xff]
    %v88 = vld [vmem:[%s1 + $0x58] sm:$0xff]
    %v89 = vld [vmem:[%s1 + $0x60] sm:$0xff]
    %v90 = vld [vmem:[%s1 + $0x68] sm:$0xff]
    %v91 = vld [vmem:[%s1 + $0x70] sm:$0xff]
    %v92 = vld [vmem:[%s1 + $0x78] sm:$0xff]
    %v93 = vld [vmem:[%s2] sm:$0x1]
    %v95 = vlaneseq
    %v96 = vshrl.u32 %v95, 7
    %v97 = vsub.s32 0, %v96
    %v98 = vrot.slane %v93, %v97
    %100 = vmatprep.subr.mxu0 0.0
    %101 = vmatpush1.msra.mxu0 %v92
    %102 = vmatprep.subr.mxu0 0.0
    %103 = vmatpush1.msra.mxu0 %v91
    %104 = vmatprep.subr.mxu0 0.0
    %105 = vmatpush1.msra.mxu0 %v90
    %106 = vmatprep.subr.mxu0 0.0
    %107 = vmatpush1.msra.mxu0 %v89
    %108 = vmatprep.subr.mxu0 0.0
    %109 = vmatpush1.msra.mxu0 %v88
    %110 = vmatprep.subr.mxu0 0.0
    %111 = vmatpush1.msra.mxu0 %v87
    %112 = vmatprep.subr.mxu0 0.0
    %113 = vmatpush1.msra.mxu0 %v86
    %114 = vmatprep.subr.mxu0 0.0
    %115 = vmatpush1.msra.mxu0 %v85
    %116 = vmatprep.subr.mxu0 0.0
    %117 = vmatpush1.msra.mxu0 %v84
    %118 = vmatprep.subr.mxu0 0.0
    %119 = vmatpush1.msra.mxu0 %v83
    %120 = vmatprep.subr.mxu0 0.0
    %121 = vmatpush1.msra.mxu0 %v82
    %122 = vmatprep.subr.mxu0 0.0
    %123 = vmatpush1.msra.mxu0 %v81
    %124 = vmatprep.subr.mxu0 0.0
    %125 = vmatpush1.msra.mxu0 %v80
    %126 = vmatprep.subr.mxu0 0.0
    %127 = vmatpush1.msra.mxu0 %v79
    %128 = vmatprep.subr.mxu0 0.0
    %129 = vmatpush1.msra.mxu0 %v78
    %130 = vmatprep.subr.mxu0 0.0
    %131 = vmatpush1.msra.mxu0 %v77
    %132 = vmatprep.subr.mxu0 0.0
    %133 = vmatpush2.msra.mxu0 0.0
    %134 = vmatprep.subr.mxu0 0.0
    %135 = vmatpush2.msra.mxu0 0.0
    %136 = vmatprep.subr.mxu0 0.0
    %137 = vmatpush2.msra.mxu0 0.0
    %138 = vmatprep.subr.mxu0 0.0
    %139 = vmatpush2.msra.mxu0 0.0
    %140 = vmatprep.subr.mxu0 0.0
    %141 = vmatpush2.msra.mxu0 0.0
    %142 = vmatprep.subr.mxu0 0.0
    %143 = vmatpush2.msra.mxu0 0.0
    %144 = vmatprep.subr.mxu0 0.0
    %145 = vmatpush2.msra.mxu0 0.0
    %146 = vmatprep.subr.mxu0 0.0
    %147 = vmatpush2.msra.mxu0 0.0
    %148 = vmatprep.subr.mxu0 0.0
    %149 = vmatpush2.msra.mxu0 0.0
    %150 = vmatprep.subr.mxu0 0.0
    %151 = vmatpush2.msra.mxu0 0.0
    %152 = vmatprep.subr.mxu0 0.0
    %153 = vmatpush2.msra.mxu0 0.0
    %154 = vmatprep.subr.mxu0 0.0
    %155 = vmatpush2.msra.mxu0 0.0
    %156 = vmatprep.subr.mxu0 0.0
    %157 = vmatpush2.msra.mxu0 0.0
    %158 = vmatprep.subr.mxu0 0.0
    %159 = vmatpush2.msra.mxu0 0.0
    %160 = vmatprep.subr.mxu0 0.0
    %161 = vmatpush2.msra.mxu0 0.0
    %162 = vmatprep.subr.mxu0 0.0
    %163 = vmatpush2.msra.mxu0 0.0
    %164 = vmatprep.mubr.f32.mxu0 0.0
    %165 = vmatmul.mubr.f32.gmra.mxu0 %v76
    %v166 = vpop.f32.mrf.mxu0
    %v167 = vadd.f32 %v98, %v166
    %v168 = vpop.f32.mrf.mxu0
    %169 = vdwg.mxu0
    %v170 = vxor.u32 %v167, 2147483648
    %v171 = vmul.f32 %v170, 1.442695
    %v172 = vpow.pop %v171
    %v173 = vadd.f32 %v172, 1.0
    %v174 = vrcp.pop %v173
    %v175 = vmul.f32 1.0, %v174
    %177 = vrot.lane.b32.xlu0 %v175, 96
    %v178 = vpop.permute.xlu0 %177
    %v180 = vmul.f32 %v167, %v178
    %v181 = vld [vmem:[%s3] sm:$0xff]
    %v182 = vld [vmem:[%s3 + $0x8] sm:$0xff]
    %v183 = vld [vmem:[%s3 + $0x10] sm:$0xff]
    %v184 = vld [vmem:[%s3 + $0x18] sm:$0xff]
    %v185 = vld [vmem:[%s4] sm:$0x1]
    %v187 = vlaneseq
    %v188 = vshrl.u32 %v187, 7
    %v189 = vsub.s32 0, %v188
    %v190 = vrot.slane %v185, %v189
    %vm192 = vcmask 261120
    %v194 = vsel %vm192, %v180, 0
    %196 = vmatprep.subr.mxu0 0.0
    %197 = vmatpush1.msra.mxu0 0.0
    %198 = vmatprep.subr.mxu0 0.0
    %199 = vmatpush1.msra.mxu0 0.0
    %200 = vmatprep.subr.mxu0 0.0
    %201 = vmatpush1.msra.mxu0 0.0
    %202 = vmatprep.subr.mxu0 0.0
    %203 = vmatpush1.msra.mxu0 0.0
    %204 = vmatprep.subr.mxu0 0.0
    %205 = vmatpush1.msra.mxu0 0.0
    %206 = vmatprep.subr.mxu0 0.0
    %207 = vmatpush1.msra.mxu0 0.0
    %208 = vmatprep.subr.mxu0 0.0
    %209 = vmatpush1.msra.mxu0 0.0
    %210 = vmatprep.subr.mxu0 0.0
    %211 = vmatpush1.msra.mxu0 0.0
    %212 = vmatprep.subr.mxu0 0.0
    %213 = vmatpush1.msra.mxu0 0.0
    %214 = vmatprep.subr.mxu0 0.0
    %215 = vmatpush1.msra.mxu0 0.0
    %216 = vmatprep.subr.mxu0 0.0
    %217 = vmatpush1.msra.mxu0 0.0
    %218 = vmatprep.subr.mxu0 0.0
    %219 = vmatpush1.msra.mxu0 0.0
    %220 = vmatprep.subr.mxu0 0.0
    %221 = vmatpush1.msra.mxu0 %v184
    %222 = vmatprep.subr.mxu0 0.0
    %223 = vmatpush1.msra.mxu0 %v183
    %224 = vmatprep.subr.mxu0 0.0
    %225 = vmatpush1.msra.mxu0 %v182
    %226 = vmatprep.subr.mxu0 0.0
    %227 = vmatpush1.msra.mxu0 %v181
    %228 = vmatprep.subr.mxu0 0.0
    %229 = vmatpush2.msra.mxu0 0.0
    %230 = vmatprep.subr.mxu0 0.0
    %231 = vmatpush2.msra.mxu0 0.0
    %232 = vmatprep.subr.mxu0 0.0
    %233 = vmatpush2.msra.mxu0 0.0
    %234 = vmatprep.subr.mxu0 0.0
    %235 = vmatpush2.msra.mxu0 0.0
    %236 = vmatprep.subr.mxu0 0.0
    %237 = vmatpush2.msra.mxu0 0.0
    %238 = vmatprep.subr.mxu0 0.0
    %239 = vmatpush2.msra.mxu0 0.0
    %240 = vmatprep.subr.mxu0 0.0
    %241 = vmatpush2.msra.mxu0 0.0
    %242 = vmatprep.subr.mxu0 0.0
    %243 = vmatpush2.msra.mxu0 0.0
    %244 = vmatprep.subr.mxu0 0.0
    %245 = vmatpush2.msra.mxu0 0.0
    %246 = vmatprep.subr.mxu0 0.0
    %247 = vmatpush2.msra.mxu0 0.0
    %248 = vmatprep.subr.mxu0 0.0
    %249 = vmatpush2.msra.mxu0 0.0
    %250 = vmatprep.subr.mxu0 0.0
    %251 = vmatpush2.msra.mxu0 0.0
    %252 = vmatprep.subr.mxu0 0.0
    %253 = vmatpush2.msra.mxu0 0.0
    %254 = vmatprep.subr.mxu0 0.0
    %255 = vmatpush2.msra.mxu0 0.0
    %256 = vmatprep.subr.mxu0 0.0
    %257 = vmatpush2.msra.mxu0 0.0
    %258 = vmatprep.subr.mxu0 0.0
    %259 = vmatpush2.msra.mxu0 0.0
    %260 = vmatprep.mubr.f32.mxu0 0.0
    %261 = vmatmul.mubr.f32.gmra.mxu0 %v194
    %v262 = vpop.f32.mrf.mxu0
    %v263 = vadd.f32 %v190, %v262
    %v264 = vpop.f32.mrf.mxu0
    %265 = vdwg.mxu0
    %vm266 = vcmask 9216
    %v267 = vsel %vm266, %v263, -inf
    %268 = vmax.xlane.f32.xlu0 %v267
    %v269 = vpop.xlane.xlu0 %268
    %v270 = vsub.f32 %v263, %v269
    %v271 = vmul.f32 %v270, 1.442695
    %v272 = vpow.pop %v271
    %v273 = vsel %vm266, %v272, 0.0
    %274 = vadd.xlane.f32.xlu0 %v273
    %v275 = vpop.xlane.xlu0 %274
    %v276 = vlog2.pop %v275
    %v277 = vmul.f32 %v276, 0.6931472
    %v278 = vadd.f32 %v269, %v277
    %v279 = vsub.f32 %v263, %v278
    %280 = vst.msk [vmem:[#allocation2] sm:$0x3] %vm266, %v279
    // Predicated region
    $region22: #{glue_edge_dgcnn_forward.11} parent=1 // pred_check
      _
    $region23: #{glue_edge_dgcnn_forward.11} parent=1 // pred_check_branch
      %282 = sbr.rel (0) target = $region25
    $region24: #{glue_edge_dgcnn_forward.11} parent=1 // pred_region
      %s284 = ssub.s32 32, 32
      %285 = vsyncadd [#allocation3], %s284
      %s287 = sshll.u32 [#allocation2], 4
      %s288 = int_to_ptr.vmem [resolvable:$true] %s287
      %290 = dma.vmem_to_hbm [thread:$0]  %s288, 32, %s5, [#allocation3]
    $region25: #{glue_edge_dgcnn_forward.11} parent=1 // pred_fallthru
      _
    // Predicated region
    $region26: #{glue_edge_dgcnn_forward.11} parent=1 // pred_check
      _
    $region27: #{glue_edge_dgcnn_forward.11} parent=1 // pred_check_branch
      %292 = sbr.rel (0) target = $region29
    $region28: #{glue_edge_dgcnn_forward.11} parent=1 // pred_region
      %293 = dma.done [#allocation3], 32
    $region29: #{glue_edge_dgcnn_forward.11} parent=1 // pred_fallthru
      _
    %294 = vsyncpa [#allocation3], 1

// kernel: glue_edge_dgcnn_forward.10
$region0: #{glue_edge_dgcnn_forward.10}
  #allocation0 [shape = 'u32[]', space=smem, size = 0x4, offset = 0x4, fixed_abs, tag = 'smem constant byte address 0x4 - core index']
  #allocation1 [shape = 'u32[144,128]{1,0:T(1,128)}', space=vmem, size = 0x12000, scoped, tag = 'internal scratch']
  %s0 = inlined_call_operand.vmem [shape: f32[32,32], index: 0, kind: input, shape index: {}]
  %s1 = inlined_call_operand.vmem [shape: bf16[5,32,32], index: 1, kind: input, shape index: {}]
  %s2 = inlined_call_operand.vmem [shape: f32[5,32,1], index: 2, kind: input, shape index: {}]
  %s3 = inlined_call_operand.vmem [shape: bf16[32,64], index: 3, kind: input, shape index: {}]
  %s4 = inlined_call_operand.vmem [shape: bf16[32,64], index: 4, kind: input, shape index: {}]
  %s5 = inlined_call_operand.vmem [shape: f32[1,64], index: 5, kind: input, shape index: {}]
  %s6 = inlined_call_operand.vmem [shape: f32[1,64], index: 6, kind: input, shape index: {}]
  %s7 = inlined_call_operand.vmem [shape: bf16[32,32], index: 7, kind: input, shape index: {}]
  %s8 = inlined_call_operand.vmem [shape: f32[1,32], index: 8, kind: input, shape index: {}]
  %s9 = inlined_call_operand.vmem [shape: f32[32,64], index: 9, kind: output, shape index: {}]
  %s10 = sld [smem:[#allocation0]]
  $region46: #{glue_edge_dgcnn_forward.10} parent=0
    _
  %s12 = ssub.s32 1, %s10
  %s13 = scalar_select 0, %s12, %s10
  // Predicated region
  $region2: #{glue_edge_dgcnn_forward.10} parent=0 // pred_check
    _
  $region3: #{glue_edge_dgcnn_forward.10} parent=0 // pred_check_branch
    %15 = sbr.rel (0) target = $region5
  $region4: #{glue_edge_dgcnn_forward.10} parent=0 // pred_region
    _
  $region5: #{glue_edge_dgcnn_forward.10} parent=0 // pred_fallthru
    _
  // Predicated region
  $region6: #{glue_edge_dgcnn_forward.10} parent=0 // pred_check
    _
  $region7: #{glue_edge_dgcnn_forward.10} parent=0 // pred_check_branch
    %17 = sbr.rel (0) target = $region9
  $region8: #{glue_edge_dgcnn_forward.10} parent=0 // pred_region
    _
  $region9: #{glue_edge_dgcnn_forward.10} parent=0 // pred_fallthru
    _
  // Predicated region
  $region10: #{glue_edge_dgcnn_forward.10} parent=0 // pred_check
    _
  $region11: #{glue_edge_dgcnn_forward.10} parent=0 // pred_check_branch
    %19 = sbr.rel (0) target = $region13
  $region12: #{glue_edge_dgcnn_forward.10} parent=0 // pred_region
    _
  $region13: #{glue_edge_dgcnn_forward.10} parent=0 // pred_fallthru
    _
  // Predicated region
  $region14: #{glue_edge_dgcnn_forward.10} parent=0 // pred_check
    _
  $region15: #{glue_edge_dgcnn_forward.10} parent=0 // pred_check_branch
    %21 = sbr.rel (0) target = $region17
  $region16: #{glue_edge_dgcnn_forward.10} parent=0 // pred_region
    _
  $region17: #{glue_edge_dgcnn_forward.10} parent=0 // pred_fallthru
    _
  // Predicated region
  $region18: #{glue_edge_dgcnn_forward.10} parent=0 // pred_check
    _
  $region19: #{glue_edge_dgcnn_forward.10} parent=0 // pred_check_branch
    %23 = sbr.rel (0) target = $region21
  $region20: #{glue_edge_dgcnn_forward.10} parent=0 // pred_region
    _
  $region21: #{glue_edge_dgcnn_forward.10} parent=0 // pred_fallthru
    _
  // Predicated region
  $region22: #{glue_edge_dgcnn_forward.10} parent=0 // pred_check
    _
  $region23: #{glue_edge_dgcnn_forward.10} parent=0 // pred_check_branch
    %25 = sbr.rel (0) target = $region25
  $region24: #{glue_edge_dgcnn_forward.10} parent=0 // pred_region
    _
  $region25: #{glue_edge_dgcnn_forward.10} parent=0 // pred_fallthru
    _
  // Predicated region
  $region26: #{glue_edge_dgcnn_forward.10} parent=0 // pred_check
    _
  $region27: #{glue_edge_dgcnn_forward.10} parent=0 // pred_check_branch
    %27 = sbr.rel (0) target = $region29
  $region28: #{glue_edge_dgcnn_forward.10} parent=0 // pred_region
    _
  $region29: #{glue_edge_dgcnn_forward.10} parent=0 // pred_fallthru
    _
  // Predicated region
  $region30: #{glue_edge_dgcnn_forward.10} parent=0 // pred_check
    _
  $region31: #{glue_edge_dgcnn_forward.10} parent=0 // pred_check_branch
    %29 = sbr.rel (0) target = $region33
  $region32: #{glue_edge_dgcnn_forward.10} parent=0 // pred_region
    _
  $region33: #{glue_edge_dgcnn_forward.10} parent=0 // pred_fallthru
    _
  // Predicated region
  $region34: #{glue_edge_dgcnn_forward.10} parent=0 // pred_check
    _
  $region35: #{glue_edge_dgcnn_forward.10} parent=0 // pred_check_branch
    %31 = sbr.rel (0) target = $region37
  $region36: #{glue_edge_dgcnn_forward.10} parent=0 // pred_region
    _
  $region37: #{glue_edge_dgcnn_forward.10} parent=0 // pred_fallthru
    _
  %v33 = vld [vmem:[%s0] sm:$0xff]
  %v34 = vld [vmem:[%s0 + $0x8] sm:$0xff]
  %v35 = vld [vmem:[%s0 + $0x10] sm:$0xff]
  %v36 = vld [vmem:[%s0 + $0x18] sm:$0xff]
  %v37 = vpack.c.bf16 %v34, %v33
  %v38 = vpack.c.bf16 %v36, %v35
  %v39 = vld [vmem:[%s3] sm:$0xf]
  %v40 = vld [vmem:[%s3 + $0x4] sm:$0xf]
  %v41 = vld [vmem:[%s3 + $0x8] sm:$0xf]
  %v42 = vld [vmem:[%s3 + $0xc] sm:$0xf]
  %v43 = vld [vmem:[%s6] sm:$0x1]
  %v45 = vlaneseq
  %v46 = vshrl.u32 %v45, 7
  %v47 = vsub.s32 0, %v46
  %v48 = vrot.slane %v43, %v47
  %v54 = vunpack.c.l.b16 %v39
  %v55 = vunpack.c.l.b16 %v40
  %v56 = vunpack.c.l.b16 %v41
  %v57 = vunpack.c.l.b16 %v42
  %v58 = vpack.c.b16 %v55, %v54
  %v59 = vpack.c.b16 %v57, %v56
  %vm62 = vcmask 261120
  %v64 = vsel %vm62, %v37, 0
  %v67 = vsel %vm62, %v38, 0
  %69 = vmatprep.subr.bf16.mxu0 0
  %70 = vmatpush1.bf16.msra.mxu0 0
  %71 = vmatprep.subr.bf16.mxu0 0
  %72 = vmatpush1.bf16.msra.mxu0 0
  %73 = vmatprep.subr.bf16.mxu0 0
  %74 = vmatpush1.bf16.msra.mxu0 0
  %75 = vmatprep.subr.bf16.mxu0 0
  %76 = vmatpush1.bf16.msra.mxu0 0
  %77 = vmatprep.subr.bf16.mxu0 0
  %78 = vmatpush1.bf16.msra.mxu0 0
  %79 = vmatprep.subr.bf16.mxu0 0
  %80 = vmatpush1.bf16.msra.mxu0 0
  %81 = vmatprep.subr.bf16.mxu0 0
  %82 = vmatpush1.bf16.msra.mxu0 %v59
  %83 = vmatprep.subr.bf16.mxu0 0
  %84 = vmatpush1.bf16.msra.mxu0 %v58
  %85 = vmatprep.subr.bf16.mxu0 0
  %86 = vmatpush2.bf16.msra.mxu0 0
  %87 = vmatprep.subr.bf16.mxu0 0
  %88 = vmatpush2.bf16.msra.mxu0 0
  %89 = vmatprep.subr.bf16.mxu0 0
  %90 = vmatpush2.bf16.msra.mxu0 0
  %91 = vmatprep.subr.bf16.mxu0 0
  %92 = vmatpush2.bf16.msra.mxu0 0
  %93 = vmatprep.subr.bf16.mxu0 0
  %94 = vmatpush2.bf16.msra.mxu0 0
  %95 = vmatprep.subr.bf16.mxu0 0
  %96 = vmatpush2.bf16.msra.mxu0 0
  %97 = vmatprep.subr.bf16.mxu0 0
  %98 = vmatpush2.bf16.msra.mxu0 0
  %99 = vmatprep.subr.bf16.mxu0 0
  %100 = vmatpush2.bf16.msra.mxu0 0
  %101 = vmatprep.mubr.bf16.mxu0 0
  %102 = vmatmul.mubr.bf16.gmra.mxu0 %v64
  %v103 = vpop.f32.mrf.mxu0
  %v104 = vadd.f32 %v48, %v103
  %v105 = vpop.f32.mrf.mxu0
  %v106 = vpop.f32.mrf.mxu0
  %v107 = vadd.f32 %v48, %v106
  %v108 = vpop.f32.mrf.mxu0
  %109 = vmatprep.mubr.bf16.mxu0 0
  %110 = vmatmul.mubr.bf16.gmra.mxu0 %v67
  %v111 = vpop.f32.mrf.mxu0
  %v112 = vadd.f32 %v48, %v111
  %v113 = vpop.f32.mrf.mxu0
  %v114 = vpop.f32.mrf.mxu0
  %v115 = vadd.f32 %v48, %v114
  %v116 = vpop.f32.mrf.mxu0
  %117 = vdwg.mxu0
  %v118 = vld [vmem:[%s1] sm:$0xf]
  %v119 = vld [vmem:[%s1 + $0x4] sm:$0xf]
  %v120 = vld [vmem:[%s1 + $0x8] sm:$0xf]
  %v121 = vld [vmem:[%s1 + $0xc] sm:$0xf]
  %v122 = vld [vmem:[%s1 + $0x10] sm:$0xf]
  %v123 = vld [vmem:[%s1 + $0x14] sm:$0xf]
  %v124 = vld [vmem:[%s1 + $0x18] sm:$0xf]
  %v125 = vld [vmem:[%s1 + $0x1c] sm:$0xf]
  %v126 = vld [vmem:[%s1 + $0x20] sm:$0xf]
  %v127 = vld [vmem:[%s1 + $0x24] sm:$0xf]
  %v128 = vld [vmem:[%s1 + $0x28] sm:$0xf]
  %v129 = vld [vmem:[%s1 + $0x2c] sm:$0xf]
  %v130 = vld [vmem:[%s1 + $0x30] sm:$0xf]
  %v131 = vld [vmem:[%s1 + $0x34] sm:$0xf]
  %v132 = vld [vmem:[%s1 + $0x38] sm:$0xf]
  %v133 = vld [vmem:[%s1 + $0x3c] sm:$0xf]
  %v134 = vld [vmem:[%s1 + $0x40] sm:$0xf]
  %v135 = vld [vmem:[%s1 + $0x44] sm:$0xf]
  %v136 = vld [vmem:[%s1 + $0x48] sm:$0xf]
  %v137 = vld [vmem:[%s1 + $0x4c] sm:$0xf]
  %v138 = vld [vmem:[%s4] sm:$0xf]
  %v139 = vld [vmem:[%s4 + $0x4] sm:$0xf]
  %v140 = vld [vmem:[%s4 + $0x8] sm:$0xf]
  %v141 = vld [vmem:[%s4 + $0xc] sm:$0xf]
  %v142 = vld [vmem:[%s2] sm:$0xff]
  %v143 = vld [vmem:[%s2 + $0x8] sm:$0xff]
  %v144 = vld [vmem:[%s2 + $0x10] sm:$0xff]
  %v145 = vld [vmem:[%s2 + $0x18] sm:$0xff]
  %v146 = vld [vmem:[%s2 + $0x20] sm:$0xff]
  %v147 = vld [vmem:[%s2 + $0x28] sm:$0xff]
  %v148 = vld [vmem:[%s2 + $0x30] sm:$0xff]
  %v149 = vld [vmem:[%s2 + $0x38] sm:$0xff]
  %v150 = vld [vmem:[%s2 + $0x40] sm:$0xff]
  %v151 = vld [vmem:[%s2 + $0x48] sm:$0xff]
  %v152 = vld [vmem:[%s2 + $0x50] sm:$0xff]
  %v153 = vld [vmem:[%s2 + $0x58] sm:$0xff]
  %v154 = vld [vmem:[%s2 + $0x60] sm:$0xff]
  %v155 = vld [vmem:[%s2 + $0x68] sm:$0xff]
  %v156 = vld [vmem:[%s2 + $0x70] sm:$0xff]
  %v157 = vld [vmem:[%s2 + $0x78] sm:$0xff]
  %v158 = vld [vmem:[%s2 + $0x80] sm:$0xff]
  %v159 = vld [vmem:[%s2 + $0x88] sm:$0xff]
  %v160 = vld [vmem:[%s2 + $0x90] sm:$0xff]
  %v161 = vld [vmem:[%s2 + $0x98] sm:$0xff]
  %v162 = vld [vmem:[%s5] sm:$0x1]
  %164 = vset.pattern.permute.xlu0 0
  %165 = vperm.xlu0 %164, %v142
  %v166 = vpop.permute.xlu0 %165
  %169 = vset.pattern.permute.xlu0 0
  %170 = vperm.xlu0 %169, %v143
  %v171 = vpop.permute.xlu0 %170
  %174 = vset.pattern.permute.xlu0 0
  %175 = vperm.xlu0 %174, %v144
  %v176 = vpop.permute.xlu0 %175
  %179 = vset.pattern.permute.xlu0 0
  %180 = vperm.xlu0 %179, %v145
  %v181 = vpop.permute.xlu0 %180
  %184 = vset.pattern.permute.xlu0 0
  %185 = vperm.xlu0 %184, %v146
  %v186 = vpop.permute.xlu0 %185
  %189 = vset.pattern.permute.xlu0 0
  %190 = vperm.xlu0 %189, %v147
  %v191 = vpop.permute.xlu0 %190
  %194 = vset.pattern.permute.xlu0 0
  %195 = vperm.xlu0 %194, %v148
  %v196 = vpop.permute.xlu0 %195
  %199 = vset.pattern.permute.xlu0 0
  %200 = vperm.xlu0 %199, %v149
  %v201 = vpop.permute.xlu0 %200
  %204 = vset.pattern.permute.xlu0 0
  %205 = vperm.xlu0 %204, %v150
  %v206 = vpop.permute.xlu0 %205
  %209 = vset.pattern.permute.xlu0 0
  %210 = vperm.xlu0 %209, %v151
  %v211 = vpop.permute.xlu0 %210
  %214 = vset.pattern.permute.xlu0 0
  %215 = vperm.xlu0 %214, %v152
  %v216 = vpop.permute.xlu0 %215
  %219 = vset.pattern.permute.xlu0 0
  %220 = vperm.xlu0 %219, %v153
  %v221 = vpop.permute.xlu0 %220
  %224 = vset.pattern.permute.xlu0 0
  %225 = vperm.xlu0 %224, %v154
  %v226 = vpop.permute.xlu0 %225
  %229 = vset.pattern.permute.xlu0 0
  %230 = vperm.xlu0 %229, %v155
  %v231 = vpop.permute.xlu0 %230
  %234 = vset.pattern.permute.xlu0 0
  %235 = vperm.xlu0 %234, %v156
  %v236 = vpop.permute.xlu0 %235
  %239 = vset.pattern.permute.xlu0 0
  %240 = vperm.xlu0 %239, %v157
  %v241 = vpop.permute.xlu0 %240
  %244 = vset.pattern.permute.xlu0 0
  %245 = vperm.xlu0 %244, %v158
  %v246 = vpop.permute.xlu0 %245
  %249 = vset.pattern.permute.xlu0 0
  %250 = vperm.xlu0 %249, %v159
  %v251 = vpop.permute.xlu0 %250
  %254 = vset.pattern.permute.xlu0 0
  %255 = vperm.xlu0 %254, %v160
  %v256 = vpop.permute.xlu0 %255
  %259 = vset.pattern.permute.xlu0 0
  %260 = vperm.xlu0 %259, %v161
  %v261 = vpop.permute.xlu0 %260
  %v264 = vlaneseq
  %v265 = vshrl.u32 %v264, 7
  %v266 = vsub.s32 0, %v265
  %v267 = vrot.slane %v162, %v266
  %v269 = vmul.f32 %v166, %v267
  %v270 = vmul.f32 %v171, %v267
  %v271 = vmul.f32 %v176, %v267
  %v272 = vmul.f32 %v181, %v267
  %v273 = vmul.f32 %v186, %v267
  %v274 = vmul.f32 %v191, %v267
  %v275 = vmul.f32 %v196, %v267
  %v276 = vmul.f32 %v201, %v267
  %v277 = vmul.f32 %v206, %v267
  %v278 = vmul.f32 %v211, %v267
  %v279 = vmul.f32 %v216, %v267
  %v280 = vmul.f32 %v221, %v267
  %v281 = vmul.f32 %v226, %v267
  %v282 = vmul.f32 %v231, %v267
  %v283 = vmul.f32 %v236, %v267
  %v284 = vmul.f32 %v241, %v267
  %v285 = vmul.f32 %v246, %v267
  %v286 = vmul.f32 %v251, %v267
  %v287 = vmul.f32 %v256, %v267
  %v288 = vmul.f32 %v261, %v267
  %v309 = vunpack.c.l.b16 %v118
  %v310 = vunpack.c.l.b16 %v119
  %v311 = vunpack.c.l.b16 %v120
  %v312 = vunpack.c.l.b16 %v121
  %v313 = vunpack.c.l.b16 %v122
  %v314 = vunpack.c.l.b16 %v123
  %v315 = vunpack.c.l.b16 %v124
  %v316 = vunpack.c.l.b16 %v125
  %v317 = vunpack.c.l.b16 %v126
  %v318 = vunpack.c.l.b16 %v127
  %v319 = vunpack.c.l.b16 %v128
  %v320 = vunpack.c.l.b16 %v129
  %v321 = vunpack.c.l.b16 %v130
  %v322 = vunpack.c.l.b16 %v131
  %v323 = vunpack.c.l.b16 %v132
  %v324 = vunpack.c.l.b16 %v133
  %v325 = vunpack.c.l.b16 %v134
  %v326 = vunpack.c.l.b16 %v135
  %v327 = vunpack.c.l.b16 %v136
  %v328 = vunpack.c.l.b16 %v137
  %v329 = vpack.c.b16 %v310, %v309
  %v330 = vpack.c.b16 %v312, %v311
  %v331 = vpack.c.b16 %v314, %v313
  %v332 = vpack.c.b16 %v316, %v315
  %v333 = vpack.c.b16 %v318, %v317
  %v334 = vpack.c.b16 %v320, %v319
  %v335 = vpack.c.b16 %v322, %v321
  %v336 = vpack.c.b16 %v324, %v323
  %v337 = vpack.c.b16 %v326, %v325
  %v338 = vpack.c.b16 %v328, %v327
  %v343 = vunpack.c.l.b16 %v138
  %v344 = vunpack.c.l.b16 %v139
  %v345 = vunpack.c.l.b16 %v140
  %v346 = vunpack.c.l.b16 %v141
  %v347 = vpack.c.b16 %v344, %v343
  %v348 = vpack.c.b16 %v346, %v345
  %v352 = vsel %vm62, %v329, 0
  %v355 = vsel %vm62, %v330, 0
  %v358 = vsel %vm62, %v331, 0
  %v361 = vsel %vm62, %v332, 0
  %v364 = vsel %vm62, %v333, 0
  %v367 = vsel %vm62, %v334, 0
  %v370 = vsel %vm62, %v335, 0
  %v373 = vsel %vm62, %v336, 0
  %v376 = vsel %vm62, %v337, 0
  %v379 = vsel %vm62, %v338, 0
  %381 = vmatprep.subr.bf16.mxu0 0
  %382 = vmatpush1.bf16.msra.mxu0 0
  %383 = vmatprep.subr.bf16.mxu0 0
  %384 = vmatpush1.bf16.msra.mxu0 0
  %385 = vmatprep.subr.bf16.mxu0 0
  %386 = vmatpush1.bf16.msra.mxu0 0
  %387 = vmatprep.subr.bf16.mxu0 0
  %388 = vmatpush1.bf16.msra.mxu0 0
  %389 = vmatprep.subr.bf16.mxu0 0
  %390 = vmatpush1.bf16.msra.mxu0 0
  %391 = vmatprep.subr.bf16.mxu0 0
  %392 = vmatpush1.bf16.msra.mxu0 0
  %393 = vmatprep.subr.bf16.mxu0 0
  %394 = vmatpush1.bf16.msra.mxu0 %v348
  %395 = vmatprep.subr.bf16.mxu0 0
  %396 = vmatpush1.bf16.msra.mxu0 %v347
  %397 = vmatprep.subr.bf16.mxu0 0
  %398 = vmatpush2.bf16.msra.mxu0 0
  %399 = vmatprep.subr.bf16.mxu0 0
  %400 = vmatpush2.bf16.msra.mxu0 0
  %401 = vmatprep.subr.bf16.mxu0 0
  %402 = vmatpush2.bf16.msra.mxu0 0
  %403 = vmatprep.subr.bf16.mxu0 0
  %404 = vmatpush2.bf16.msra.mxu0 0
  %405 = vmatprep.subr.bf16.mxu0 0
  %406 = vmatpush2.bf16.msra.mxu0 0
  %407 = vmatprep.subr.bf16.mxu0 0
  %408 = vmatpush2.bf16.msra.mxu0 0
  %409 = vmatprep.subr.bf16.mxu0 0
  %410 = vmatpush2.bf16.msra.mxu0 0
  %411 = vmatprep.subr.bf16.mxu0 0
  %412 = vmatpush2.bf16.msra.mxu0 0
  %413 = vmatprep.mubr.bf16.mxu0 0
  %414 = vmatmul.mubr.bf16.gmra.mxu0 %v352
  %v415 = vpop.f32.mrf.mxu0
  %v416 = vadd.f32 %v269, %v415
  %v417 = vpop.f32.mrf.mxu0
  %v418 = vpop.f32.mrf.mxu0
  %v419 = vadd.f32 %v270, %v418
  %v420 = vpop.f32.mrf.mxu0
  %421 = vmatprep.mubr.bf16.mxu0 0
  %422 = vmatmul.mubr.bf16.gmra.mxu0 %v355
  %v423 = vpop.f32.mrf.mxu0
  %v424 = vadd.f32 %v271, %v423
  %v425 = vpop.f32.mrf.mxu0
  %v426 = vpop.f32.mrf.mxu0
  %v427 = vadd.f32 %v272, %v426
  %v428 = vpop.f32.mrf.mxu0
  %429 = vmatprep.mubr.bf16.mxu0 0
  %430 = vmatmul.mubr.bf16.gmra.mxu0 %v358
  %v431 = vpop.f32.mrf.mxu0
  %v432 = vadd.f32 %v273, %v431
  %v433 = vpop.f32.mrf.mxu0
  %v434 = vpop.f32.mrf.mxu0
  %v435 = vadd.f32 %v274, %v434
  %v436 = vpop.f32.mrf.mxu0
  %437 = vmatprep.mubr.bf16.mxu0 0
  %438 = vmatmul.mubr.bf16.gmra.mxu0 %v361
  %v439 = vpop.f32.mrf.mxu0
  %v440 = vadd.f32 %v275, %v439
  %v441 = vpop.f32.mrf.mxu0
  %v442 = vpop.f32.mrf.mxu0
  %v443 = vadd.f32 %v276, %v442
  %v444 = vpop.f32.mrf.mxu0
  %445 = vmatprep.mubr.bf16.mxu0 0
  %446 = vmatmul.mubr.bf16.gmra.mxu0 %v364
  %v447 = vpop.f32.mrf.mxu0
  %v448 = vadd.f32 %v277, %v447
  %v449 = vpop.f32.mrf.mxu0
  %v450 = vpop.f32.mrf.mxu0
  %v451 = vadd.f32 %v278, %v450
  %v452 = vpop.f32.mrf.mxu0
  %453 = vmatprep.mubr.bf16.mxu0 0
  %454 = vmatmul.mubr.bf16.gmra.mxu0 %v367
  %v455 = vpop.f32.mrf.mxu0
  %v456 = vadd.f32 %v279, %v455
  %v457 = vpop.f32.mrf.mxu0
  %v458 = vpop.f32.mrf.mxu0
  %v459 = vadd.f32 %v280, %v458
  %v460 = vpop.f32.mrf.mxu0
  %461 = vmatprep.mubr.bf16.mxu0 0
  %462 = vmatmul.mubr.bf16.gmra.mxu0 %v370
  %v463 = vpop.f32.mrf.mxu0
  %v464 = vadd.f32 %v281, %v463
  %v465 = vpop.f32.mrf.mxu0
  %v466 = vpop.f32.mrf.mxu0
  %v467 = vadd.f32 %v282, %v466
  %v468 = vpop.f32.mrf.mxu0
  %469 = vmatprep.mubr.bf16.mxu0 0
  %470 = vmatmul.mubr.bf16.gmra.mxu0 %v373
  %v471 = vpop.f32.mrf.mxu0
  %v472 = vadd.f32 %v283, %v471
  %v473 = vpop.f32.mrf.mxu0
  %v474 = vpop.f32.mrf.mxu0
  %v475 = vadd.f32 %v284, %v474
  %v476 = vpop.f32.mrf.mxu0
  %477 = vmatprep.mubr.bf16.mxu0 0
  %478 = vmatmul.mubr.bf16.gmra.mxu0 %v376
  %v479 = vpop.f32.mrf.mxu0
  %v480 = vadd.f32 %v285, %v479
  %v481 = vpop.f32.mrf.mxu0
  %v482 = vpop.f32.mrf.mxu0
  %v483 = vadd.f32 %v286, %v482
  %v484 = vpop.f32.mrf.mxu0
  %485 = vmatprep.mubr.bf16.mxu0 0
  %486 = vmatmul.mubr.bf16.gmra.mxu0 %v379
  %v487 = vpop.f32.mrf.mxu0
  %v488 = vadd.f32 %v287, %v487
  %v489 = vpop.f32.mrf.mxu0
  %v490 = vpop.f32.mrf.mxu0
  %v491 = vadd.f32 %v288, %v490
  %v492 = vpop.f32.mrf.mxu0
  %493 = vdwg.mxu0
  %v494 = vadd.f32 %v416, %v104
  %v495 = vadd.f32 %v419, %v107
  %v496 = vadd.f32 %v424, %v112
  %v497 = vadd.f32 %v427, %v115
  %v498 = vadd.f32 %v432, %v104
  %v499 = vadd.f32 %v435, %v107
  %v500 = vadd.f32 %v440, %v112
  %v501 = vadd.f32 %v443, %v115
  %v502 = vadd.f32 %v448, %v104
  %v503 = vadd.f32 %v451, %v107
  %v504 = vadd.f32 %v456, %v112
  %v505 = vadd.f32 %v459, %v115
  %v506 = vadd.f32 %v464, %v104
  %v507 = vadd.f32 %v467, %v107
  %v508 = vadd.f32 %v472, %v112
  %v509 = vadd.f32 %v475, %v115
  %v510 = vadd.f32 %v480, %v104
  %v511 = vadd.f32 %v483, %v107
  %v512 = vadd.f32 %v488, %v112
  %v513 = vadd.f32 %v491, %v115
  %v514 = vxor.u32 %v494, 2147483648
  %v515 = vxor.u32 %v495, 2147483648
  %v516 = vxor.u32 %v496, 2147483648
  %v517 = vxor.u32 %v497, 2147483648
  %v518 = vxor.u32 %v498, 2147483648
  %v519 = vxor.u32 %v499, 2147483648
  %v520 = vxor.u32 %v500, 2147483648
  %v521 = vxor.u32 %v501, 2147483648
  %v522 = vxor.u32 %v502, 2147483648
  %v523 = vxor.u32 %v503, 2147483648
  %v524 = vxor.u32 %v504, 2147483648
  %v525 = vxor.u32 %v505, 2147483648
  %v526 = vxor.u32 %v506, 2147483648
  %v527 = vxor.u32 %v507, 2147483648
  %v528 = vxor.u32 %v508, 2147483648
  %v529 = vxor.u32 %v509, 2147483648
  %v530 = vxor.u32 %v510, 2147483648
  %v531 = vxor.u32 %v511, 2147483648
  %v532 = vxor.u32 %v512, 2147483648
  %v533 = vxor.u32 %v513, 2147483648
  %v534 = vmul.f32 %v514, 1.442695
  %v535 = vpow.pop %v534
  %v536 = vmul.f32 %v515, 1.442695
  %v537 = vpow.pop %v536
  %v538 = vmul.f32 %v516, 1.442695
  %v539 = vpow.pop %v538
  %v540 = vmul.f32 %v517, 1.442695
  %v541 = vpow.pop %v540
  %v542 = vmul.f32 %v518, 1.442695
  %v543 = vpow.pop %v542
  %v544 = vmul.f32 %v519, 1.442695
  %v545 = vpow.pop %v544
  %v546 = vmul.f32 %v520, 1.442695
  %v547 = vpow.pop %v546
  %v548 = vmul.f32 %v521, 1.442695
  %v549 = vpow.pop %v548
  %v550 = vmul.f32 %v522, 1.442695
  %v551 = vpow.pop %v550
  %v552 = vmul.f32 %v523, 1.442695
  %v553 = vpow.pop %v552
  %v554 = vmul.f32 %v524, 1.442695
  %v555 = vpow.pop %v554
  %v556 = vmul.f32 %v525, 1.442695
  %v557 = vpow.pop %v556
  %v558 = vmul.f32 %v526, 1.442695
  %v559 = vpow.pop %v558
  %v560 = vmul.f32 %v527, 1.442695
  %v561 = vpow.pop %v560
  %v562 = vmul.f32 %v528, 1.442695
  %v563 = vpow.pop %v562
  %v564 = vmul.f32 %v529, 1.442695
  %v565 = vpow.pop %v564
  %v566 = vmul.f32 %v530, 1.442695
  %v567 = vpow.pop %v566
  %v568 = vmul.f32 %v531, 1.442695
  %v569 = vpow.pop %v568
  %v570 = vmul.f32 %v532, 1.442695
  %v571 = vpow.pop %v570
  %v572 = vmul.f32 %v533, 1.442695
  %v573 = vpow.pop %v572
  %v574 = vadd.f32 %v535, 1.0
  %v575 = vadd.f32 %v537, 1.0
  %v576 = vadd.f32 %v539, 1.0
  %v577 = vadd.f32 %v541, 1.0
  %v578 = vadd.f32 %v543, 1.0
  %v579 = vadd.f32 %v545, 1.0
  %v580 = vadd.f32 %v547, 1.0
  %v581 = vadd.f32 %v549, 1.0
  %v582 = vadd.f32 %v551, 1.0
  %v583 = vadd.f32 %v553, 1.0
  %v584 = vadd.f32 %v555, 1.0
  %v585 = vadd.f32 %v557, 1.0
  %v586 = vadd.f32 %v559, 1.0
  %v587 = vadd.f32 %v561, 1.0
  %v588 = vadd.f32 %v563, 1.0
  %v589 = vadd.f32 %v565, 1.0
  %v590 = vadd.f32 %v567, 1.0
  %v591 = vadd.f32 %v569, 1.0
  %v592 = vadd.f32 %v571, 1.0
  %v593 = vadd.f32 %v573, 1.0
  %v594 = vrcp.pop %v574
  %v595 = vmul.f32 1.0, %v594
  %v596 = vrcp.pop %v575
  %v597 = vmul.f32 1.0, %v596
  %v598 = vrcp.pop %v576
  %v599 = vmul.f32 1.0, %v598
  %v600 = vrcp.pop %v577
  %v601 = vmul.f32 1.0, %v600
  %v602 = vrcp.pop %v578
  %v603 = vmul.f32 1.0, %v602
  %v604 = vrcp.pop %v579
  %v605 = vmul.f32 1.0, %v604
  %v606 = vrcp.pop %v580
  %v607 = vmul.f32 1.0, %v606
  %v608 = vrcp.pop %v581
  %v609 = vmul.f32 1.0, %v608
  %v610 = vrcp.pop %v582
  %v611 = vmul.f32 1.0, %v610
  %v612 = vrcp.pop %v583
  %v613 = vmul.f32 1.0, %v612
  %v614 = vrcp.pop %v584
  %v615 = vmul.f32 1.0, %v614
  %v616 = vrcp.pop %v585
  %v617 = vmul.f32 1.0, %v616
  %v618 = vrcp.pop %v586
  %v619 = vmul.f32 1.0, %v618
  %v620 = vrcp.pop %v587
  %v621 = vmul.f32 1.0, %v620
  %v622 = vrcp.pop %v588
  %v623 = vmul.f32 1.0, %v622
  %v624 = vrcp.pop %v589
  %v625 = vmul.f32 1.0, %v624
  %v626 = vrcp.pop %v590
  %v627 = vmul.f32 1.0, %v626
  %v628 = vrcp.pop %v591
  %v629 = vmul.f32 1.0, %v628
  %v630 = vrcp.pop %v592
  %v631 = vmul.f32 1.0, %v630
  %v632 = vrcp.pop %v593
  %v633 = vmul.f32 1.0, %v632
  %654 = vrot.lane.b32.xlu0 %v595, 96
  %v655 = vpop.permute.xlu0 %654
  %656 = vrot.lane.b32.xlu0 %v597, 96
  %v657 = vpop.permute.xlu0 %656
  %658 = vrot.lane.b32.xlu0 %v599, 96
  %v659 = vpop.permute.xlu0 %658
  %660 = vrot.lane.b32.xlu0 %v601, 96
  %v661 = vpop.permute.xlu0 %660
  %662 = vrot.lane.b32.xlu0 %v603, 96
  %v663 = vpop.permute.xlu0 %662
  %664 = vrot.lane.b32.xlu0 %v605, 96
  %v665 = vpop.permute.xlu0 %664
  %666 = vrot.lane.b32.xlu0 %v607, 96
  %v667 = vpop.permute.xlu0 %666
  %668 = vrot.lane.b32.xlu0 %v609, 96
  %v669 = vpop.permute.xlu0 %668
  %670 = vrot.lane.b32.xlu0 %v611, 96
  %v671 = vpop.permute.xlu0 %670
  %672 = vrot.lane.b32.xlu0 %v613, 96
  %v673 = vpop.permute.xlu0 %672
  %674 = vrot.lane.b32.xlu0 %v615, 96
  %v675 = vpop.permute.xlu0 %674
  %676 = vrot.lane.b32.xlu0 %v617, 96
  %v677 = vpop.permute.xlu0 %676
  %678 = vrot.lane.b32.xlu0 %v619, 96
  %v679 = vpop.permute.xlu0 %678
  %680 = vrot.lane.b32.xlu0 %v621, 96
  %v681 = vpop.permute.xlu0 %680
  %682 = vrot.lane.b32.xlu0 %v623, 96
  %v683 = vpop.permute.xlu0 %682
  %684 = vrot.lane.b32.xlu0 %v625, 96
  %v685 = vpop.permute.xlu0 %684
  %686 = vrot.lane.b32.xlu0 %v627, 96
  %v687 = vpop.permute.xlu0 %686
  %688 = vrot.lane.b32.xlu0 %v629, 96
  %v689 = vpop.permute.xlu0 %688
  %690 = vrot.lane.b32.xlu0 %v631, 96
  %v691 = vpop.permute.xlu0 %690
  %692 = vrot.lane.b32.xlu0 %v633, 96
  %v693 = vpop.permute.xlu0 %692
  %v714 = vmul.f32 %v494, %v655
  %v715 = vmul.f32 %v495, %v657
  %v716 = vmul.f32 %v496, %v659
  %v717 = vmul.f32 %v497, %v661
  %v718 = vmul.f32 %v498, %v663
  %v719 = vmul.f32 %v499, %v665
  %v720 = vmul.f32 %v500, %v667
  %v721 = vmul.f32 %v501, %v669
  %v722 = vmul.f32 %v502, %v671
  %v723 = vmul.f32 %v503, %v673
  %v724 = vmul.f32 %v504, %v675
  %v725 = vmul.f32 %v505, %v677
  %v726 = vmul.f32 %v506, %v679
  %v727 = vmul.f32 %v507, %v681
  %v728 = vmul.f32 %v508, %v683
  %v729 = vmul.f32 %v509, %v685
  %v730 = vmul.f32 %v510, %v687
  %v731 = vmul.f32 %v511, %v689
  %v732 = vmul.f32 %v512, %v691
  %v733 = vmul.f32 %v513, %v693
  %v734 = vpack.c.bf16 %v715, %v714
  %v735 = vpack.c.bf16 %v717, %v716
  %v736 = vpack.c.bf16 %v719, %v718
  %v737 = vpack.c.bf16 %v721, %v720
  %v738 = vpack.c.bf16 %v723, %v722
  %v739 = vpack.c.bf16 %v725, %v724
  %v740 = vpack.c.bf16 %v727, %v726
  %v741 = vpack.c.bf16 %v729, %v728
  %v742 = vpack.c.bf16 %v731, %v730
  %v743 = vpack.c.bf16 %v733, %v732
  %v744 = vld [vmem:[%s7] sm:$0xf]
  %v745 = vld [vmem:[%s7 + $0x4] sm:$0xf]
  %v746 = vld [vmem:[%s7 + $0x8] sm:$0xf]
  %v747 = vld [vmem:[%s7 + $0xc] sm:$0xf]
  %v748 = vld [vmem:[%s8] sm:$0x1]
  %v750 = vlaneseq
  %v751 = vshrl.u32 %v750, 7
  %v752 = vsub.s32 0, %v751
  %v753 = vrot.slane %v748, %v752
  %v759 = vunpack.c.l.b16 %v744
  %v760 = vunpack.c.l.b16 %v745
  %v761 = vunpack.c.l.b16 %v746
  %v762 = vunpack.c.l.b16 %v747
  %v763 = vpack.c.b16 %v760, %v759
  %v764 = vpack.c.b16 %v762, %v761
  %v768 = vsel %vm62, %v734, 0
  %v771 = vsel %vm62, %v735, 0
  %v774 = vsel %vm62, %v736, 0
  %v777 = vsel %vm62, %v737, 0
  %v780 = vsel %vm62, %v738, 0
  %v783 = vsel %vm62, %v739, 0
  %v786 = vsel %vm62, %v740, 0
  %v789 = vsel %vm62, %v741, 0
  %v792 = vsel %vm62, %v742, 0
  %v795 = vsel %vm62, %v743, 0
  %797 = vmatprep.subr.bf16.mxu0 0
  %798 = vmatpush1.bf16.msra.mxu0 0
  %799 = vmatprep.subr.bf16.mxu0 0
  %800 = vmatpush1.bf16.msra.mxu0 0
  %801 = vmatprep.subr.bf16.mxu0 0
  %802 = vmatpush1.bf16.msra.mxu0 0
  %803 = vmatprep.subr.bf16.mxu0 0
  %804 = vmatpush1.bf16.msra.mxu0 0
  %805 = vmatprep.subr.bf16.mxu0 0
  %806 = vmatpush1.bf16.msra.mxu0 0
  %807 = vmatprep.subr.bf16.mxu0 0
  %808 = vmatpush1.bf16.msra.mxu0 0
  %809 = vmatprep.subr.bf16.mxu0 0
  %810 = vmatpush1.bf16.msra.mxu0 %v764
  %811 = vmatprep.subr.bf16.mxu0 0
  %812 = vmatpush1.bf16.msra.mxu0 %v763
  %813 = vmatprep.subr.bf16.mxu0 0
  %814 = vmatpush2.bf16.msra.mxu0 0
  %815 = vmatprep.subr.bf16.mxu0 0
  %816 = vmatpush2.bf16.msra.mxu0 0
  %817 = vmatprep.subr.bf16.mxu0 0
  %818 = vmatpush2.bf16.msra.mxu0 0
  %819 = vmatprep.subr.bf16.mxu0 0
  %820 = vmatpush2.bf16.msra.mxu0 0
  %821 = vmatprep.subr.bf16.mxu0 0
  %822 = vmatpush2.bf16.msra.mxu0 0
  %823 = vmatprep.subr.bf16.mxu0 0
  %824 = vmatpush2.bf16.msra.mxu0 0
  %825 = vmatprep.subr.bf16.mxu0 0
  %826 = vmatpush2.bf16.msra.mxu0 0
  %827 = vmatprep.subr.bf16.mxu0 0
  %828 = vmatpush2.bf16.msra.mxu0 0
  %829 = vmatprep.mubr.bf16.mxu0 0
  %830 = vmatmul.mubr.bf16.gmra.mxu0 %v768
  %v831 = vpop.f32.mrf.mxu0
  %v832 = vadd.f32 %v753, %v831
  %v833 = vpop.f32.mrf.mxu0
  %v834 = vpop.f32.mrf.mxu0
  %v835 = vadd.f32 %v753, %v834
  %v836 = vpop.f32.mrf.mxu0
  %837 = vmatprep.mubr.bf16.mxu0 0
  %838 = vmatmul.mubr.bf16.gmra.mxu0 %v771
  %v839 = vpop.f32.mrf.mxu0
  %v840 = vadd.f32 %v753, %v839
  %v841 = vpop.f32.mrf.mxu0
  %v842 = vpop.f32.mrf.mxu0
  %v843 = vadd.f32 %v753, %v842
  %v844 = vpop.f32.mrf.mxu0
  %845 = vmatprep.mubr.bf16.mxu0 0
  %846 = vmatmul.mubr.bf16.gmra.mxu0 %v774
  %v847 = vpop.f32.mrf.mxu0
  %v848 = vadd.f32 %v753, %v847
  %v849 = vpop.f32.mrf.mxu0
  %v850 = vpop.f32.mrf.mxu0
  %v851 = vadd.f32 %v753, %v850
  %v852 = vpop.f32.mrf.mxu0
  %853 = vmatprep.mubr.bf16.mxu0 0
  %854 = vmatmul.mubr.bf16.gmra.mxu0 %v777
  %v855 = vpop.f32.mrf.mxu0
  %v856 = vadd.f32 %v753, %v855
  %v857 = vpop.f32.mrf.mxu0
  %v858 = vpop.f32.mrf.mxu0
  %v859 = vadd.f32 %v753, %v858
  %v860 = vpop.f32.mrf.mxu0
  %861 = vmatprep.mubr.bf16.mxu0 0
  %862 = vmatmul.mubr.bf16.gmra.mxu0 %v780
  %v863 = vpop.f32.mrf.mxu0
  %v864 = vadd.f32 %v753, %v863
  %v865 = vpop.f32.mrf.mxu0
  %v866 = vpop.f32.mrf.mxu0
  %v867 = vadd.f32 %v753, %v866
  %v868 = vpop.f32.mrf.mxu0
  %869 = vmatprep.mubr.bf16.mxu0 0
  %870 = vmatmul.mubr.bf16.gmra.mxu0 %v783
  %v871 = vpop.f32.mrf.mxu0
  %v872 = vadd.f32 %v753, %v871
  %v873 = vpop.f32.mrf.mxu0
  %v874 = vpop.f32.mrf.mxu0
  %v875 = vadd.f32 %v753, %v874
  %v876 = vpop.f32.mrf.mxu0
  %877 = vmatprep.mubr.bf16.mxu0 0
  %878 = vmatmul.mubr.bf16.gmra.mxu0 %v786
  %v879 = vpop.f32.mrf.mxu0
  %v880 = vadd.f32 %v753, %v879
  %v881 = vpop.f32.mrf.mxu0
  %v882 = vpop.f32.mrf.mxu0
  %v883 = vadd.f32 %v753, %v882
  %v884 = vpop.f32.mrf.mxu0
  %885 = vmatprep.mubr.bf16.mxu0 0
  %886 = vmatmul.mubr.bf16.gmra.mxu0 %v789
  %v887 = vpop.f32.mrf.mxu0
  %v888 = vadd.f32 %v753, %v887
  %v889 = vpop.f32.mrf.mxu0
  %v890 = vpop.f32.mrf.mxu0
  %v891 = vadd.f32 %v753, %v890
  %v892 = vpop.f32.mrf.mxu0
  %893 = vmatprep.mubr.bf16.mxu0 0
  %894 = vmatmul.mubr.bf16.gmra.mxu0 %v792
  %v895 = vpop.f32.mrf.mxu0
  %v896 = vadd.f32 %v753, %v895
  %v897 = vpop.f32.mrf.mxu0
  %v898 = vpop.f32.mrf.mxu0
  %v899 = vadd.f32 %v753, %v898
  %v900 = vpop.f32.mrf.mxu0
  %901 = vmatprep.mubr.bf16.mxu0 0
  %902 = vmatmul.mubr.bf16.gmra.mxu0 %v795
  %v903 = vpop.f32.mrf.mxu0
  %v904 = vadd.f32 %v753, %v903
  %v905 = vpop.f32.mrf.mxu0
  %v906 = vpop.f32.mrf.mxu0
  %v907 = vadd.f32 %v753, %v906
  %v908 = vpop.f32.mrf.mxu0
  %909 = vdwg.mxu0
  %v910 = vsel %vm62, %v832, -inf
  %v911 = vsel %vm62, %v848, -inf
  %v912 = vmax.f32 %v910, %v911
  %v913 = vsel %vm62, %v864, -inf
  %v914 = vmax.f32 %v912, %v913
  %v915 = vsel %vm62, %v880, -inf
  %v916 = vmax.f32 %v914, %v915
  %v917 = vsel %vm62, %v896, -inf
  %v918 = vmax.f32 %v916, %v917
  %v919 = vsel %vm62, %v835, -inf
  %v920 = vsel %vm62, %v851, -inf
  %v921 = vmax.f32 %v919, %v920
  %v922 = vsel %vm62, %v867, -inf
  %v923 = vmax.f32 %v921, %v922
  %v924 = vsel %vm62, %v883, -inf
  %v925 = vmax.f32 %v923, %v924
  %v926 = vsel %vm62, %v899, -inf
  %v927 = vmax.f32 %v925, %v926
  %v928 = vsel %vm62, %v840, -inf
  %v929 = vsel %vm62, %v856, -inf
  %v930 = vmax.f32 %v928, %v929
  %v931 = vsel %vm62, %v872, -inf
  %v932 = vmax.f32 %v930, %v931
  %v933 = vsel %vm62, %v888, -inf
  %v934 = vmax.f32 %v932, %v933
  %v935 = vsel %vm62, %v904, -inf
  %v936 = vmax.f32 %v934, %v935
  %v937 = vsel %vm62, %v843, -inf
  %v938 = vsel %vm62, %v859, -inf
  %v939 = vmax.f32 %v937, %v938
  %v940 = vsel %vm62, %v875, -inf
  %v941 = vmax.f32 %v939, %v940
  %v942 = vsel %vm62, %v891, -inf
  %v943 = vmax.f32 %v941, %v942
  %v944 = vsel %vm62, %v907, -inf
  %v945 = vmax.f32 %v943, %v944
  %v946 = vadd.f32 %v918, %v33
  %v947 = vadd.f32 %v927, %v34
  %v948 = vadd.f32 %v936, %v35
  %v949 = vadd.f32 %v945, %v36
  %v950 = vmax.f32 %v946, 0.0
  %v951 = vmax.f32 %v947, 0.0
  %v952 = vmax.f32 %v948, 0.0
  %v953 = vmax.f32 %v949, 0.0
  %958 = vrot.lane.b32.xlu0 %v950, 32
  %v959 = vpop.permute.xlu0 %958
  %960 = vrot.lane.b32.xlu0 %v951, 32
  %v961 = vpop.permute.xlu0 %960
  %962 = vrot.lane.b32.xlu0 %v952, 32
  %v963 = vpop.permute.xlu0 %962
  %964 = vrot.lane.b32.xlu0 %v953, 32
  %v965 = vpop.permute.xlu0 %964
  %v970 = vsel %vm62, %v33, %v959
  %v971 = vsel %vm62, %v34, %v961
  %v972 = vsel %vm62, %v35, %v963
  %v973 = vsel %vm62, %v36, %v965
  %vm974 = vcmask 523264
  %975 = vst.msk [vmem:[%s9] sm:$0xff] %vm974, %v970
  %976 = vst.msk [vmem:[%s9 + $0x8] sm:$0xff] %vm974, %v971
  %977 = vst.msk [vmem:[%s9 + $0x10] sm:$0xff] %vm974, %v972
  %978 = vst.msk [vmem:[%s9 + $0x18] sm:$0xff] %vm974, %v973
  // Predicated region
  $region38: #{glue_edge_dgcnn_forward.10} parent=0 // pred_check
    _
  $region39: #{glue_edge_dgcnn_forward.10} parent=0 // pred_check_branch
    %980 = sbr.rel (0) target = $region41
  $region40: #{glue_edge_dgcnn_forward.10} parent=0 // pred_region
    _
  $region41: #{glue_edge_dgcnn_forward.10} parent=0 // pred_fallthru
    _
  // Predicated region
  $region42: #{glue_edge_dgcnn_forward.10} parent=0 // pred_check
    _
  $region43: #{glue_edge_dgcnn_forward.10} parent=0 // pred_check_branch
    %982 = sbr.rel (0) target = $region45
  $region44: #{glue_edge_dgcnn_forward.10} parent=0 // pred_region
    _
  $region45: #{glue_edge_dgcnn_forward.10} parent=0 // pred_fallthru
    _

</llo_original>
